<compile_context>
chip_gen: v7x
topology: tpu7x:2x2x1
jax: 0.10.0
libtpu: 0.0.40
codegen_flags: <defaults>
</compile_context>

<pallas_src>
import functools
import math

import jax
import jax.numpy as jnp
from jax.experimental import pallas as pl
from jax.experimental.pallas import tpu as pltpu


def _residual_layernorm(x, delta, gamma, beta, eps):
    """LayerNorm(x + delta) over the last axis, f32, PyTorch semantics."""
    z = x + delta
    mu = jnp.mean(z, axis=-1, keepdims=True)
    c = z - mu
    var = jnp.mean(c * c, axis=-1, keepdims=True)
    return c * jax.lax.rsqrt(var + eps) * gamma + beta


# ----------------------------------------------------------------------------
# Kernel 1: multi-head self-attention + residual + LayerNorm1
#   grid = (B, q_tiles, nhead).  The out-projection is a sum of per-head
#   matmuls, accumulated in a VMEM scratch across the (arbitrary) head axis;
#   the residual-add + LN1 epilogue runs on the last head.
# ----------------------------------------------------------------------------
def _attn_ln1_kernel(xq_ref, xkv_ref, wqkv_ref, bqkv_ref, wo_ref, bo_ref,
                     g_ref, b_ref, o_ref, acc_ref, *, eps):
    h = pl.program_id(2)

    @pl.when(h == 0)
    def _init():
        acc_ref[...] = jnp.zeros_like(acc_ref)

    xq = xq_ref[0].astype(jnp.float32)        # (TQ, E)  query rows / residual
    xkv_b = xkv_ref[0]                        # (hw, E)  key/value rows (bf16)
    xq_b = xq.astype(jnp.bfloat16)

    # Per-head projections.  Weights are pre-transposed to (E, hd) and the
    # 1/sqrt(hd) query scale is pre-folded into wq/bq by the wrapper, so there
    # is no in-kernel transpose or scaling.  bf16 MXU operands, f32 accumulate.
    q = (jnp.dot(xq_b, wqkv_ref[0, 0], preferred_element_type=jnp.float32)
         + bqkv_ref[0, 0])
    k = (jnp.dot(xkv_b, wqkv_ref[0, 1], preferred_element_type=jnp.float32)
         + bqkv_ref[0, 1])
    v = (jnp.dot(xkv_b, wqkv_ref[0, 2], preferred_element_type=jnp.float32)
         + bqkv_ref[0, 2])

    # Scores q @ k^T without materializing a transpose (contract last dims).
    s = jax.lax.dot_general(q.astype(jnp.bfloat16), k.astype(jnp.bfloat16),
                            (((1,), (1,)), ((), ())),
                            preferred_element_type=jnp.float32)       # (TQ, hw)
    m = jnp.max(s, axis=-1, keepdims=True)
    p = jnp.exp(s - m)
    # EUP approximate reciprocal; normalization deferred to after PV
    # (TQ*hd multiplies instead of TQ*hw).
    inv = pl.reciprocal(jnp.sum(p, axis=-1, keepdims=True), approx=True)

    o_h = jnp.dot(p.astype(jnp.bfloat16), v.astype(jnp.bfloat16),
                  preferred_element_type=jnp.float32) * inv           # (TQ, hd)

    # Out-projection accumulated over heads: attn = sum_h o_h @ Wo_h + b_out.
    acc_ref[...] += jnp.dot(o_h.astype(jnp.bfloat16), wo_ref[0],
                            preferred_element_type=jnp.float32)       # (TQ, E)

    @pl.when(h == pl.num_programs(2) - 1)
    def _finalize():
        attn = acc_ref[...] + bo_ref[...]
        # residual (dropout1 = identity in eval) + LayerNorm1, fused epilogue.
        y = _residual_layernorm(xq, attn, g_ref[...], b_ref[...], eps)
        o_ref[0] = y.astype(o_ref.dtype)


def fused_attention_ln1(x, p, *, nhead, q_tile, eps=1e-5):
    B, hw, E = x.shape
    hd = E // nhead
    n_q = hw // q_tile
    # Pre-cast the key/value view once in the wrapper: identical numerics to
    # the in-kernel bf16 cast but halves the per-step kv DMA.
    x_kv = x.astype(jnp.bfloat16)
    kernel = functools.partial(_attn_ln1_kernel, eps=eps)
    cost = pl.CostEstimate(
        flops=int(B * (8 * hw * E * E + 4 * hw * hw * E)),
        transcendentals=int(B * nhead * hw * hw),
        bytes_accessed=int(3 * B * hw * E * 4 + 5 * E * E * 2),
    )
    return pl.pallas_call(
        kernel,
        out_shape=jax.ShapeDtypeStruct((B, hw, E), x.dtype),
        grid=(B, n_q, nhead),
        in_specs=[
            pl.BlockSpec((1, q_tile, E), lambda b, qi, h: (b, qi, 0)),   # query rows (f32)
            pl.BlockSpec((1, hw, E), lambda b, qi, h: (b, 0, 0)),        # kv rows (bf16)
            pl.BlockSpec((1, 3, E, hd), lambda b, qi, h: (h, 0, 0, 0)),  # packed Wq/Wk/Wv (bf16)
            pl.BlockSpec((1, 3, 1, hd), lambda b, qi, h: (h, 0, 0, 0)),  # packed bq/bk/bv
            pl.BlockSpec((1, hd, E), lambda b, qi, h: (h, 0, 0)),        # Wo_h  (bf16)
            pl.BlockSpec((1, E), lambda b, qi, h: (0, 0)),               # b_out
            pl.BlockSpec((1, E), lambda b, qi, h: (0, 0)),               # gamma1
            pl.BlockSpec((1, E), lambda b, qi, h: (0, 0)),               # beta1
        ],
        out_specs=pl.BlockSpec((1, q_tile, E), lambda b, qi, h: (b, qi, 0)),
        scratch_shapes=[pltpu.VMEM((q_tile, E), jnp.float32)],
        compiler_params=pltpu.CompilerParams(
            dimension_semantics=("parallel", "parallel", "arbitrary"),
            vmem_limit_bytes=64 * 1024 * 1024),
        cost_estimate=cost,
    )(x, x_kv, p["wqkv_h"], p["bqkv_h"], p["wo_h"], p["b_out"],
      p["gamma1"], p["beta1"])


# ----------------------------------------------------------------------------
# Kernel 2: fused separable feedforward + residual + LayerNorm2
#   1x1 conv E->F + ReLU, depthwise 3x3 (pad=1, groups=F) + ReLU,
#   1x1 conv F->E + ReLU (the reference Sequential has a ReLU after the last
#   projection too), then residual + LN2.  One grid step per batch element;
#   the F-wide intermediate never leaves VMEM.
# ----------------------------------------------------------------------------
def _ff_ln2_kernel(y_ref, w1_ref, b1_ref, wdw_ref, bdw_ref, w2_ref, b2_ref,
                   g_ref, bt_ref, o_ref, pad_ref, *, H, W, eps):
    hw = H * W
    Fd = w1_ref.shape[1]
    y1 = y_ref[0].astype(jnp.float32)                                 # (hw, E)

    # ---- 1x1 conv E->F + ReLU (MXU, bf16 operands, f32 accumulate) ----
    h1 = jnp.dot(y1.astype(jnp.bfloat16), w1_ref[...],
                 preferred_element_type=jnp.float32) + b1_ref[...]
    h1 = jnp.maximum(h1, 0.0)                                         # (hw, F)

    # ---- depthwise 3x3 + ReLU on a flat (H+2)*W, F layout ----
    # One zero image-row of padding above/below (aligned stores into a VMEM
    # scratch); the +-1 column shifts are done with pltpu.roll (XLU, no
    # misaligned sublane slices) plus a column mask for row-boundary wraps.
    N = (H + 2) * W
    pad_ref[0:W, :] = jnp.zeros((W, Fd), jnp.float32)
    pad_ref[W:W + hw, :] = h1
    pad_ref[W + hw:N, :] = jnp.zeros((W, Fd), jnp.float32)
    P = pad_ref[...]                                                  # (N, F)

    col = jax.lax.broadcasted_iota(jnp.int32, (N, 1), 0) % W
    wdw = wdw_ref[...]                                                # (9, F)
    acc = jnp.zeros((hw, Fd), jnp.float32) + bdw_ref[...]             # bias folded in
    for dx in (-1, 0, 1):
        if dx == 0:
            Pdx = P
        else:
            Pdx = pltpu.roll(P, shift=(-dx) % N, axis=0)              # Pdx[i] = P[i+dx]
            bad = W - 1 if dx == 1 else 0
            Pdx = jnp.where(col == bad, 0.0, Pdx)                     # zero wrapped column
        for dy in (-1, 0, 1):
            s = (1 + dy) * W                                          # W-aligned offset
            tap = 3 * (dy + 1) + (dx + 1)
            acc = acc + Pdx[s:s + hw, :] * wdw[tap:tap + 1, :]
    h2 = jnp.maximum(acc, 0.0)                                        # (hw, F)

    # ---- 1x1 conv F->E + ReLU ----
    h3 = jnp.dot(h2.astype(jnp.bfloat16), w2_ref[...],
                 preferred_element_type=jnp.float32) + b2_ref[...]
    h3 = jnp.maximum(h3, 0.0)                                         # (hw, E)

    # ---- residual (dropout2 = identity) + LayerNorm2, fused epilogue ----
    out = _residual_layernorm(y1, h3, g_ref[...], bt_ref[...], eps)
    o_ref[0] = out.astype(o_ref.dtype)


def fused_separable_ff_ln2(y1, p, *, height, width, eps=1e-5):
    B, hw, E = y1.shape
    Fd = p["w1_t"].shape[1]
    kernel = functools.partial(_ff_ln2_kernel, H=height, W=width, eps=eps)
    cost = pl.CostEstimate(
        flops=int(B * (4 * hw * E * Fd + 18 * hw * Fd)),
        transcendentals=0,
        bytes_accessed=int(2 * B * hw * E * 4 + 2 * E * Fd * 2),
    )
    return pl.pallas_call(
        kernel,
        out_shape=jax.ShapeDtypeStruct((B, hw, E), y1.dtype),
        grid=(B,),
        in_specs=[
            pl.BlockSpec((1, hw, E), lambda b: (b, 0, 0)),   # y1 (residual + FF input)
            pl.BlockSpec((E, Fd), lambda b: (0, 0)),         # W1^T (bf16)
            pl.BlockSpec((1, Fd), lambda b: (0, 0)),         # b1
            pl.BlockSpec((9, Fd), lambda b: (0, 0)),         # depthwise taps (f32)
            pl.BlockSpec((1, Fd), lambda b: (0, 0)),         # b_dw
            pl.BlockSpec((Fd, E), lambda b: (0, 0)),         # W2^T (bf16)
            pl.BlockSpec((1, E), lambda b: (0, 0)),          # b2
            pl.BlockSpec((1, E), lambda b: (0, 0)),          # gamma2
            pl.BlockSpec((1, E), lambda b: (0, 0)),          # beta2
        ],
        out_specs=pl.BlockSpec((1, hw, E), lambda b: (b, 0, 0)),
        scratch_shapes=[pltpu.VMEM(((height + 2) * width, Fd), jnp.float32)],
        compiler_params=pltpu.CompilerParams(
            dimension_semantics=("parallel",),
            vmem_limit_bytes=64 * 1024 * 1024),
        cost_estimate=cost,
    )(y1, p["w1_t"], p["b1"], p["w_dw"], p["b_dw"], p["w2_t"], p["b2"],
      p["gamma2"], p["beta2"])


# ----------------------------------------------------------------------------
# Full forward pass (eval mode, feedforward='separable', activation='relu',
# src_mask=None, src_key_padding_mask=None)
# ----------------------------------------------------------------------------
def _pick_q_tile(hw, cap=512):
    if hw <= cap:
        return hw
    for t in (512, 256, 128, 64, 32, 16, 8):
        if hw % t == 0:
            return t
    return hw


def transformer_encoder_layer_2d(src, params, *, height, width, nhead):
    # src: (hw, B, E) -- PyTorch layout
    hw, B, E = src.shape
    assert hw == height * width
    x = jnp.transpose(src, (1, 0, 2))                       # (B, hw, E), glue

    y1 = fused_attention_ln1(x, params, nhead=nhead, q_tile=_pick_q_tile(hw))
    y2 = fused_separable_ff_ln2(y1, params, height=height, width=width)

    return jnp.transpose(y2, (1, 0, 2))                     # back to (hw, B, E)


# ----------------------------------------------------------------------------
# Parameter construction (PyTorch-convention shapes) + one-time packing
# ----------------------------------------------------------------------------
def make_params(key, embed_dim, dim_feedforward):
    E, Fd = embed_dim, dim_feedforward
    ks = jax.random.split(key, 16)
    n = lambda k, shape, s=0.05: (s * jax.random.normal(k, shape)).astype(jnp.float32)
    return {
        # nn.MultiheadAttention
        "in_proj_weight": n(ks[0], (3 * E, E)),
        "in_proj_bias": n(ks[1], (3 * E,)),
        "out_proj_weight": n(ks[2], (E, E)),
        "out_proj_bias": n(ks[3], (E,)),
        # LayerNorm 1 / 2
        "ln1_weight": jnp.ones((E,), jnp.float32) + n(ks[4], (E,), 0.01),
        "ln1_bias": n(ks[5], (E,), 0.01),
        "ln2_weight": jnp.ones((E,), jnp.float32) + n(ks[6], (E,), 0.01),
        "ln2_bias": n(ks[7], (E,), 0.01),
        # separable FF: Conv2d(E,F,1), Conv2d(F,F,3,groups=F), Conv2d(F,E,1)
        "conv1_weight": n(ks[8], (Fd, E, 1, 1)),
        "conv1_bias": n(ks[9], (Fd,), 0.01),
        "dw_weight": n(ks[10], (Fd, 1, 3, 3)),
        "dw_bias": n(ks[11], (Fd,), 0.01),
        "conv2_weight": n(ks[12], (E, Fd, 1, 1)),
        "conv2_bias": n(ks[13], (E,), 0.01),
    }


def prepare_params(tp, *, embed_dim, nhead):
    """One-time wrapper-side packing: split per head, pre-transpose, fold the
    1/sqrt(hd) query scale into Wq/bq, cast MXU weights to bf16, and stack
    Q/K/V per-head weights/biases into single tensors (1 DMA each)."""
    E = embed_dim
    hd = E // nhead
    scale = 1.0 / math.sqrt(hd)

    w_in, b_in = tp["in_proj_weight"], tp["in_proj_bias"]
    wq, wk, wv = w_in[:E], w_in[E:2 * E], w_in[2 * E:]
    bq, bk, bv = b_in[:E], b_in[E:2 * E], b_in[2 * E:]

    def per_head_in(w, b, s=1.0):
        # torch: y = x @ w.T + b ;  pack as (nhead, E, hd) with scale folded in.
        wt = (w.T * s).reshape(E, nhead, hd).transpose(1, 0, 2)
        bt = (b * s).reshape(nhead, 1, hd)
        return wt.astype(jnp.bfloat16), bt.astype(jnp.float32)

    wq_h, bq_h = per_head_in(wq, bq, scale)
    wk_h, bk_h = per_head_in(wk, bk)
    wv_h, bv_h = per_head_in(wv, bv)

    wqkv_h = jnp.stack([wq_h, wk_h, wv_h], axis=1)          # (nhead, 3, E, hd) bf16
    bqkv_h = jnp.stack([bq_h, bk_h, bv_h], axis=1)          # (nhead, 3, 1, hd) f32

    wo_h = tp["out_proj_weight"].T.reshape(nhead, hd, E).astype(jnp.bfloat16)
    b_out = tp["out_proj_bias"].reshape(1, E).astype(jnp.float32)

    Fd = tp["conv1_weight"].shape[0]
    w1_t = tp["conv1_weight"].reshape(Fd, E).T.astype(jnp.bfloat16)       # (E, F)
    b1 = tp["conv1_bias"].reshape(1, Fd).astype(jnp.float32)
    w_dw = tp["dw_weight"].reshape(Fd, 9).T.astype(jnp.float32)           # (9, F)
    b_dw = tp["dw_bias"].reshape(1, Fd).astype(jnp.float32)
    w2_t = tp["conv2_weight"].reshape(E, Fd).T.astype(jnp.bfloat16)       # (F, E)
    b2 = tp["conv2_bias"].reshape(1, E).astype(jnp.float32)

    return {
        "wqkv_h": wqkv_h, "bqkv_h": bqkv_h, "wo_h": wo_h, "b_out": b_out,
        "gamma1": tp["ln1_weight"].reshape(1, E), "beta1": tp["ln1_bias"].reshape(1, E),
        "gamma2": tp["ln2_weight"].reshape(1, E), "beta2": tp["ln2_bias"].reshape(1, E),
        "w1_t": w1_t, "b1": b1, "w_dw": w_dw, "b_dw": b_dw, "w2_t": w2_t, "b2": b2,
    }


# ----------------------------------------------------------------------------
# Pure-JAX f32 reference (PyTorch semantics, eval mode) for correctness check.
# ----------------------------------------------------------------------------
def _layernorm_ref(x, g, b, eps):
    mu = jnp.mean(x, axis=-1, keepdims=True)
    c = x - mu
    var = jnp.mean(c * c, axis=-1, keepdims=True)
    return c * jax.lax.rsqrt(var + eps) * g + b


def reference_forward(src, tp, *, height, width, nhead, eps=1e-5):
    hw, B, E = src.shape
    hd = E // nhead
    qkv = jnp.einsum('lbe,fe->lbf', src, tp["in_proj_weight"]) + tp["in_proj_bias"]
    q, k, v = qkv[..., :E], qkv[..., E:2 * E], qkv[..., 2 * E:]
    q = q * (1.0 / math.sqrt(hd))

    def split(t):                                            # -> (B, nhead, hw, hd)
        return t.reshape(hw, B, nhead, hd).transpose(1, 2, 0, 3)

    qh, kh, vh = split(q), split(k), split(v)
    s = jnp.einsum('bhqd,bhkd->bhqk', qh, kh)
    p = jax.nn.softmax(s, axis=-1)
    o = jnp.einsum('bhqk,bhkd->bhqd', p, vh)
    o = o.transpose(2, 0, 1, 3).reshape(hw, B, E)
    attn = jnp.einsum('lbe,fe->lbf', o, tp["out_proj_weight"]) + tp["out_proj_bias"]
    y = _layernorm_ref(src + attn, tp["ln1_weight"], tp["ln1_bias"], eps)

    # separable FF on (B, E, H, W)
    z = y.reshape(height, width, B, E).transpose(2, 3, 0, 1)
    w1 = tp["conv1_weight"][:, :, 0, 0]
    h1 = jnp.einsum('behw,fe->bfhw', z, w1) + tp["conv1_bias"][None, :, None, None]
    h1 = jnp.maximum(h1, 0.0)
    dw = tp["dw_weight"][:, 0]                               # (F, 3, 3)
    h1p = jnp.pad(h1, ((0, 0), (0, 0), (1, 1), (1, 1)))
    h2 = jnp.zeros_like(h1) + tp["dw_bias"][None, :, None, None]
    for dy in range(3):
        for dx in range(3):
            h2 = h2 + h1p[:, :, dy:dy + height, dx:dx + width] * dw[None, :, dy, dx, None, None]
    h2 = jnp.maximum(h2, 0.0)
    w2 = tp["conv2_weight"][:, :, 0, 0]
    h3 = jnp.einsum('bfhw,ef->behw', h2, w2) + tp["conv2_bias"][None, :, None, None]
    h3 = jnp.maximum(h3, 0.0)
    ff = h3.reshape(B, E, hw).transpose(2, 0, 1)             # (hw, B, E)
    return _layernorm_ref(y + ff, tp["ln2_weight"], tp["ln2_bias"], eps)


if __name__ == "__main__":
    # Small but lane-dense demo shapes: E and F multiples of 128, hw multiple of 8.
    EMBED_DIM, NHEAD, HEIGHT, WIDTH, BATCH, DIM_FF = 128, 4, 8, 8, 2, 256
    HW = HEIGHT * WIDTH

    key = jax.random.PRNGKey(0)
    k_src, k_par = jax.random.split(key)
    src = jax.random.normal(k_src, (HW, BATCH, EMBED_DIM), dtype=jnp.float32)
    torch_params = make_params(k_par, EMBED_DIM, DIM_FF)
    params = prepare_params(torch_params, embed_dim=EMBED_DIM, nhead=NHEAD)

    fwd = jax.jit(functools.partial(
        transformer_encoder_layer_2d, height=HEIGHT, width=WIDTH, nhead=NHEAD))
    out = fwd(src, params)
    out = jax.block_until_ready(out)

    assert out.shape == (HW, BATCH, EMBED_DIM)
    assert bool(jnp.all(jnp.isfinite(out)))

    # Correctness check vs a pure-JAX f32 reference (bf16 MXU tolerance).
    ref = reference_forward(src, torch_params, height=HEIGHT, width=WIDTH, nhead=NHEAD)
    max_err = float(jnp.max(jnp.abs(out - ref)))
    assert max_err < 7.5e-2, f"max abs error {max_err} vs reference"

    print("KERNEL_OK")
</pallas_src>

<mosaic_0001>
module attributes {stable_mosaic.version = 11 : i64} {
  func.func @_attn_ln1_kernel(%arg0: i32, %arg1: i32, %arg2: i32, %arg3: memref<1x64x128xf32, #tpu.memory_space<vmem>>, %arg4: memref<1x64x128xbf16, #tpu.memory_space<vmem>>, %arg5: memref<1x3x128x32xbf16, #tpu.memory_space<vmem>>, %arg6: memref<1x3x1x32xf32, #tpu.memory_space<vmem>>, %arg7: memref<1x32x128xbf16, #tpu.memory_space<vmem>>, %arg8: memref<1x128xf32, #tpu.memory_space<vmem>>, %arg9: memref<1x128xf32, #tpu.memory_space<vmem>>, %arg10: memref<1x128xf32, #tpu.memory_space<vmem>>, %arg11: memref<1x64x128xf32, #tpu.memory_space<vmem>>, %arg12: memref<64x128xf32, #tpu.memory_space<vmem>>) attributes {dimension_semantics = [#tpu.dimension_semantics<parallel>, #tpu.dimension_semantics<parallel>, #tpu.dimension_semantics<arbitrary>], iteration_bounds = array<i64: 2, 1, 4>, scalar_prefetch = 0 : i64, scratch_operands = 1 : i64, tpu.core_type = #tpu.core_type<tc>, window_params = [{transform_indices = @transform_0, window_bounds = array<i64: 1, 64, 128>}, {transform_indices = @transform_1, window_bounds = array<i64: 1, 64, 128>}, {transform_indices = @transform_2, window_bounds = array<i64: 1, 3, 128, 32>}, {transform_indices = @transform_3, window_bounds = array<i64: 1, 3, 1, 32>}, {transform_indices = @transform_4, window_bounds = array<i64: 1, 32, 128>}, {pipeline_mode = #tpu.pipeline_mode<synchronous>, transform_indices = @transform_5, window_bounds = array<i64: 1, 128>}, {pipeline_mode = #tpu.pipeline_mode<synchronous>, transform_indices = @transform_6, window_bounds = array<i64: 1, 128>}, {pipeline_mode = #tpu.pipeline_mode<synchronous>, transform_indices = @transform_7, window_bounds = array<i64: 1, 128>}, {transform_indices = @transform_8, window_bounds = array<i64: 1, 64, 128>}]} {
    %c0_i32 = arith.constant 0 : i32
    %0 = arith.cmpi eq, %arg2, %c0_i32 : i32
    %1 = arith.extui %0 : i1 to i32
    %c0_i32_0 = arith.constant 0 : i32
    %2 = arith.cmpi ne, %1, %c0_i32_0 : i32
    scf.if %2 {
      %cst_43 = arith.constant 0.000000e+00 : f32
      %55 = vector.broadcast %cst_43 : f32 to vector<64x128xf32>
      %c0_44 = arith.constant 0 : index
      %c0_45 = arith.constant 0 : index
      %56 = vector.load %arg12[%c0_44, %c0_45] : memref<64x128xf32, #tpu.memory_space<vmem>>, vector<64x128xf32>
      tpu.vector_store %arg12[%c0_44, %c0_45], %55 {strides = array<i32>} : memref<64x128xf32, #tpu.memory_space<vmem>>, vector<64x128xf32>,
    } else {
    }
    %c0 = arith.constant 0 : index
    %c0_1 = arith.constant 0 : index
    %c0_2 = arith.constant 0 : index
    %3 = vector.load %arg3[%c0, %c0_1, %c0_2] : memref<1x64x128xf32, #tpu.memory_space<vmem>>, vector<1x64x128xf32>
    %4 = vector.shape_cast %3 : vector<1x64x128xf32> to vector<64x128xf32>
    %c0_3 = arith.constant 0 : index
    %c0_4 = arith.constant 0 : index
    %c0_5 = arith.constant 0 : index
    %5 = vector.load %arg4[%c0_3, %c0_4, %c0_5] : memref<1x64x128xbf16, #tpu.memory_space<vmem>>, vector<1x64x128xbf16>
    %6 = vector.shape_cast %5 : vector<1x64x128xbf16> to vector<64x128xbf16>
    %7 = arith.truncf %4 : vector<64x128xf32> to vector<64x128xbf16>
    %c0_6 = arith.constant 0 : index
    %c0_7 = arith.constant 0 : index
    %c0_8 = arith.constant 0 : index
    %c0_9 = arith.constant 0 : index
    %8 = vector.load %arg5[%c0_6, %c0_7, %c0_8, %c0_9] : memref<1x3x128x32xbf16, #tpu.memory_space<vmem>>, vector<1x1x128x32xbf16>
    %9 = vector.shape_cast %8 : vector<1x1x128x32xbf16> to vector<128x32xbf16>
    %cst = arith.constant dense<0.000000e+00> : vector<64x32xf32>
    %10 = tpu.matmul %7, %9, %cst {dimension_numbers = #tpu.dot_dimension_numbers<[1], [0], [0], [1], [0, 0, 1, 1], [], []>} : vector<64x128xbf16>, vector<128x32xbf16>, vector<64x32xf32> -> vector<64x32xf32>
    %c0_10 = arith.constant 0 : index
    %c0_11 = arith.constant 0 : index
    %c0_12 = arith.constant 0 : index
    %c0_13 = arith.constant 0 : index
    %11 = vector.load %arg6[%c0_10, %c0_11, %c0_12, %c0_13] : memref<1x3x1x32xf32, #tpu.memory_space<vmem>>, vector<1x1x1x32xf32>
    %12 = vector.shape_cast %11 : vector<1x1x1x32xf32> to vector<1x32xf32>
    %13 = vector.broadcast %12 : vector<1x32xf32> to vector<64x32xf32>
    %14 = arith.addf %10, %13 : vector<64x32xf32>
    %c0_14 = arith.constant 0 : index
    %c1 = arith.constant 1 : index
    %c0_15 = arith.constant 0 : index
    %c0_16 = arith.constant 0 : index
    %15 = vector.load %arg5[%c0_14, %c1, %c0_15, %c0_16] : memref<1x3x128x32xbf16, #tpu.memory_space<vmem>>, vector<1x1x128x32xbf16>
    %16 = vector.shape_cast %15 : vector<1x1x128x32xbf16> to vector<128x32xbf16>
    %cst_17 = arith.constant dense<0.000000e+00> : vector<64x32xf32>
    %17 = tpu.matmul %6, %16, %cst_17 {dimension_numbers = #tpu.dot_dimension_numbers<[1], [0], [0], [1], [0, 0, 1, 1], [], []>} : vector<64x128xbf16>, vector<128x32xbf16>, vector<64x32xf32> -> vector<64x32xf32>
    %c0_18 = arith.constant 0 : index
    %c1_19 = arith.constant 1 : index
    %c0_20 = arith.constant 0 : index
    %c0_21 = arith.constant 0 : index
    %18 = vector.load %arg6[%c0_18, %c1_19, %c0_20, %c0_21] : memref<1x3x1x32xf32, #tpu.memory_space<vmem>>, vector<1x1x1x32xf32>
    %19 = vector.shape_cast %18 : vector<1x1x1x32xf32> to vector<1x32xf32>
    %20 = vector.broadcast %19 : vector<1x32xf32> to vector<64x32xf32>
    %21 = arith.addf %17, %20 : vector<64x32xf32>
    %c0_22 = arith.constant 0 : index
    %c2 = arith.constant 2 : index
    %c0_23 = arith.constant 0 : index
    %c0_24 = arith.constant 0 : index
    %22 = vector.load %arg5[%c0_22, %c2, %c0_23, %c0_24] : memref<1x3x128x32xbf16, #tpu.memory_space<vmem>>, vector<1x1x128x32xbf16>
    %23 = vector.shape_cast %22 : vector<1x1x128x32xbf16> to vector<128x32xbf16>
    %cst_25 = arith.constant dense<0.000000e+00> : vector<64x32xf32>
    %24 = tpu.matmul %6, %23, %cst_25 {dimension_numbers = #tpu.dot_dimension_numbers<[1], [0], [0], [1], [0, 0, 1, 1], [], []>} : vector<64x128xbf16>, vector<128x32xbf16>, vector<64x32xf32> -> vector<64x32xf32>
    %c0_26 = arith.constant 0 : index
    %c2_27 = arith.constant 2 : index
    %c0_28 = arith.constant 0 : index
    %c0_29 = arith.constant 0 : index
    %25 = vector.load %arg6[%c0_26, %c2_27, %c0_28, %c0_29] : memref<1x3x1x32xf32, #tpu.memory_space<vmem>>, vector<1x1x1x32xf32>
    %26 = vector.shape_cast %25 : vector<1x1x1x32xf32> to vector<1x32xf32>
    %27 = vector.broadcast %26 : vector<1x32xf32> to vector<64x32xf32>
    %28 = arith.addf %24, %27 : vector<64x32xf32>
    %29 = arith.truncf %14 : vector<64x32xf32> to vector<64x32xbf16>
    %30 = arith.truncf %21 : vector<64x32xf32> to vector<64x32xbf16>
    %cst_30 = arith.constant dense<0.000000e+00> : vector<64x64xf32>
    %31 = tpu.matmul %29, %30, %cst_30 {dimension_numbers = #tpu.dot_dimension_numbers<[1], [1], [0], [0], [0, 0, 1, 0], [], []>} : vector<64x32xbf16>, vector<64x32xbf16>, vector<64x64xf32> -> vector<64x64xf32>
    %cst_31 = arith.constant dense<0xFF800000> : vector<64xf32>
    %32 = vector.multi_reduction <maximumf>, %31, %cst_31 [1] : vector<64x64xf32> to vector<64xf32>
    %33 = vector.shape_cast %32 : vector<64xf32> to vector<64x1xf32>
    %34 = vector.broadcast %33 : vector<64x1xf32> to vector<64x64xf32>
    %35 = arith.subf %31, %34 : vector<64x64xf32>
    %36 = math.exp %35 : vector<64x64xf32>
    %cst_32 = arith.constant dense<0.000000e+00> : vector<64xf32>
    %37 = vector.multi_reduction <add>, %36, %cst_32 [1] : vector<64x64xf32> to vector<64xf32>
    %38 = vector.shape_cast %37 : vector<64xf32> to vector<64x1xf32>
    %39 = tpu.reciprocal %38 {approx = true} : vector<64x1xf32> -> vector<64x1xf32>
    %40 = arith.truncf %36 : vector<64x64xf32> to vector<64x64xbf16>
    %41 = arith.truncf %28 : vector<64x32xf32> to vector<64x32xbf16>
    %cst_33 = arith.constant dense<0.000000e+00> : vector<64x32xf32>
    %42 = tpu.matmul %40, %41, %cst_33 {dimension_numbers = #tpu.dot_dimension_numbers<[1], [0], [0], [1], [0, 0, 1, 1], [], []>} : vector<64x64xbf16>, vector<64x32xbf16>, vector<64x32xf32> -> vector<64x32xf32>
    %43 = vector.broadcast %39 : vector<64x1xf32> to vector<64x32xf32>
    %44 = arith.mulf %42, %43 : vector<64x32xf32>
    %c0_34 = arith.constant 0 : index
    %c0_35 = arith.constant 0 : index
    %45 = vector.load %arg12[%c0_34, %c0_35] : memref<64x128xf32, #tpu.memory_space<vmem>>, vector<64x128xf32>
    %46 = arith.truncf %44 : vector<64x32xf32> to vector<64x32xbf16>
    %c0_36 = arith.constant 0 : index
    %c0_37 = arith.constant 0 : index
    %c0_38 = arith.constant 0 : index
    %47 = vector.load %arg7[%c0_36, %c0_37, %c0_38] : memref<1x32x128xbf16, #tpu.memory_space<vmem>>, vector<1x32x128xbf16>
    %48 = vector.shape_cast %47 : vector<1x32x128xbf16> to vector<32x128xbf16>
    %cst_39 = arith.constant dense<0.000000e+00> : vector<64x128xf32>
    %49 = tpu.matmul %46, %48, %cst_39 {dimension_numbers = #tpu.dot_dimension_numbers<[1], [0], [0], [1], [0, 0, 1, 1], [], []>} : vector<64x32xbf16>, vector<32x128xbf16>, vector<64x128xf32> -> vector<64x128xf32>
    %50 = arith.addf %45, %49 : vector<64x128xf32>
    %c0_40 = arith.constant 0 : index
    %c0_41 = arith.constant 0 : index
    %51 = vector.load %arg12[%c0_40, %c0_41] : memref<64x128xf32, #tpu.memory_space<vmem>>, vector<64x128xf32>
    tpu.vector_store %arg12[%c0_40, %c0_41], %50 {strides = array<i32>} : memref<64x128xf32, #tpu.memory_space<vmem>>, vector<64x128xf32>,
    %c3_i32 = arith.constant 3 : i32
    %52 = arith.cmpi eq, %arg2, %c3_i32 : i32
    %53 = arith.extui %52 : i1 to i32
    %c0_i32_42 = arith.constant 0 : i32
    %54 = arith.cmpi ne, %53, %c0_i32_42 : i32
    scf.if %54 {
      %c0_43 = arith.constant 0 : index
      %c0_44 = arith.constant 0 : index
      %55 = vector.load %arg12[%c0_43, %c0_44] : memref<64x128xf32, #tpu.memory_space<vmem>>, vector<64x128xf32>
      %c0_45 = arith.constant 0 : index
      %c0_46 = arith.constant 0 : index
      %56 = vector.load %arg8[%c0_45, %c0_46] : memref<1x128xf32, #tpu.memory_space<vmem>>, vector<1x128xf32>
      %57 = vector.broadcast %56 : vector<1x128xf32> to vector<64x128xf32>
      %58 = arith.addf %55, %57 : vector<64x128xf32>
      %c0_47 = arith.constant 0 : index
      %c0_48 = arith.constant 0 : index
      %59 = vector.load %arg9[%c0_47, %c0_48] : memref<1x128xf32, #tpu.memory_space<vmem>>, vector<1x128xf32>
      %c0_49 = arith.constant 0 : index
      %c0_50 = arith.constant 0 : index
      %60 = vector.load %arg10[%c0_49, %c0_50] : memref<1x128xf32, #tpu.memory_space<vmem>>, vector<1x128xf32>
      %61 = arith.addf %4, %58 : vector<64x128xf32>
      %cst_51 = arith.constant dense<0.000000e+00> : vector<64xf32>
      %62 = vector.multi_reduction <add>, %61, %cst_51 [1] : vector<64x128xf32> to vector<64xf32>
      %63 = vector.shape_cast %62 : vector<64xf32> to vector<64x1xf32>
      %cst_52 = arith.constant 1.280000e+02 : f32
      %64 = vector.broadcast %cst_52 : f32 to vector<64x1xf32>
      %65 = arith.divf %63, %64 : vector<64x1xf32>
      %66 = vector.broadcast %65 : vector<64x1xf32> to vector<64x128xf32>
      %67 = arith.subf %61, %66 : vector<64x128xf32>
      %68 = arith.mulf %67, %67 : vector<64x128xf32>
      %cst_53 = arith.constant dense<0.000000e+00> : vector<64xf32>
      %69 = vector.multi_reduction <add>, %68, %cst_53 [1] : vector<64x128xf32> to vector<64xf32>
      %70 = vector.shape_cast %69 : vector<64xf32> to vector<64x1xf32>
      %cst_54 = arith.constant 1.280000e+02 : f32
      %71 = vector.broadcast %cst_54 : f32 to vector<64x1xf32>
      %72 = arith.divf %70, %71 : vector<64x1xf32>
      %cst_55 = arith.constant 9.99999974E-6 : f32
      %73 = vector.broadcast %cst_55 : f32 to vector<64x1xf32>
      %74 = arith.addf %72, %73 : vector<64x1xf32>
      %75 = math.rsqrt %74 : vector<64x1xf32>
      %76 = vector.broadcast %75 : vector<64x1xf32> to vector<64x128xf32>
      %77 = arith.mulf %67, %76 : vector<64x128xf32>
      %78 = vector.broadcast %59 : vector<1x128xf32> to vector<64x128xf32>
      %79 = arith.mulf %77, %78 : vector<64x128xf32>
      %80 = vector.broadcast %60 : vector<1x128xf32> to vector<64x128xf32>
      %81 = arith.addf %79, %80 : vector<64x128xf32>
      %c0_56 = arith.constant 0 : index
      %c0_57 = arith.constant 0 : index
      %c0_58 = arith.constant 0 : index
      %82 = vector.load %arg11[%c0_56, %c0_57, %c0_58] : memref<1x64x128xf32, #tpu.memory_space<vmem>>, vector<1x64x128xf32>
      %83 = vector.shape_cast %82 : vector<1x64x128xf32> to vector<64x128xf32>
      %84 = vector.shape_cast %81 : vector<64x128xf32> to vector<1x64x128xf32>
      tpu.vector_store %arg11[%c0_56, %c0_57, %c0_58], %84 {strides = array<i32>} : memref<1x64x128xf32, #tpu.memory_space<vmem>>, vector<1x64x128xf32>,
    } else {
    }
    return
  }
  func.func @transform_0(%arg0: i32, %arg1: i32, %arg2: i32) -> (i32, i32, i32) {
    %c0_i32 = arith.constant 0 : i32
    %c0_i32_0 = arith.constant 0 : i32
    return %arg0, %arg1, %c0_i32 : i32, i32, i32
  }
  func.func @transform_1(%arg0: i32, %arg1: i32, %arg2: i32) -> (i32, i32, i32) {
    %c0_i32 = arith.constant 0 : i32
    %c0_i32_0 = arith.constant 0 : i32
    %c0_i32_1 = arith.constant 0 : i32
    return %arg0, %c0_i32, %c0_i32_0 : i32, i32, i32
  }
  func.func @transform_2(%arg0: i32, %arg1: i32, %arg2: i32) -> (i32, i32, i32, i32) {
    %c0_i32 = arith.constant 0 : i32
    %c0_i32_0 = arith.constant 0 : i32
    %c0_i32_1 = arith.constant 0 : i32
    %c0_i32_2 = arith.constant 0 : i32
    return %arg2, %c0_i32, %c0_i32_0, %c0_i32_1 : i32, i32, i32, i32
  }
  func.func @transform_3(%arg0: i32, %arg1: i32, %arg2: i32) -> (i32, i32, i32, i32) {
    %c0_i32 = arith.constant 0 : i32
    %c0_i32_0 = arith.constant 0 : i32
    %c0_i32_1 = arith.constant 0 : i32
    %c0_i32_2 = arith.constant 0 : i32
    return %arg2, %c0_i32, %c0_i32_0, %c0_i32_1 : i32, i32, i32, i32
  }
  func.func @transform_4(%arg0: i32, %arg1: i32, %arg2: i32) -> (i32, i32, i32) {
    %c0_i32 = arith.constant 0 : i32
    %c0_i32_0 = arith.constant 0 : i32
    %c0_i32_1 = arith.constant 0 : i32
    return %arg2, %c0_i32, %c0_i32_0 : i32, i32, i32
  }
  func.func @transform_5(%arg0: i32, %arg1: i32, %arg2: i32) -> (i32, i32) {
    %c0_i32 = arith.constant 0 : i32
    %c0_i32_0 = arith.constant 0 : i32
    %c0_i32_1 = arith.constant 0 : i32
    return %c0_i32, %c0_i32_0 : i32, i32
  }
  func.func @transform_6(%arg0: i32, %arg1: i32, %arg2: i32) -> (i32, i32) {
    %c0_i32 = arith.constant 0 : i32
    %c0_i32_0 = arith.constant 0 : i32
    %c0_i32_1 = arith.constant 0 : i32
    return %c0_i32, %c0_i32_0 : i32, i32
  }
  func.func @transform_7(%arg0: i32, %arg1: i32, %arg2: i32) -> (i32, i32) {
    %c0_i32 = arith.constant 0 : i32
    %c0_i32_0 = arith.constant 0 : i32
    %c0_i32_1 = arith.constant 0 : i32
    return %c0_i32, %c0_i32_0 : i32, i32
  }
  func.func @transform_8(%arg0: i32, %arg1: i32, %arg2: i32) -> (i32, i32, i32) {
    %c0_i32 = arith.constant 0 : i32
    %c0_i32_0 = arith.constant 0 : i32
    return %arg0, %arg1, %c0_i32 : i32, i32, i32
  }
}

module attributes {stable_mosaic.version = 11 : i64} {
  func.func @_ff_ln2_kernel(%arg0: i32, %arg1: memref<1x64x128xf32, #tpu.memory_space<vmem>>, %arg2: memref<128x256xbf16, #tpu.memory_space<vmem>>, %arg3: memref<1x256xf32, #tpu.memory_space<vmem>>, %arg4: memref<9x256xf32, #tpu.memory_space<vmem>>, %arg5: memref<1x256xf32, #tpu.memory_space<vmem>>, %arg6: memref<256x128xbf16, #tpu.memory_space<vmem>>, %arg7: memref<1x128xf32, #tpu.memory_space<vmem>>, %arg8: memref<1x128xf32, #tpu.memory_space<vmem>>, %arg9: memref<1x128xf32, #tpu.memory_space<vmem>>, %arg10: memref<1x64x128xf32, #tpu.memory_space<vmem>>, %arg11: memref<80x256xf32, #tpu.memory_space<vmem>>) attributes {dimension_semantics = [#tpu.dimension_semantics<parallel>], iteration_bounds = array<i64: 2>, scalar_prefetch = 0 : i64, scratch_operands = 1 : i64, tpu.core_type = #tpu.core_type<tc>, window_params = [{transform_indices = @transform_0, window_bounds = array<i64: 1, 64, 128>}, {pipeline_mode = #tpu.pipeline_mode<synchronous>, transform_indices = @transform_1, window_bounds = array<i64: 128, 256>}, {pipeline_mode = #tpu.pipeline_mode<synchronous>, transform_indices = @transform_2, window_bounds = array<i64: 1, 256>}, {pipeline_mode = #tpu.pipeline_mode<synchronous>, transform_indices = @transform_3, window_bounds = array<i64: 9, 256>}, {pipeline_mode = #tpu.pipeline_mode<synchronous>, transform_indices = @transform_4, window_bounds = array<i64: 1, 256>}, {pipeline_mode = #tpu.pipeline_mode<synchronous>, transform_indices = @transform_5, window_bounds = array<i64: 256, 128>}, {pipeline_mode = #tpu.pipeline_mode<synchronous>, transform_indices = @transform_6, window_bounds = array<i64: 1, 128>}, {pipeline_mode = #tpu.pipeline_mode<synchronous>, transform_indices = @transform_7, window_bounds = array<i64: 1, 128>}, {pipeline_mode = #tpu.pipeline_mode<synchronous>, transform_indices = @transform_8, window_bounds = array<i64: 1, 128>}, {transform_indices = @transform_9, window_bounds = array<i64: 1, 64, 128>}]} {
    %c0 = arith.constant 0 : index
    %c0_0 = arith.constant 0 : index
    %c0_1 = arith.constant 0 : index
    %0 = vector.load %arg1[%c0, %c0_0, %c0_1] : memref<1x64x128xf32, #tpu.memory_space<vmem>>, vector<1x64x128xf32>
    %1 = vector.shape_cast %0 : vector<1x64x128xf32> to vector<64x128xf32>
    %2 = arith.truncf %1 : vector<64x128xf32> to vector<64x128xbf16>
    %c0_2 = arith.constant 0 : index
    %c0_3 = arith.constant 0 : index
    %3 = vector.load %arg2[%c0_2, %c0_3] : memref<128x256xbf16, #tpu.memory_space<vmem>>, vector<128x256xbf16>
    %cst = arith.constant dense<0.000000e+00> : vector<64x256xf32>
    %4 = tpu.matmul %2, %3, %cst {dimension_numbers = #tpu.dot_dimension_numbers<[1], [0], [0], [1], [0, 0, 1, 1], [], []>} : vector<64x128xbf16>, vector<128x256xbf16>, vector<64x256xf32> -> vector<64x256xf32>
    %c0_4 = arith.constant 0 : index
    %c0_5 = arith.constant 0 : index
    %5 = vector.load %arg3[%c0_4, %c0_5] : memref<1x256xf32, #tpu.memory_space<vmem>>, vector<1x256xf32>
    %6 = vector.broadcast %5 : vector<1x256xf32> to vector<64x256xf32>
    %7 = arith.addf %4, %6 : vector<64x256xf32>
    %cst_6 = arith.constant 0.000000e+00 : f32
    %8 = vector.broadcast %cst_6 : f32 to vector<64x256xf32>
    %9 = arith.maximumf %7, %8 : vector<64x256xf32>
    %cst_7 = arith.constant 0.000000e+00 : f32
    %10 = vector.broadcast %cst_7 : f32 to vector<8x256xf32>
    %c0_8 = arith.constant 0 : index
    %c0_9 = arith.constant 0 : index
    %11 = vector.load %arg11[%c0_8, %c0_9] : memref<80x256xf32, #tpu.memory_space<vmem>>, vector<8x256xf32>
    tpu.vector_store %arg11[%c0_8, %c0_9], %10 {strides = array<i32>} : memref<80x256xf32, #tpu.memory_space<vmem>>, vector<8x256xf32>,
    %c8 = arith.constant 8 : index
    %c0_10 = arith.constant 0 : index
    %12 = vector.load %arg11[%c8, %c0_10] : memref<80x256xf32, #tpu.memory_space<vmem>>, vector<64x256xf32>
    tpu.vector_store %arg11[%c8, %c0_10], %9 {strides = array<i32>} : memref<80x256xf32, #tpu.memory_space<vmem>>, vector<64x256xf32>,
    %cst_11 = arith.constant 0.000000e+00 : f32
    %13 = vector.broadcast %cst_11 : f32 to vector<8x256xf32>
    %c72 = arith.constant 72 : index
    %c0_12 = arith.constant 0 : index
    %14 = vector.load %arg11[%c72, %c0_12] : memref<80x256xf32, #tpu.memory_space<vmem>>, vector<8x256xf32>
    tpu.vector_store %arg11[%c72, %c0_12], %13 {strides = array<i32>} : memref<80x256xf32, #tpu.memory_space<vmem>>, vector<8x256xf32>,
    %c0_13 = arith.constant 0 : index
    %c0_14 = arith.constant 0 : index
    %15 = vector.load %arg11[%c0_13, %c0_14] : memref<80x256xf32, #tpu.memory_space<vmem>>, vector<80x256xf32>
    %16 = tpu.iota {dimensions = array<i32: 0>} : vector<80x1xi32>
    %c8_i32 = arith.constant 8 : i32
    %c0_i32 = arith.constant 0 : i32
    %17 = arith.cmpi eq, %c8_i32, %c0_i32 : i32
    %c1_i32 = arith.constant 1 : i32
    %18 = arith.select %17, %c1_i32, %c8_i32 : i32
    %19 = vector.broadcast %18 : i32 to vector<80x1xi32>
    %20 = arith.remsi %16, %19 : vector<80x1xi32>
    %c0_i32_15 = arith.constant 0 : i32
    %21 = vector.broadcast %c0_i32_15 : i32 to vector<80x1xi32>
    %22 = arith.cmpi ne, %20, %21 : vector<80x1xi32>
    %c0_i32_16 = arith.constant 0 : i32
    %23 = vector.broadcast %c0_i32_16 : i32 to vector<80x1xi32>
    %24 = arith.cmpi slt, %20, %23 : vector<80x1xi32>
    %c0_i32_17 = arith.constant 0 : i32
    %25 = arith.cmpi slt, %18, %c0_i32_17 : i32
    %26 = vector.broadcast %25 : i1 to vector<80x1xi1>
    %27 = vector.broadcast %26 : vector<80x1xi1> to vector<80x1xi1>
    %28 = arith.xori %24, %27 : vector<80x1xi1>
    %29 = arith.andi %28, %22 : vector<80x1xi1>
    %30 = vector.broadcast %18 : i32 to vector<80x1xi32>
    %31 = arith.addi %20, %30 : vector<80x1xi32>
    %32 = arith.select %29, %31, %20 : vector<80x1xi1>, vector<80x1xi32>
    %c0_18 = arith.constant 0 : index
    %c0_19 = arith.constant 0 : index
    %33 = vector.load %arg4[%c0_18, %c0_19] : memref<9x256xf32, #tpu.memory_space<vmem>>, vector<9x256xf32>
    %cst_20 = arith.constant 0.000000e+00 : f32
    %34 = vector.broadcast %cst_20 : f32 to vector<64x256xf32>
    %c0_21 = arith.constant 0 : index
    %c0_22 = arith.constant 0 : index
    %35 = vector.load %arg5[%c0_21, %c0_22] : memref<1x256xf32, #tpu.memory_space<vmem>>, vector<1x256xf32>
    %36 = vector.broadcast %35 : vector<1x256xf32> to vector<64x256xf32>
    %37 = arith.addf %34, %36 : vector<64x256xf32>
    %c1_i32_23 = arith.constant 1 : i32
    %38 = tpu.dynamic_rotate %15 by %c1_i32_23 dim 0 : vector<80x256xf32>, i32 -> vector<80x256xf32>
    %c0_i32_24 = arith.constant 0 : i32
    %39 = vector.broadcast %c0_i32_24 : i32 to vector<80x1xi32>
    %40 = arith.cmpi eq, %32, %39 : vector<80x1xi32>
    %cst_25 = arith.constant 0.000000e+00 : f32
    %41 = vector.shape_cast %40 : vector<80x1xi1> to vector<80x1xi1>
    %42 = vector.broadcast %41 : vector<80x1xi1> to vector<80x256xi1>
    %43 = vector.broadcast %cst_25 : f32 to vector<80x256xf32>
    %44 = arith.select %42, %43, %38 : vector<80x256xi1>, vector<80x256xf32>
    %45 = vector.extract_strided_slice %44 {offsets = [0, 0], sizes = [64, 256], strides = [1, 1]} : vector<80x256xf32> to vector<64x256xf32>
    %46 = vector.extract_strided_slice %33 {offsets = [0, 0], sizes = [1, 256], strides = [1, 1]} : vector<9x256xf32> to vector<1x256xf32>
    %47 = vector.broadcast %46 : vector<1x256xf32> to vector<64x256xf32>
    %48 = arith.mulf %45, %47 : vector<64x256xf32>
    %49 = arith.addf %37, %48 : vector<64x256xf32>
    %50 = vector.extract_strided_slice %44 {offsets = [8, 0], sizes = [64, 256], strides = [1, 1]} : vector<80x256xf32> to vector<64x256xf32>
    %51 = vector.extract_strided_slice %33 {offsets = [3, 0], sizes = [1, 256], strides = [1, 1]} : vector<9x256xf32> to vector<1x256xf32>
    %52 = vector.broadcast %51 : vector<1x256xf32> to vector<64x256xf32>
    %53 = arith.mulf %50, %52 : vector<64x256xf32>
    %54 = arith.addf %49, %53 : vector<64x256xf32>
    %55 = vector.extract_strided_slice %44 {offsets = [16, 0], sizes = [64, 256], strides = [1, 1]} : vector<80x256xf32> to vector<64x256xf32>
    %56 = vector.extract_strided_slice %33 {offsets = [6, 0], sizes = [1, 256], strides = [1, 1]} : vector<9x256xf32> to vector<1x256xf32>
    %57 = vector.broadcast %56 : vector<1x256xf32> to vector<64x256xf32>
    %58 = arith.mulf %55, %57 : vector<64x256xf32>
    %59 = arith.addf %54, %58 : vector<64x256xf32>
    %60 = vector.extract_strided_slice %15 {offsets = [0, 0], sizes = [64, 256], strides = [1, 1]} : vector<80x256xf32> to vector<64x256xf32>
    %61 = vector.extract_strided_slice %33 {offsets = [1, 0], sizes = [1, 256], strides = [1, 1]} : vector<9x256xf32> to vector<1x256xf32>
    %62 = vector.broadcast %61 : vector<1x256xf32> to vector<64x256xf32>
    %63 = arith.mulf %60, %62 : vector<64x256xf32>
    %64 = arith.addf %59, %63 : vector<64x256xf32>
    %65 = vector.extract_strided_slice %15 {offsets = [8, 0], sizes = [64, 256], strides = [1, 1]} : vector<80x256xf32> to vector<64x256xf32>
    %66 = vector.extract_strided_slice %33 {offsets = [4, 0], sizes = [1, 256], strides = [1, 1]} : vector<9x256xf32> to vector<1x256xf32>
    %67 = vector.broadcast %66 : vector<1x256xf32> to vector<64x256xf32>
    %68 = arith.mulf %65, %67 : vector<64x256xf32>
    %69 = arith.addf %64, %68 : vector<64x256xf32>
    %70 = vector.extract_strided_slice %15 {offsets = [16, 0], sizes = [64, 256], strides = [1, 1]} : vector<80x256xf32> to vector<64x256xf32>
    %71 = vector.extract_strided_slice %33 {offsets = [7, 0], sizes = [1, 256], strides = [1, 1]} : vector<9x256xf32> to vector<1x256xf32>
    %72 = vector.broadcast %71 : vector<1x256xf32> to vector<64x256xf32>
    %73 = arith.mulf %70, %72 : vector<64x256xf32>
    %74 = arith.addf %69, %73 : vector<64x256xf32>
    %c79_i32 = arith.constant 79 : i32
    %75 = tpu.dynamic_rotate %15 by %c79_i32 dim 0 : vector<80x256xf32>, i32 -> vector<80x256xf32>
    %c7_i32 = arith.constant 7 : i32
    %76 = vector.broadcast %c7_i32 : i32 to vector<80x1xi32>
    %77 = arith.cmpi eq, %32, %76 : vector<80x1xi32>
    %cst_26 = arith.constant 0.000000e+00 : f32
    %78 = vector.shape_cast %77 : vector<80x1xi1> to vector<80x1xi1>
    %79 = vector.broadcast %78 : vector<80x1xi1> to vector<80x256xi1>
    %80 = vector.broadcast %cst_26 : f32 to vector<80x256xf32>
    %81 = arith.select %79, %80, %75 : vector<80x256xi1>, vector<80x256xf32>
    %82 = vector.extract_strided_slice %81 {offsets = [0, 0], sizes = [64, 256], strides = [1, 1]} : vector<80x256xf32> to vector<64x256xf32>
    %83 = vector.extract_strided_slice %33 {offsets = [2, 0], sizes = [1, 256], strides = [1, 1]} : vector<9x256xf32> to vector<1x256xf32>
    %84 = vector.broadcast %83 : vector<1x256xf32> to vector<64x256xf32>
    %85 = arith.mulf %82, %84 : vector<64x256xf32>
    %86 = arith.addf %74, %85 : vector<64x256xf32>
    %87 = vector.extract_strided_slice %81 {offsets = [8, 0], sizes = [64, 256], strides = [1, 1]} : vector<80x256xf32> to vector<64x256xf32>
    %88 = vector.extract_strided_slice %33 {offsets = [5, 0], sizes = [1, 256], strides = [1, 1]} : vector<9x256xf32> to vector<1x256xf32>
    %89 = vector.broadcast %88 : vector<1x256xf32> to vector<64x256xf32>
    %90 = arith.mulf %87, %89 : vector<64x256xf32>
    %91 = arith.addf %86, %90 : vector<64x256xf32>
    %92 = vector.extract_strided_slice %81 {offsets = [16, 0], sizes = [64, 256], strides = [1, 1]} : vector<80x256xf32> to vector<64x256xf32>
    %93 = vector.extract_strided_slice %33 {offsets = [8, 0], sizes = [1, 256], strides = [1, 1]} : vector<9x256xf32> to vector<1x256xf32>
    %94 = vector.broadcast %93 : vector<1x256xf32> to vector<64x256xf32>
    %95 = arith.mulf %92, %94 : vector<64x256xf32>
    %96 = arith.addf %91, %95 : vector<64x256xf32>
    %cst_27 = arith.constant 0.000000e+00 : f32
    %97 = vector.broadcast %cst_27 : f32 to vector<64x256xf32>
    %98 = arith.maximumf %96, %97 : vector<64x256xf32>
    %99 = arith.truncf %98 : vector<64x256xf32> to vector<64x256xbf16>
    %c0_28 = arith.constant 0 : index
    %c0_29 = arith.constant 0 : index
    %100 = vector.load %arg6[%c0_28, %c0_29] : memref<256x128xbf16, #tpu.memory_space<vmem>>, vector<256x128xbf16>
    %cst_30 = arith.constant dense<0.000000e+00> : vector<64x128xf32>
    %101 = tpu.matmul %99, %100, %cst_30 {dimension_numbers = #tpu.dot_dimension_numbers<[1], [0], [0], [1], [0, 0, 1, 1], [], []>} : vector<64x256xbf16>, vector<256x128xbf16>, vector<64x128xf32> -> vector<64x128xf32>
    %c0_31 = arith.constant 0 : index
    %c0_32 = arith.constant 0 : index
    %102 = vector.load %arg7[%c0_31, %c0_32] : memref<1x128xf32, #tpu.memory_space<vmem>>, vector<1x128xf32>
    %103 = vector.broadcast %102 : vector<1x128xf32> to vector<64x128xf32>
    %104 = arith.addf %101, %103 : vector<64x128xf32>
    %cst_33 = arith.constant 0.000000e+00 : f32
    %105 = vector.broadcast %cst_33 : f32 to vector<64x128xf32>
    %106 = arith.maximumf %104, %105 : vector<64x128xf32>
    %c0_34 = arith.constant 0 : index
    %c0_35 = arith.constant 0 : index
    %107 = vector.load %arg8[%c0_34, %c0_35] : memref<1x128xf32, #tpu.memory_space<vmem>>, vector<1x128xf32>
    %c0_36 = arith.constant 0 : index
    %c0_37 = arith.constant 0 : index
    %108 = vector.load %arg9[%c0_36, %c0_37] : memref<1x128xf32, #tpu.memory_space<vmem>>, vector<1x128xf32>
    %109 = arith.addf %1, %106 : vector<64x128xf32>
    %cst_38 = arith.constant dense<0.000000e+00> : vector<64xf32>
    %110 = vector.multi_reduction <add>, %109, %cst_38 [1] : vector<64x128xf32> to vector<64xf32>
    %111 = vector.shape_cast %110 : vector<64xf32> to vector<64x1xf32>
    %cst_39 = arith.constant 1.280000e+02 : f32
    %112 = vector.broadcast %cst_39 : f32 to vector<64x1xf32>
    %113 = arith.divf %111, %112 : vector<64x1xf32>
    %114 = vector.broadcast %113 : vector<64x1xf32> to vector<64x128xf32>
    %115 = arith.subf %109, %114 : vector<64x128xf32>
    %116 = arith.mulf %115, %115 : vector<64x128xf32>
    %cst_40 = arith.constant dense<0.000000e+00> : vector<64xf32>
    %117 = vector.multi_reduction <add>, %116, %cst_40 [1] : vector<64x128xf32> to vector<64xf32>
    %118 = vector.shape_cast %117 : vector<64xf32> to vector<64x1xf32>
    %cst_41 = arith.constant 1.280000e+02 : f32
    %119 = vector.broadcast %cst_41 : f32 to vector<64x1xf32>
    %120 = arith.divf %118, %119 : vector<64x1xf32>
    %cst_42 = arith.constant 9.99999974E-6 : f32
    %121 = vector.broadcast %cst_42 : f32 to vector<64x1xf32>
    %122 = arith.addf %120, %121 : vector<64x1xf32>
    %123 = math.rsqrt %122 : vector<64x1xf32>
    %124 = vector.broadcast %123 : vector<64x1xf32> to vector<64x128xf32>
    %125 = arith.mulf %115, %124 : vector<64x128xf32>
    %126 = vector.broadcast %107 : vector<1x128xf32> to vector<64x128xf32>
    %127 = arith.mulf %125, %126 : vector<64x128xf32>
    %128 = vector.broadcast %108 : vector<1x128xf32> to vector<64x128xf32>
    %129 = arith.addf %127, %128 : vector<64x128xf32>
    %c0_43 = arith.constant 0 : index
    %c0_44 = arith.constant 0 : index
    %c0_45 = arith.constant 0 : index
    %130 = vector.load %arg10[%c0_43, %c0_44, %c0_45] : memref<1x64x128xf32, #tpu.memory_space<vmem>>, vector<1x64x128xf32>
    %131 = vector.shape_cast %130 : vector<1x64x128xf32> to vector<64x128xf32>
    %132 = vector.shape_cast %129 : vector<64x128xf32> to vector<1x64x128xf32>
    tpu.vector_store %arg10[%c0_43, %c0_44, %c0_45], %132 {strides = array<i32>} : memref<1x64x128xf32, #tpu.memory_space<vmem>>, vector<1x64x128xf32>,
    return
  }
  func.func @transform_0(%arg0: i32) -> (i32, i32, i32) {
    %c0_i32 = arith.constant 0 : i32
    %c0_i32_0 = arith.constant 0 : i32
    %c0_i32_1 = arith.constant 0 : i32
    return %arg0, %c0_i32, %c0_i32_0 : i32, i32, i32
  }
  func.func @transform_1(%arg0: i32) -> (i32, i32) {
    %c0_i32 = arith.constant 0 : i32
    %c0_i32_0 = arith.constant 0 : i32
    %c0_i32_1 = arith.constant 0 : i32
    return %c0_i32, %c0_i32_0 : i32, i32
  }
  func.func @transform_2(%arg0: i32) -> (i32, i32) {
    %c0_i32 = arith.constant 0 : i32
    %c0_i32_0 = arith.constant 0 : i32
    %c0_i32_1 = arith.constant 0 : i32
    return %c0_i32, %c0_i32_0 : i32, i32
  }
  func.func @transform_3(%arg0: i32) -> (i32, i32) {
    %c0_i32 = arith.constant 0 : i32
    %c0_i32_0 = arith.constant 0 : i32
    %c0_i32_1 = arith.constant 0 : i32
    return %c0_i32, %c0_i32_0 : i32, i32
  }
  func.func @transform_4(%arg0: i32) -> (i32, i32) {
    %c0_i32 = arith.constant 0 : i32
    %c0_i32_0 = arith.constant 0 : i32
    %c0_i32_1 = arith.constant 0 : i32
    return %c0_i32, %c0_i32_0 : i32, i32
  }
  func.func @transform_5(%arg0: i32) -> (i32, i32) {
    %c0_i32 = arith.constant 0 : i32
    %c0_i32_0 = arith.constant 0 : i32
    %c0_i32_1 = arith.constant 0 : i32
    return %c0_i32, %c0_i32_0 : i32, i32
  }
  func.func @transform_6(%arg0: i32) -> (i32, i32) {
    %c0_i32 = arith.constant 0 : i32
    %c0_i32_0 = arith.constant 0 : i32
    %c0_i32_1 = arith.constant 0 : i32
    return %c0_i32, %c0_i32_0 : i32, i32
  }
  func.func @transform_7(%arg0: i32) -> (i32, i32) {
    %c0_i32 = arith.constant 0 : i32
    %c0_i32_0 = arith.constant 0 : i32
    %c0_i32_1 = arith.constant 0 : i32
    return %c0_i32, %c0_i32_0 : i32, i32
  }
  func.func @transform_8(%arg0: i32) -> (i32, i32) {
    %c0_i32 = arith.constant 0 : i32
    %c0_i32_0 = arith.constant 0 : i32
    %c0_i32_1 = arith.constant 0 : i32
    return %c0_i32, %c0_i32_0 : i32, i32
  }
  func.func @transform_9(%arg0: i32) -> (i32, i32, i32) {
    %c0_i32 = arith.constant 0 : i32
    %c0_i32_0 = arith.constant 0 : i32
    %c0_i32_1 = arith.constant 0 : i32
    return %arg0, %c0_i32, %c0_i32_0 : i32, i32, i32
  }
}

</mosaic_0001>

<llo_original>
// kernel: transformer_encoder_layer_2d.2
$region0: #{transformer_encoder_layer_2d.2}
  #allocation0 [shape = 'u32[]', space=smem, size = 0x4, offset = 0x4, fixed_abs, tag = 'smem constant byte address 0x4 - core index']
  #allocation1 [shape = 'u32[144,128]{1,0:T(1,128)}', space=vmem, size = 0x12000, scoped, tag = 'internal scratch']
  #allocation2 [shape = 'f32[64,128]{1,0:T(8,128)}', space=vmem, size = 0x8000, scoped, tag = 'scratch operand']
  %s0 = inlined_call_operand.hbm [shape: f32[2,64,128], index: 0, kind: input, shape index: {}]
  %s1 = inlined_call_operand.hbm [shape: bf16[2,64,128], index: 1, kind: input, shape index: {}]
  %s2 = inlined_call_operand.hbm [shape: bf16[4,3,128,32], index: 2, kind: input, shape index: {}]
  %s3 = inlined_call_operand.hbm [shape: f32[4,3,1,32], index: 3, kind: input, shape index: {}]
  %s4 = inlined_call_operand.hbm [shape: bf16[4,32,128], index: 4, kind: input, shape index: {}]
  %s5 = inlined_call_operand.hbm [shape: f32[1,128], index: 5, kind: input, shape index: {}]
  %s6 = inlined_call_operand.hbm [shape: f32[1,128], index: 6, kind: input, shape index: {}]
  %s7 = inlined_call_operand.hbm [shape: f32[1,128], index: 7, kind: input, shape index: {}]
  %s8 = inlined_call_operand.hbm [shape: f32[2,64,128], index: 8, kind: output, shape index: {}]
  %s9 = sld [smem:[#allocation0]]
  $region105: #{transformer_encoder_layer_2d.2} parent=0
    _
  %s11 = ssub.s32 1, %s9
  %s12 = scalar_select 0, %s11, %s9
  $region1: #{transformer_encoder_layer_2d.2} parent=0
    #allocation3 [shape = 'u8[65536]{0}', space=vmem, size = 0x10000, scoped, tag = 'input window, operand 0']
    #allocation4 [shape = 's32[2]{0}', space=sflag, size = 0x8, scoped, tag = 'scoped memory for transformer_encoder_layer_2d.2']
    #allocation5 [shape = 's32[2]{0}', space=sflag, size = 0x8, scoped, tag = 'scoped memory for transformer_encoder_layer_2d.2']
    #allocation6 [shape = 'u8[32768]{0}', space=vmem, size = 0x8000, scoped, tag = 'input window, operand 1']
    #allocation7 [shape = 's32[2]{0}', space=sflag, size = 0x8, scoped, tag = 'scoped memory for transformer_encoder_layer_2d.2']
    #allocation8 [shape = 'u8[196608]{0}', space=vmem, size = 0x30000, scoped, tag = 'input window, operand 2']
    #allocation9 [shape = 'u8[3072]{0}', space=vmem, size = 0xc00, scoped, tag = 'input window, operand 3']
    #allocation10 [shape = 's32[2]{0}', space=sflag, size = 0x8, scoped, tag = 'scoped memory for transformer_encoder_layer_2d.2']
    #allocation11 [shape = 'u8[16384]{0}', space=vmem, size = 0x4000, scoped, tag = 'input window, operand 4']
    #allocation12 [shape = 'u8[512]{0}', space=vmem, size = 0x400, scoped, tag = 'input window, operand 5, single buffered']
    #allocation13 [shape = 's32[1]{0}', space=sflag, size = 0x4, scoped, tag = 'scoped memory for transformer_encoder_layer_2d.2']
    #allocation14 [shape = 'u8[512]{0}', space=vmem, size = 0x400, scoped, tag = 'input window, operand 6, single buffered']
    #allocation15 [shape = 'u8[512]{0}', space=vmem, size = 0x400, scoped, tag = 'input window, operand 7, single buffered']
    #allocation16 [shape = 's32[1]{0}', space=sflag, size = 0x4, scoped, tag = 'scoped memory for transformer_encoder_layer_2d.2']
    #allocation17 [shape = 'u8[65536]{0}', space=vmem, size = 0x10000, scoped, tag = 'output window, operand 0']
    %13 = vsyncpa [#allocation4], 0
    %s14 = scalar_lea.sflag [#allocation4], 1
    %15 = vsyncpa %s14, 0
    %16 = vsyncpa [#allocation7], 0
    %s17 = scalar_lea.sflag [#allocation7], 1
    %18 = vsyncpa %s17, 0
    %19 = vsyncpa [#allocation10], 0
    %s20 = scalar_lea.sflag [#allocation10], 1
    %21 = vsyncpa %s20, 0
    %22 = vsyncpa [#allocation13], 0
    %23 = vsyncpa [#allocation16], 0
    %24 = vsyncpa [#allocation5], 0
    %s25 = scalar_lea.sflag [#allocation5], 1
    %26 = vsyncpa %s25, 0
    loop: start=0, step=1, limit=10
    $region2: #{transformer_encoder_layer_2d.2} parent=1 // loop_pre_header
      _
    $region3: #{transformer_encoder_layer_2d.2} parent=1 // loop_header
      %s28 = sphi 0, %s32
      %p29 = scmp.ge.s32.totalorder %s28, 10
      %s35 = sphi 0, %s54
      %s36 = sphi 0, %s50
      %s37 = sphi 0, %s46
      %s38 = sphi 0, %s35
      %s39 = sphi 0, %s36
      %s40 = sphi 0, %s37
      %s41 = sphi 0, %s38
      %s42 = sphi 0, %s39
      %s43 = sphi 0, %s40
      %s59 = sphi 0, %s61
      %s62 = sphi 0, %s59
      %s63 = sphi 0, %s62
      %s79 = sphi 0, %s63
      %s85 = sphi 0, %s87
      %s88 = sphi 0, %s85
      %s89 = sphi 0, %s88
      %s105 = sphi 0, %s89
      %s111 = sphi 0, %s113
      %s114 = sphi 0, %s111
      %s115 = sphi 0, %s114
      %s131 = sphi 0, %s115
      %s137 = sphi 0, %s139
      %s140 = sphi 0, %s137
      %s141 = sphi 0, %s140
      %s157 = sphi 0, %s141
      %s163 = sphi 0, %s165
      %s166 = sphi 0, %s163
      %s167 = sphi 0, %s166
      %s183 = sphi 0, %s167
      %s187 = sphi 0, %s187
      %s189 = sphi 0, %s187
      %s190 = sphi 0, %s189
      %s204 = sphi 0, %s190
      %s208 = sphi 0, %s208
      %s210 = sphi 0, %s208
      %s211 = sphi 0, %s210
      %s225 = sphi 0, %s211
      %s229 = sphi 0, %s229
      %s231 = sphi 0, %s229
      %s232 = sphi 0, %s231
      %s246 = sphi 0, %s232
      %s254 = sphi 0, %s256
      %s257 = sphi 0, %s254
      %s258 = sphi 0, %s257
      %s274 = sphi 0, %s258
    $region4: #{transformer_encoder_layer_2d.2} parent=1 // loop_header_branch
      %31 = sbr.rel (%p29) target = $region8
    $region5: #{transformer_encoder_layer_2d.2} parent=1 // loop_body
      %s33 = ssub.s32 %s28, 1
      %s34 = ssub.s32 %s28, 2
      %s44 = sadd.s32 1, %s37
      %p45 = scmp.ge.s32.totalorder %s44, 4
      %s46 = scalar_select %p45, 0, %s44
      %s47 = sadd.s32 1, %s36
      %s48 = scalar_select %p45, %s47, %s36
      %p49 = scmp.ge.s32.totalorder %s48, 1
      %s50 = scalar_select %p49, 0, %s48
      %s51 = sadd.s32 1, %s35
      %s52 = scalar_select %p49, %s51, %s35
      %p53 = scmp.ge.s32.totalorder %s52, 2
      %s54 = scalar_select %p53, 0, %s52
      %s55 = ssub.s32 %s35, %s54
      %s56 = ssub.s32 %s36, %s50
      %s57 = sor.u32 %s55, %s56
      %p58 = scmp.eq.s32.totalorder %s57, 0
      %s60 = sadd.s32 %s59, 1
      %s61 = scalar_select %p58, %s59, %s60
      %p64 = pneg %p58
      %p65 = scmp.eq.s32.totalorder %s28, 7
      %p66 = por %p64, %p65
      %p67 = scmp.ne.s32.totalorder %s59, %s62
      %p68 = scmp.eq.s32.totalorder %s28, 0
      %p69 = por %p67, %p68
      %p70 = scmp.ne.s32.totalorder %s59, %s62
      %p71 = scmp.eq.s32.totalorder %s33, 7
      %p72 = por %p70, %p71
      %p73 = scmp.ne.s32.totalorder %s62, %s63
      %p74 = scmp.eq.s32.totalorder %s33, 0
      %p75 = por %p73, %p74
      %p76 = scmp.ne.s32.totalorder %s62, %s63
      %p77 = scmp.eq.s32.totalorder %s34, 7
      %p78 = por %p76, %p77
      %p80 = scmp.ne.s32.totalorder %s63, %s79
      %p81 = scmp.eq.s32.totalorder %s34, 0
      %p82 = por %p80, %p81
      %s83 = ssub.s32 %s35, %s54
      %p84 = scmp.eq.s32.totalorder %s83, 0
      %s86 = sadd.s32 %s85, 1
      %s87 = scalar_select %p84, %s85, %s86
      %p90 = pneg %p84
      %p91 = scmp.eq.s32.totalorder %s28, 7
      %p92 = por %p90, %p91
      %p93 = scmp.ne.s32.totalorder %s85, %s88
      %p94 = scmp.eq.s32.totalorder %s28, 0
      %p95 = por %p93, %p94
      %p96 = scmp.ne.s32.totalorder %s85, %s88
      %p97 = scmp.eq.s32.totalorder %s33, 7
      %p98 = por %p96, %p97
      %p99 = scmp.ne.s32.totalorder %s88, %s89
      %p100 = scmp.eq.s32.totalorder %s33, 0
      %p101 = por %p99, %p100
      %p102 = scmp.ne.s32.totalorder %s88, %s89
      %p103 = scmp.eq.s32.totalorder %s34, 7
      %p104 = por %p102, %p103
      %p106 = scmp.ne.s32.totalorder %s89, %s105
      %p107 = scmp.eq.s32.totalorder %s34, 0
      %p108 = por %p106, %p107
      %s109 = ssub.s32 %s37, %s46
      %p110 = scmp.eq.s32.totalorder %s109, 0
      %s112 = sadd.s32 %s111, 1
      %s113 = scalar_select %p110, %s111, %s112
      %p116 = pneg %p110
      %p117 = scmp.eq.s32.totalorder %s28, 7
      %p118 = por %p116, %p117
      %p119 = scmp.ne.s32.totalorder %s111, %s114
      %p120 = scmp.eq.s32.totalorder %s28, 0
      %p121 = por %p119, %p120
      %p122 = scmp.ne.s32.totalorder %s111, %s114
      %p123 = scmp.eq.s32.totalorder %s33, 7
      %p124 = por %p122, %p123
      %p125 = scmp.ne.s32.totalorder %s114, %s115
      %p126 = scmp.eq.s32.totalorder %s33, 0
      %p127 = por %p125, %p126
      %p128 = scmp.ne.s32.totalorder %s114, %s115
      %p129 = scmp.eq.s32.totalorder %s34, 7
      %p130 = por %p128, %p129
      %p132 = scmp.ne.s32.totalorder %s115, %s131
      %p133 = scmp.eq.s32.totalorder %s34, 0
      %p134 = por %p132, %p133
      %s135 = ssub.s32 %s37, %s46
      %p136 = scmp.eq.s32.totalorder %s135, 0
      %s138 = sadd.s32 %s137, 1
      %s139 = scalar_select %p136, %s137, %s138
      %p142 = pneg %p136
      %p143 = scmp.eq.s32.totalorder %s28, 7
      %p144 = por %p142, %p143
      %p145 = scmp.ne.s32.totalorder %s137, %s140
      %p146 = scmp.eq.s32.totalorder %s28, 0
      %p147 = por %p145, %p146
      %p148 = scmp.ne.s32.totalorder %s137, %s140
      %p149 = scmp.eq.s32.totalorder %s33, 7
      %p150 = por %p148, %p149
      %p151 = scmp.ne.s32.totalorder %s140, %s141
      %p152 = scmp.eq.s32.totalorder %s33, 0
      %p153 = por %p151, %p152
      %p154 = scmp.ne.s32.totalorder %s140, %s141
      %p155 = scmp.eq.s32.totalorder %s34, 7
      %p156 = por %p154, %p155
      %p158 = scmp.ne.s32.totalorder %s141, %s157
      %p159 = scmp.eq.s32.totalorder %s34, 0
      %p160 = por %p158, %p159
      %s161 = ssub.s32 %s37, %s46
      %p162 = scmp.eq.s32.totalorder %s161, 0
      %s164 = sadd.s32 %s163, 1
      %s165 = scalar_select %p162, %s163, %s164
      %p168 = pneg %p162
      %p169 = scmp.eq.s32.totalorder %s28, 7
      %p170 = por %p168, %p169
      %p171 = scmp.ne.s32.totalorder %s163, %s166
      %p172 = scmp.eq.s32.totalorder %s28, 0
      %p173 = por %p171, %p172
      %p174 = scmp.ne.s32.totalorder %s163, %s166
      %p175 = scmp.eq.s32.totalorder %s33, 7
      %p176 = por %p174, %p175
      %p177 = scmp.ne.s32.totalorder %s166, %s167
      %p178 = scmp.eq.s32.totalorder %s33, 0
      %p179 = por %p177, %p178
      %p180 = scmp.ne.s32.totalorder %s166, %s167
      %p181 = scmp.eq.s32.totalorder %s34, 7
      %p182 = por %p180, %p181
      %p184 = scmp.ne.s32.totalorder %s167, %s183
      %p185 = scmp.eq.s32.totalorder %s34, 0
      %p186 = por %p184, %p185
      %s188 = sadd.s32 %s187, 1
      %p191 = scmp.eq.s32.totalorder %s28, 7
      %p192 = scmp.ne.s32.totalorder %s187, %s189
      %p193 = scmp.eq.s32.totalorder %s28, 0
      %p194 = por %p192, %p193
      %p195 = scmp.ne.s32.totalorder %s187, %s189
      %p196 = scmp.eq.s32.totalorder %s33, 7
      %p197 = por %p195, %p196
      %p198 = scmp.ne.s32.totalorder %s189, %s190
      %p199 = scmp.eq.s32.totalorder %s33, 0
      %p200 = por %p198, %p199
      %p201 = scmp.ne.s32.totalorder %s189, %s190
      %p202 = scmp.eq.s32.totalorder %s34, 7
      %p203 = por %p201, %p202
      %p205 = scmp.ne.s32.totalorder %s190, %s204
      %p206 = scmp.eq.s32.totalorder %s34, 0
      %p207 = por %p205, %p206
      %s209 = sadd.s32 %s208, 1
      %p212 = scmp.eq.s32.totalorder %s28, 7
      %p213 = scmp.ne.s32.totalorder %s208, %s210
      %p214 = scmp.eq.s32.totalorder %s28, 0
      %p215 = por %p213, %p214
      %p216 = scmp.ne.s32.totalorder %s208, %s210
      %p217 = scmp.eq.s32.totalorder %s33, 7
      %p218 = por %p216, %p217
      %p219 = scmp.ne.s32.totalorder %s210, %s211
      %p220 = scmp.eq.s32.totalorder %s33, 0
      %p221 = por %p219, %p220
      %p222 = scmp.ne.s32.totalorder %s210, %s211
      %p223 = scmp.eq.s32.totalorder %s34, 7
      %p224 = por %p222, %p223
      %p226 = scmp.ne.s32.totalorder %s211, %s225
      %p227 = scmp.eq.s32.totalorder %s34, 0
      %p228 = por %p226, %p227
      %s230 = sadd.s32 %s229, 1
      %p233 = scmp.eq.s32.totalorder %s28, 7
      %p234 = scmp.ne.s32.totalorder %s229, %s231
      %p235 = scmp.eq.s32.totalorder %s28, 0
      %p236 = por %p234, %p235
      %p237 = scmp.ne.s32.totalorder %s229, %s231
      %p238 = scmp.eq.s32.totalorder %s33, 7
      %p239 = por %p237, %p238
      %p240 = scmp.ne.s32.totalorder %s231, %s232
      %p241 = scmp.eq.s32.totalorder %s33, 0
      %p242 = por %p240, %p241
      %p243 = scmp.ne.s32.totalorder %s231, %s232
      %p244 = scmp.eq.s32.totalorder %s34, 7
      %p245 = por %p243, %p244
      %p247 = scmp.ne.s32.totalorder %s232, %s246
      %p248 = scmp.eq.s32.totalorder %s34, 0
      %p249 = por %p247, %p248
      %s250 = ssub.s32 %s35, %s54
      %s251 = ssub.s32 %s36, %s50
      %s252 = sor.u32 %s250, %s251
      %p253 = scmp.eq.s32.totalorder %s252, 0
      %s255 = sadd.s32 %s254, 1
      %s256 = scalar_select %p253, %s254, %s255
      %p259 = pneg %p253
      %p260 = scmp.eq.s32.totalorder %s28, 7
      %p261 = por %p259, %p260
      %p262 = scmp.ne.s32.totalorder %s254, %s257
      %p263 = scmp.eq.s32.totalorder %s28, 0
      %p264 = por %p262, %p263
      %p265 = scmp.ne.s32.totalorder %s254, %s257
      %p266 = scmp.eq.s32.totalorder %s33, 7
      %p267 = por %p265, %p266
      %p268 = scmp.ne.s32.totalorder %s257, %s258
      %p269 = scmp.eq.s32.totalorder %s33, 0
      %p270 = por %p268, %p269
      %p271 = scmp.ne.s32.totalorder %s257, %s258
      %p272 = scmp.eq.s32.totalorder %s34, 7
      %p273 = por %p271, %p272
      %p275 = scmp.ne.s32.totalorder %s258, %s274
      %p276 = scmp.eq.s32.totalorder %s34, 0
      %p277 = por %p275, %p276
      %p278 = scmp.le.s32.totalorder 1, %s28
      %p279 = scmp.lt.s32.totalorder %s28, 9
      %p280 = pnand %p278, %p279
      %p281 = pneg %p280
      // Predicated region
      $region9: #{transformer_encoder_layer_2d.2} parent=5 // pred_check
        _
      $region10: #{transformer_encoder_layer_2d.2} parent=5 // pred_check_branch
        %283 = sbr.rel (%p280) target = $region12
      $region11: #{transformer_encoder_layer_2d.2} parent=5 // pred_region
        %s284 = ssub.s32 %s28, 1
        // Predicated region
        $region13: #{transformer_encoder_layer_2d.2} parent=11 // pred_check
          %p285 = pneg %p200
        $region14: #{transformer_encoder_layer_2d.2} parent=11 // pred_check_branch
          %287 = sbr.rel (%p285) target = $region16
        $region15: #{transformer_encoder_layer_2d.2} parent=11 // pred_region
          %s289 = ssub.s32 16, 16
          %290 = vsyncadd [#allocation13], %s289
          %s292 = sshll.u32 [#allocation12], 4
          %s293 = int_to_ptr.vmem [resolvable:$true] %s292
          %295 = dma.hbm_to_vmem [thread:$0]  %s5, 16, %s293, [#allocation13]
        $region16: #{transformer_encoder_layer_2d.2} parent=11 // pred_fallthru
          _
        // Predicated region
        $region17: #{transformer_encoder_layer_2d.2} parent=11 // pred_check
          %p296 = pneg %p221
        $region18: #{transformer_encoder_layer_2d.2} parent=11 // pred_check_branch
          %298 = sbr.rel (%p296) target = $region20
        $region19: #{transformer_encoder_layer_2d.2} parent=11 // pred_region
          %s300 = ssub.s32 16, 16
          %301 = vsyncadd [#allocation13], %s300
          %s303 = sshll.u32 [#allocation14], 4
          %s304 = int_to_ptr.vmem [resolvable:$true] %s303
          %306 = dma.hbm_to_vmem [thread:$0]  %s6, 16, %s304, [#allocation13]
        $region20: #{transformer_encoder_layer_2d.2} parent=11 // pred_fallthru
          _
        // Predicated region
        $region21: #{transformer_encoder_layer_2d.2} parent=11 // pred_check
          %p307 = pneg %p242
        $region22: #{transformer_encoder_layer_2d.2} parent=11 // pred_check_branch
          %309 = sbr.rel (%p307) target = $region24
        $region23: #{transformer_encoder_layer_2d.2} parent=11 // pred_region
          %s311 = ssub.s32 16, 16
          %312 = vsyncadd [#allocation16], %s311
          %s314 = sshll.u32 [#allocation15], 4
          %s315 = int_to_ptr.vmem [resolvable:$true] %s314
          %317 = dma.hbm_to_vmem [thread:$0]  %s7, 16, %s315, [#allocation16]
        $region24: #{transformer_encoder_layer_2d.2} parent=11 // pred_fallthru
          _
      $region12: #{transformer_encoder_layer_2d.2} parent=5 // pred_fallthru
        _
      %p318 = scmp.lt.s32.totalorder %s28, 8
      // Predicated region
      $region25: #{transformer_encoder_layer_2d.2} parent=5 // pred_check
        %p319 = pneg %p318
      $region26: #{transformer_encoder_layer_2d.2} parent=5 // pred_check_branch
        %321 = sbr.rel (%p319) target = $region28
      $region27: #{transformer_encoder_layer_2d.2} parent=5 // pred_region
        // Predicated region
        $region29: #{transformer_encoder_layer_2d.2} parent=27 // pred_check
          %p322 = pneg %p69
        $region30: #{transformer_encoder_layer_2d.2} parent=27 // pred_check_branch
          %324 = sbr.rel (%p322) target = $region32
        $region31: #{transformer_encoder_layer_2d.2} parent=27 // pred_region
          %s325 = sand.u32 %s59, 1
          %s326 = scalar_lea.sflag [#allocation4], %s325
          %s327 = sand.u32 %s59, 1
          %s328 = smul.addr %s327, 64
          %s329 = scalar_lea.vmem [#allocation3], %s328
          %s330 = smul.u32 8, %s36
          %s332 = ssub.s32 1024, 1024
          %333 = vsyncadd %s326, %s332
          %s334 = smul.addr %s35, 8
          %s335 = sadd.s32 %s330, %s334
          %s336 = smul.addr %s335, 128
          %s337 = scalar_lea.hbm %s0, %s336
          %s338 = sshll.u32 %s329, 4
          %s339 = int_to_ptr.vmem [resolvable:$true] %s338
          %344 = dma.hbm_to_vmem [thread:$0]  %s337, 1024, %s339, %s326, 128, 128, 8
        $region32: #{transformer_encoder_layer_2d.2} parent=27 // pred_fallthru
          _
        // Predicated region
        $region33: #{transformer_encoder_layer_2d.2} parent=27 // pred_check
          %p345 = pneg %p95
        $region34: #{transformer_encoder_layer_2d.2} parent=27 // pred_check_branch
          %347 = sbr.rel (%p345) target = $region36
        $region35: #{transformer_encoder_layer_2d.2} parent=27 // pred_region
          %s348 = sand.u32 %s28, 1
          %s349 = scalar_lea.sflag [#allocation7], %s348
          %s350 = sand.u32 %s85, 1
          %s351 = smul.addr %s350, 32
          %s352 = scalar_lea.vmem [#allocation6], %s351
          %s354 = ssub.s32 512, 512
          %355 = vsyncadd %s349, %s354
          %s356 = smul.addr %s35, 8
          %s357 = smul.addr %s356, 64
          %s358 = scalar_lea.hbm %s1, %s357
          %s359 = sshll.u32 %s352, 4
          %s360 = int_to_ptr.vmem [resolvable:$true] %s359
          %365 = dma.hbm_to_vmem [thread:$0]  %s358, 512, %s360, %s349, 64, 64, 4
        $region36: #{transformer_encoder_layer_2d.2} parent=27 // pred_fallthru
          _
        // Predicated region
        $region37: #{transformer_encoder_layer_2d.2} parent=27 // pred_check
          %p366 = pneg %p121
        $region38: #{transformer_encoder_layer_2d.2} parent=27 // pred_check_branch
          %368 = sbr.rel (%p366) target = $region40
        $region39: #{transformer_encoder_layer_2d.2} parent=27 // pred_region
          %s369 = sand.u32 %s28, 1
          %s370 = scalar_lea.sflag [#allocation7], %s369
          %s371 = sand.u32 %s111, 1
          %s372 = smul.addr %s371, 192
          %s373 = scalar_lea.vmem [#allocation8], %s372
          %s375 = ssub.s32 3072, 3072
          %376 = vsyncadd %s370, %s375
          %s377 = smul.addr %s37, 48
          %s378 = smul.addr %s377, 64
          %s379 = scalar_lea.hbm %s2, %s378
          %s380 = sshll.u32 %s373, 4
          %s381 = int_to_ptr.vmem [resolvable:$true] %s380
          %386 = dma.hbm_to_vmem [thread:$0]  %s379, 3072, %s381, %s370, 64, 64, 4
        $region40: #{transformer_encoder_layer_2d.2} parent=27 // pred_fallthru
          _
        // Predicated region
        $region41: #{transformer_encoder_layer_2d.2} parent=27 // pred_check
          %p387 = pneg %p147
        $region42: #{transformer_encoder_layer_2d.2} parent=27 // pred_check_branch
          %389 = sbr.rel (%p387) target = $region44
        $region43: #{transformer_encoder_layer_2d.2} parent=27 // pred_region
          %s390 = sand.u32 %s28, 1
          %s391 = scalar_lea.sflag [#allocation10], %s390
          %s392 = sand.u32 %s137, 1
          %s393 = smul.addr %s392, 3
          %s394 = scalar_lea.vmem [#allocation9], %s393
          %s396 = ssub.s32 48, 48
          %397 = vsyncadd %s391, %s396
          %s398 = smul.addr %s37, 3
          %s399 = smul.addr %s398, 16
          %s400 = scalar_lea.hbm %s3, %s399
          %s401 = sshll.u32 %s394, 4
          %s402 = int_to_ptr.vmem [resolvable:$true] %s401
          %407 = dma.hbm_to_vmem [thread:$0]  %s400, 48, %s402, %s391, 16, 16, 1
        $region44: #{transformer_encoder_layer_2d.2} parent=27 // pred_fallthru
          _
        // Predicated region
        $region45: #{transformer_encoder_layer_2d.2} parent=27 // pred_check
          %p408 = pneg %p173
        $region46: #{transformer_encoder_layer_2d.2} parent=27 // pred_check_branch
          %410 = sbr.rel (%p408) target = $region48
        $region47: #{transformer_encoder_layer_2d.2} parent=27 // pred_region
          %s411 = sand.u32 %s28, 1
          %s412 = scalar_lea.sflag [#allocation10], %s411
          %s413 = sand.u32 %s163, 1
          %s414 = smul.addr %s413, 16
          %s415 = scalar_lea.vmem [#allocation11], %s414
          %s417 = ssub.s32 256, 256
          %418 = vsyncadd %s412, %s417
          %s419 = smul.addr %s37, 4
          %s420 = smul.addr %s419, 64
          %s421 = scalar_lea.hbm %s4, %s420
          %s422 = sshll.u32 %s415, 4
          %s423 = int_to_ptr.vmem [resolvable:$true] %s422
          %428 = dma.hbm_to_vmem [thread:$0]  %s421, 256, %s423, %s412, 64, 64, 4
        $region48: #{transformer_encoder_layer_2d.2} parent=27 // pred_fallthru
          _
      $region28: #{transformer_encoder_layer_2d.2} parent=5 // pred_fallthru
        _
      %p429 = scmp.le.s32.totalorder 1, %s28
      %p430 = scmp.lt.s32.totalorder %s28, 9
      %p431 = pnand %p429, %p430
      %p432 = pneg %p431
      // Predicated region
      $region49: #{transformer_encoder_layer_2d.2} parent=5 // pred_check
        _
      $region50: #{transformer_encoder_layer_2d.2} parent=5 // pred_check_branch
        %434 = sbr.rel (%p431) target = $region52
      $region51: #{transformer_encoder_layer_2d.2} parent=5 // pred_region
        %s435 = ssub.s32 %s28, 1
        %s436 = sand.u32 %s62, 1
        %s437 = scalar_lea.sflag [#allocation4], %s436
        %s438 = sand.u32 %s62, 1
        %s439 = smul.addr %s438, 64
        %s440 = scalar_lea.vmem [#allocation3], %s439
        // Predicated region
        $region53: #{transformer_encoder_layer_2d.2} parent=51 // pred_check
          %p441 = pneg %p75
        $region54: #{transformer_encoder_layer_2d.2} parent=51 // pred_check_branch
          %443 = sbr.rel (%p441) target = $region56
        $region55: #{transformer_encoder_layer_2d.2} parent=51 // pred_region
          %444 = dma.done %s437, 1024
        $region56: #{transformer_encoder_layer_2d.2} parent=51 // pred_fallthru
          _
        %s445 = sand.u32 %s33, 1
        %s446 = scalar_lea.sflag [#allocation7], %s445
        %s447 = sand.u32 %s88, 1
        %s448 = smul.addr %s447, 32
        %s449 = scalar_lea.vmem [#allocation6], %s448
        // Predicated region
        $region57: #{transformer_encoder_layer_2d.2} parent=51 // pred_check
          %p450 = pneg %p101
        $region58: #{transformer_encoder_layer_2d.2} parent=51 // pred_check_branch
          %452 = sbr.rel (%p450) target = $region60
        $region59: #{transformer_encoder_layer_2d.2} parent=51 // pred_region
          %453 = dma.done %s446, 512
        $region60: #{transformer_encoder_layer_2d.2} parent=51 // pred_fallthru
          _
        %s454 = sand.u32 %s33, 1
        %s455 = scalar_lea.sflag [#allocation7], %s454
        %s456 = sand.u32 %s114, 1
        %s457 = smul.addr %s456, 192
        %s458 = scalar_lea.vmem [#allocation8], %s457
        // Predicated region
        $region61: #{transformer_encoder_layer_2d.2} parent=51 // pred_check
          %p459 = pneg %p127
        $region62: #{transformer_encoder_layer_2d.2} parent=51 // pred_check_branch
          %461 = sbr.rel (%p459) target = $region64
        $region63: #{transformer_encoder_layer_2d.2} parent=51 // pred_region
          %462 = dma.done %s455, 3072
        $region64: #{transformer_encoder_layer_2d.2} parent=51 // pred_fallthru
          _
        %s463 = sand.u32 %s33, 1
        %s464 = scalar_lea.sflag [#allocation10], %s463
        %s465 = sand.u32 %s140, 1
        %s466 = smul.addr %s465, 3
        %s467 = scalar_lea.vmem [#allocation9], %s466
        // Predicated region
        $region65: #{transformer_encoder_layer_2d.2} parent=51 // pred_check
          %p468 = pneg %p153
        $region66: #{transformer_encoder_layer_2d.2} parent=51 // pred_check_branch
          %470 = sbr.rel (%p468) target = $region68
        $region67: #{transformer_encoder_layer_2d.2} parent=51 // pred_region
          %471 = dma.done %s464, 48
        $region68: #{transformer_encoder_layer_2d.2} parent=51 // pred_fallthru
          _
        %s472 = sand.u32 %s33, 1
        %s473 = scalar_lea.sflag [#allocation10], %s472
        %s474 = sand.u32 %s166, 1
        %s475 = smul.addr %s474, 16
        %s476 = scalar_lea.vmem [#allocation11], %s475
        // Predicated region
        $region69: #{transformer_encoder_layer_2d.2} parent=51 // pred_check
          %p477 = pneg %p179
        $region70: #{transformer_encoder_layer_2d.2} parent=51 // pred_check_branch
          %479 = sbr.rel (%p477) target = $region72
        $region71: #{transformer_encoder_layer_2d.2} parent=51 // pred_region
          %480 = dma.done %s473, 256
        $region72: #{transformer_encoder_layer_2d.2} parent=51 // pred_fallthru
          _
        // Predicated region
        $region73: #{transformer_encoder_layer_2d.2} parent=51 // pred_check
          %p481 = pneg %p200
        $region74: #{transformer_encoder_layer_2d.2} parent=51 // pred_check_branch
          %483 = sbr.rel (%p481) target = $region76
        $region75: #{transformer_encoder_layer_2d.2} parent=51 // pred_region
          %484 = dma.done [#allocation13], 16
        $region76: #{transformer_encoder_layer_2d.2} parent=51 // pred_fallthru
          _
        // Predicated region
        $region77: #{transformer_encoder_layer_2d.2} parent=51 // pred_check
          %p485 = pneg %p221
        $region78: #{transformer_encoder_layer_2d.2} parent=51 // pred_check_branch
          %487 = sbr.rel (%p485) target = $region80
        $region79: #{transformer_encoder_layer_2d.2} parent=51 // pred_region
          %488 = dma.done [#allocation13], 16
        $region80: #{transformer_encoder_layer_2d.2} parent=51 // pred_fallthru
          _
        // Predicated region
        $region81: #{transformer_encoder_layer_2d.2} parent=51 // pred_check
          %p489 = pneg %p242
        $region82: #{transformer_encoder_layer_2d.2} parent=51 // pred_check_branch
          %491 = sbr.rel (%p489) target = $region84
        $region83: #{transformer_encoder_layer_2d.2} parent=51 // pred_region
          %492 = dma.done [#allocation16], 16
        $region84: #{transformer_encoder_layer_2d.2} parent=51 // pred_fallthru
          _
        %s493 = sand.u32 %s62, 1
        %s494 = scalar_lea.sflag [#allocation4], %s493
        %s495 = sand.u32 %s62, 1
        %s496 = smul.addr %s495, 64
        %s497 = scalar_lea.vmem [#allocation3], %s496
        %p498 = pneg %p75
        %p499 = pneg %p72
        %s500 = sand.u32 %s33, 1
        %s501 = scalar_lea.sflag [#allocation7], %s500
        %s502 = sand.u32 %s88, 1
        %s503 = smul.addr %s502, 32
        %s504 = scalar_lea.vmem [#allocation6], %s503
        %p505 = pneg %p101
        %p506 = pneg %p98
        %s507 = sand.u32 %s33, 1
        %s508 = scalar_lea.sflag [#allocation7], %s507
        %s509 = sand.u32 %s114, 1
        %s510 = smul.addr %s509, 192
        %s511 = scalar_lea.vmem [#allocation8], %s510
        %p512 = pneg %p127
        %p513 = pneg %p124
        %s514 = sand.u32 %s33, 1
        %s515 = scalar_lea.sflag [#allocation10], %s514
        %s516 = sand.u32 %s140, 1
        %s517 = smul.addr %s516, 3
        %s518 = scalar_lea.vmem [#allocation9], %s517
        %p519 = pneg %p153
        %p520 = pneg %p150
        %s521 = sand.u32 %s33, 1
        %s522 = scalar_lea.sflag [#allocation10], %s521
        %s523 = sand.u32 %s166, 1
        %s524 = smul.addr %s523, 16
        %s525 = scalar_lea.vmem [#allocation11], %s524
        %p526 = pneg %p179
        %p527 = pneg %p176
        %p528 = pneg %p200
        %p529 = pneg %p197
        %p530 = pneg %p221
        %p531 = pneg %p218
        %p532 = pneg %p242
        %p533 = pneg %p239
        %p534 = pneg %p270
        %p535 = pneg %p267
        %s536 = sand.u32 %s257, 1
        %s537 = scalar_lea.sflag [#allocation5], %s536
        %s538 = sand.u32 %s257, 1
        %s539 = smul.addr %s538, 64
        %s540 = scalar_lea.vmem [#allocation17], %s539
        %s541 = smul.u32 8, %s39
        %s542 = smul.u32 8, %s39
        %p544 = scmp.eq.s32.totalorder %s40, 0
        // Predicated region
        $region85: #{transformer_encoder_layer_2d.2} parent=51 // pred_check
          %p545 = pneg %p544
        $region86: #{transformer_encoder_layer_2d.2} parent=51 // pred_check_branch
          %547 = sbr.rel (%p545) target = $region88
        $region87: #{transformer_encoder_layer_2d.2} parent=51 // pred_region
          %548 = vst [vmem:[#allocation2] sm:$0xff] 0.0
          %549 = vst [vmem:[#allocation2 + $0x8] sm:$0xff] 0.0
          %550 = vst [vmem:[#allocation2 + $0x10] sm:$0xff] 0.0
          %551 = vst [vmem:[#allocation2 + $0x18] sm:$0xff] 0.0
          %552 = vst [vmem:[#allocation2 + $0x20] sm:$0xff] 0.0
          %553 = vst [vmem:[#allocation2 + $0x28] sm:$0xff] 0.0
          %554 = vst [vmem:[#allocation2 + $0x30] sm:$0xff] 0.0
          %555 = vst [vmem:[#allocation2 + $0x38] sm:$0xff] 0.0
        $region88: #{transformer_encoder_layer_2d.2} parent=51 // pred_fallthru
          _
        %v556 = vld [vmem:[%s440] sm:$0xff]
        %v557 = vld [vmem:[%s440 + $0x8] sm:$0xff]
        %v558 = vld [vmem:[%s440 + $0x10] sm:$0xff]
        %v559 = vld [vmem:[%s440 + $0x18] sm:$0xff]
        %v560 = vld [vmem:[%s440 + $0x20] sm:$0xff]
        %v561 = vld [vmem:[%s440 + $0x28] sm:$0xff]
        %v562 = vld [vmem:[%s440 + $0x30] sm:$0xff]
        %v563 = vld [vmem:[%s440 + $0x38] sm:$0xff]
        %v564 = vld [vmem:[%s449] sm:$0xf]
        %v565 = vld [vmem:[%s449 + $0x4] sm:$0xf]
        %v566 = vld [vmem:[%s449 + $0x8] sm:$0xf]
        %v567 = vld [vmem:[%s449 + $0xc] sm:$0xf]
        %v568 = vld [vmem:[%s449 + $0x10] sm:$0xf]
        %v569 = vld [vmem:[%s449 + $0x14] sm:$0xf]
        %v570 = vld [vmem:[%s449 + $0x18] sm:$0xf]
        %v571 = vld [vmem:[%s449 + $0x1c] sm:$0xf]
        %v572 = vpack.c.bf16 %v557, %v556
        %v573 = vpack.c.bf16 %v559, %v558
        %v574 = vpack.c.bf16 %v561, %v560
        %v575 = vpack.c.bf16 %v563, %v562
        %v576 = vld [vmem:[%s458] sm:$0xf]
        %v577 = vld [vmem:[%s458 + $0x4] sm:$0xf]
        %v578 = vld [vmem:[%s458 + $0x8] sm:$0xf]
        %v579 = vld [vmem:[%s458 + $0xc] sm:$0xf]
        %v580 = vld [vmem:[%s458 + $0x10] sm:$0xf]
        %v581 = vld [vmem:[%s458 + $0x14] sm:$0xf]
        %v582 = vld [vmem:[%s458 + $0x18] sm:$0xf]
        %v583 = vld [vmem:[%s458 + $0x1c] sm:$0xf]
        %v584 = vld [vmem:[%s458 + $0x20] sm:$0xf]
        %v585 = vld [vmem:[%s458 + $0x24] sm:$0xf]
        %v586 = vld [vmem:[%s458 + $0x28] sm:$0xf]
        %v587 = vld [vmem:[%s458 + $0x2c] sm:$0xf]
        %v588 = vld [vmem:[%s458 + $0x30] sm:$0xf]
        %v589 = vld [vmem:[%s458 + $0x34] sm:$0xf]
        %v590 = vld [vmem:[%s458 + $0x38] sm:$0xf]
        %v591 = vld [vmem:[%s458 + $0x3c] sm:$0xf]
        %v592 = vld [vmem:[%s467] sm:$0x1]
        %v594 = vlaneseq
        %v595 = vshrl.u32 %v594, 7
        %v596 = vsub.s32 0, %v595
        %v597 = vrot.slane %v592, %v596
        %v615 = vunpack.c.l.b16 %v576
        %v616 = vunpack.c.l.b16 %v577
        %v617 = vunpack.c.l.b16 %v578
        %v618 = vunpack.c.l.b16 %v579
        %v619 = vunpack.c.l.b16 %v580
        %v620 = vunpack.c.l.b16 %v581
        %v621 = vunpack.c.l.b16 %v582
        %v622 = vunpack.c.l.b16 %v583
        %v623 = vunpack.c.l.b16 %v584
        %v624 = vunpack.c.l.b16 %v585
        %v625 = vunpack.c.l.b16 %v586
        %v626 = vunpack.c.l.b16 %v587
        %v627 = vunpack.c.l.b16 %v588
        %v628 = vunpack.c.l.b16 %v589
        %v629 = vunpack.c.l.b16 %v590
        %v630 = vunpack.c.l.b16 %v591
        %v631 = vpack.c.b16 %v616, %v615
        %v632 = vpack.c.b16 %v618, %v617
        %v633 = vpack.c.b16 %v620, %v619
        %v634 = vpack.c.b16 %v622, %v621
        %v635 = vpack.c.b16 %v624, %v623
        %v636 = vpack.c.b16 %v626, %v625
        %v637 = vpack.c.b16 %v628, %v627
        %v638 = vpack.c.b16 %v630, %v629
        %647 = vmatprep.subr.bf16.mxu0 0
        %648 = vmatpush1.bf16.msra.mxu0 %v631
        %649 = vmatprep.subr.bf16.mxu0 0
        %650 = vmatpush1.bf16.msra.mxu0 %v632
        %651 = vmatprep.subr.bf16.mxu0 0
        %652 = vmatpush1.bf16.msra.mxu0 %v633
        %653 = vmatprep.subr.bf16.mxu0 0
        %654 = vmatpush1.bf16.msra.mxu0 %v634
        %655 = vmatprep.subr.bf16.mxu0 0
        %656 = vmatpush1.bf16.msra.mxu0 %v635
        %657 = vmatprep.subr.bf16.mxu0 0
        %658 = vmatpush1.bf16.msra.mxu0 %v636
        %659 = vmatprep.subr.bf16.mxu0 0
        %660 = vmatpush1.bf16.msra.mxu0 %v637
        %661 = vmatprep.subr.bf16.mxu0 0
        %662 = vmatpush1.bf16.msra.mxu0 %v638
        %663 = vmatprep.subr.bf16.mxu0 0
        %664 = vmatpush1.bf16.msra.mxu0 0
        %665 = vmatprep.subr.bf16.mxu0 0
        %666 = vmatpush1.bf16.msra.mxu0 0
        %667 = vmatprep.subr.bf16.mxu0 0
        %668 = vmatpush1.bf16.msra.mxu0 0
        %669 = vmatprep.subr.bf16.mxu0 0
        %670 = vmatpush1.bf16.msra.mxu0 0
        %671 = vmatprep.subr.bf16.mxu0 0
        %672 = vmatpush1.bf16.msra.mxu0 0
        %673 = vmatprep.subr.bf16.mxu0 0
        %674 = vmatpush1.bf16.msra.mxu0 0
        %675 = vmatprep.subr.bf16.mxu0 0
        %676 = vmatpush1.bf16.msra.mxu0 0
        %677 = vmatprep.subr.bf16.mxu0 0
        %678 = vmatpush1.bf16.msra.mxu0 0
        %679 = vmatprep.mubr.bf16.mxu0 0
        %680 = vmatmul.mubr.bf16.gmra.mrb[0].mxu0 %v572
        %v681 = vpop.f32.mrb[0].mxu0
        %v682 = vadd.f32 %v597, %v681
        %v683 = vpop.f32.mrb[0].mxu0
        %v684 = vpop.f32.mrb[0].mxu0
        %v685 = vadd.f32 %v597, %v684
        %v686 = vpop.f32.mrb[0].mxu0
        %687 = vmatprep.mubr.bf16.mxu0 0
        %688 = vmatmul.mubr.bf16.gmra.mrb[0].mxu0 %v573
        %v689 = vpop.f32.mrb[0].mxu0
        %v690 = vadd.f32 %v597, %v689
        %v691 = vpop.f32.mrb[0].mxu0
        %v692 = vpop.f32.mrb[0].mxu0
        %v693 = vadd.f32 %v597, %v692
        %v694 = vpop.f32.mrb[0].mxu0
        %695 = vmatprep.mubr.bf16.mxu0 0
        %696 = vmatmul.mubr.bf16.gmra.mrb[0].mxu0 %v574
        %v697 = vpop.f32.mrb[0].mxu0
        %v698 = vadd.f32 %v597, %v697
        %v699 = vpop.f32.mrb[0].mxu0
        %v700 = vpop.f32.mrb[0].mxu0
        %v701 = vadd.f32 %v597, %v700
        %v702 = vpop.f32.mrb[0].mxu0
        %703 = vmatprep.mubr.bf16.mxu0 0
        %704 = vmatmul.mubr.bf16.gmra.mrb[0].mxu0 %v575
        %v705 = vpop.f32.mrb[0].mxu0
        %v706 = vadd.f32 %v597, %v705
        %v707 = vpop.f32.mrb[0].mxu0
        %v708 = vpop.f32.mrb[0].mxu0
        %v709 = vadd.f32 %v597, %v708
        %v710 = vpop.f32.mrb[0].mxu0
        %711 = vdwg.mxu0
        %s712 = scalar_lea.vmem %s458, 64 [#allocation8]
        %v713 = vld [vmem:[%s712] sm:$0xf]
        %v714 = vld [vmem:[%s712 + $0x4] sm:$0xf]
        %v715 = vld [vmem:[%s712 + $0x8] sm:$0xf]
        %v716 = vld [vmem:[%s712 + $0xc] sm:$0xf]
        %v717 = vld [vmem:[%s712 + $0x10] sm:$0xf]
        %v718 = vld [vmem:[%s712 + $0x14] sm:$0xf]
        %v719 = vld [vmem:[%s712 + $0x18] sm:$0xf]
        %v720 = vld [vmem:[%s712 + $0x1c] sm:$0xf]
        %v721 = vld [vmem:[%s712 + $0x20] sm:$0xf]
        %v722 = vld [vmem:[%s712 + $0x24] sm:$0xf]
        %v723 = vld [vmem:[%s712 + $0x28] sm:$0xf]
        %v724 = vld [vmem:[%s712 + $0x2c] sm:$0xf]
        %v725 = vld [vmem:[%s712 + $0x30] sm:$0xf]
        %v726 = vld [vmem:[%s712 + $0x34] sm:$0xf]
        %v727 = vld [vmem:[%s712 + $0x38] sm:$0xf]
        %v728 = vld [vmem:[%s712 + $0x3c] sm:$0xf]
        %s729 = scalar_lea.vmem %s467, 1 [#allocation9]
        %v730 = vld [vmem:[%s729] sm:$0x1]
        %v732 = vlaneseq
        %v733 = vshrl.u32 %v732, 7
        %v734 = vsub.s32 0, %v733
        %v735 = vrot.slane %v730, %v734
        %v745 = vunpack.c.l.b16 %v564
        %v746 = vunpack.c.l.b16 %v565
        %v747 = vunpack.c.l.b16 %v566
        %v748 = vunpack.c.l.b16 %v567
        %v749 = vunpack.c.l.b16 %v568
        %v750 = vunpack.c.l.b16 %v569
        %v751 = vunpack.c.l.b16 %v570
        %v752 = vunpack.c.l.b16 %v571
        %v753 = vpack.c.b16 %v746, %v745
        %v754 = vpack.c.b16 %v748, %v747
        %v755 = vpack.c.b16 %v750, %v749
        %v756 = vpack.c.b16 %v752, %v751
        %v777 = vunpack.c.l.b16 %v713
        %v778 = vunpack.c.l.b16 %v714
        %v779 = vunpack.c.l.b16 %v715
        %v780 = vunpack.c.l.b16 %v716
        %v781 = vunpack.c.l.b16 %v717
        %v782 = vunpack.c.l.b16 %v718
        %v783 = vunpack.c.l.b16 %v719
        %v784 = vunpack.c.l.b16 %v720
        %v785 = vunpack.c.l.b16 %v721
        %v786 = vunpack.c.l.b16 %v722
        %v787 = vunpack.c.l.b16 %v723
        %v788 = vunpack.c.l.b16 %v724
        %v789 = vunpack.c.l.b16 %v725
        %v790 = vunpack.c.l.b16 %v726
        %v791 = vunpack.c.l.b16 %v727
        %v792 = vunpack.c.l.b16 %v728
        %v793 = vpack.c.b16 %v778, %v777
        %v794 = vpack.c.b16 %v780, %v779
        %v795 = vpack.c.b16 %v782, %v781
        %v796 = vpack.c.b16 %v784, %v783
        %v797 = vpack.c.b16 %v786, %v785
        %v798 = vpack.c.b16 %v788, %v787
        %v799 = vpack.c.b16 %v790, %v789
        %v800 = vpack.c.b16 %v792, %v791
        %809 = vmatprep.subr.bf16.mxu0 0
        %810 = vmatpush1.bf16.msra.mxu0 %v793
        %811 = vmatprep.subr.bf16.mxu0 0
        %812 = vmatpush1.bf16.msra.mxu0 %v794
        %813 = vmatprep.subr.bf16.mxu0 0
        %814 = vmatpush1.bf16.msra.mxu0 %v795
        %815 = vmatprep.subr.bf16.mxu0 0
        %816 = vmatpush1.bf16.msra.mxu0 %v796
        %817 = vmatprep.subr.bf16.mxu0 0
        %818 = vmatpush1.bf16.msra.mxu0 %v797
        %819 = vmatprep.subr.bf16.mxu0 0
        %820 = vmatpush1.bf16.msra.mxu0 %v798
        %821 = vmatprep.subr.bf16.mxu0 0
        %822 = vmatpush1.bf16.msra.mxu0 %v799
        %823 = vmatprep.subr.bf16.mxu0 0
        %824 = vmatpush1.bf16.msra.mxu0 %v800
        %825 = vmatprep.subr.bf16.mxu0 0
        %826 = vmatpush1.bf16.msra.mxu0 0
        %827 = vmatprep.subr.bf16.mxu0 0
        %828 = vmatpush1.bf16.msra.mxu0 0
        %829 = vmatprep.subr.bf16.mxu0 0
        %830 = vmatpush1.bf16.msra.mxu0 0
        %831 = vmatprep.subr.bf16.mxu0 0
        %832 = vmatpush1.bf16.msra.mxu0 0
        %833 = vmatprep.subr.bf16.mxu0 0
        %834 = vmatpush1.bf16.msra.mxu0 0
        %835 = vmatprep.subr.bf16.mxu0 0
        %836 = vmatpush1.bf16.msra.mxu0 0
        %837 = vmatprep.subr.bf16.mxu0 0
        %838 = vmatpush1.bf16.msra.mxu0 0
        %839 = vmatprep.subr.bf16.mxu0 0
        %840 = vmatpush1.bf16.msra.mxu0 0
        %841 = vmatprep.mubr.bf16.mxu0 0
        %842 = vmatmul.mubr.bf16.gmra.mrb[0].mxu0 %v753
        %v843 = vpop.f32.mrb[0].mxu0
        %v844 = vadd.f32 %v735, %v843
        %v845 = vpop.f32.mrb[0].mxu0
        %v846 = vpop.f32.mrb[0].mxu0
        %v847 = vadd.f32 %v735, %v846
        %v848 = vpop.f32.mrb[0].mxu0
        %849 = vmatprep.mubr.bf16.mxu0 0
        %850 = vmatmul.mubr.bf16.gmra.mrb[0].mxu0 %v754
        %v851 = vpop.f32.mrb[0].mxu0
        %v852 = vadd.f32 %v735, %v851
        %v853 = vpop.f32.mrb[0].mxu0
        %v854 = vpop.f32.mrb[0].mxu0
        %v855 = vadd.f32 %v735, %v854
        %v856 = vpop.f32.mrb[0].mxu0
        %857 = vmatprep.mubr.bf16.mxu0 0
        %858 = vmatmul.mubr.bf16.gmra.mrb[0].mxu0 %v755
        %v859 = vpop.f32.mrb[0].mxu0
        %v860 = vadd.f32 %v735, %v859
        %v861 = vpop.f32.mrb[0].mxu0
        %v862 = vpop.f32.mrb[0].mxu0
        %v863 = vadd.f32 %v735, %v862
        %v864 = vpop.f32.mrb[0].mxu0
        %865 = vmatprep.mubr.bf16.mxu0 0
        %866 = vmatmul.mubr.bf16.gmra.mrb[0].mxu0 %v756
        %v867 = vpop.f32.mrb[0].mxu0
        %v868 = vadd.f32 %v735, %v867
        %v869 = vpop.f32.mrb[0].mxu0
        %v870 = vpop.f32.mrb[0].mxu0
        %v871 = vadd.f32 %v735, %v870
        %v872 = vpop.f32.mrb[0].mxu0
        %873 = vdwg.mxu0
        %s874 = scalar_lea.vmem %s458, 128 [#allocation8]
        %v875 = vld [vmem:[%s874] sm:$0xf]
        %v876 = vld [vmem:[%s874 + $0x4] sm:$0xf]
        %v877 = vld [vmem:[%s874 + $0x8] sm:$0xf]
        %v878 = vld [vmem:[%s874 + $0xc] sm:$0xf]
        %v879 = vld [vmem:[%s874 + $0x10] sm:$0xf]
        %v880 = vld [vmem:[%s874 + $0x14] sm:$0xf]
        %v881 = vld [vmem:[%s874 + $0x18] sm:$0xf]
        %v882 = vld [vmem:[%s874 + $0x1c] sm:$0xf]
        %v883 = vld [vmem:[%s874 + $0x20] sm:$0xf]
        %v884 = vld [vmem:[%s874 + $0x24] sm:$0xf]
        %v885 = vld [vmem:[%s874 + $0x28] sm:$0xf]
        %v886 = vld [vmem:[%s874 + $0x2c] sm:$0xf]
        %v887 = vld [vmem:[%s874 + $0x30] sm:$0xf]
        %v888 = vld [vmem:[%s874 + $0x34] sm:$0xf]
        %v889 = vld [vmem:[%s874 + $0x38] sm:$0xf]
        %v890 = vld [vmem:[%s874 + $0x3c] sm:$0xf]
        %s891 = scalar_lea.vmem %s467, 2 [#allocation9]
        %v892 = vld [vmem:[%s891] sm:$0x1]
        %v894 = vlaneseq
        %v895 = vshrl.u32 %v894, 7
        %v896 = vsub.s32 0, %v895
        %v897 = vrot.slane %v892, %v896
        %v915 = vunpack.c.l.b16 %v875
        %v916 = vunpack.c.l.b16 %v876
        %v917 = vunpack.c.l.b16 %v877
        %v918 = vunpack.c.l.b16 %v878
        %v919 = vunpack.c.l.b16 %v879
        %v920 = vunpack.c.l.b16 %v880
        %v921 = vunpack.c.l.b16 %v881
        %v922 = vunpack.c.l.b16 %v882
        %v923 = vunpack.c.l.b16 %v883
        %v924 = vunpack.c.l.b16 %v884
        %v925 = vunpack.c.l.b16 %v885
        %v926 = vunpack.c.l.b16 %v886
        %v927 = vunpack.c.l.b16 %v887
        %v928 = vunpack.c.l.b16 %v888
        %v929 = vunpack.c.l.b16 %v889
        %v930 = vunpack.c.l.b16 %v890
        %v931 = vpack.c.b16 %v916, %v915
        %v932 = vpack.c.b16 %v918, %v917
        %v933 = vpack.c.b16 %v920, %v919
        %v934 = vpack.c.b16 %v922, %v921
        %v935 = vpack.c.b16 %v924, %v923
        %v936 = vpack.c.b16 %v926, %v925
        %v937 = vpack.c.b16 %v928, %v927
        %v938 = vpack.c.b16 %v930, %v929
        %947 = vmatprep.subr.bf16.mxu0 0
        %948 = vmatpush1.bf16.msra.mxu0 %v931
        %949 = vmatprep.subr.bf16.mxu0 0
        %950 = vmatpush1.bf16.msra.mxu0 %v932
        %951 = vmatprep.subr.bf16.mxu0 0
        %952 = vmatpush1.bf16.msra.mxu0 %v933
        %953 = vmatprep.subr.bf16.mxu0 0
        %954 = vmatpush1.bf16.msra.mxu0 %v934
        %955 = vmatprep.subr.bf16.mxu0 0
        %956 = vmatpush1.bf16.msra.mxu0 %v935
        %957 = vmatprep.subr.bf16.mxu0 0
        %958 = vmatpush1.bf16.msra.mxu0 %v936
        %959 = vmatprep.subr.bf16.mxu0 0
        %960 = vmatpush1.bf16.msra.mxu0 %v937
        %961 = vmatprep.subr.bf16.mxu0 0
        %962 = vmatpush1.bf16.msra.mxu0 %v938
        %963 = vmatprep.subr.bf16.mxu0 0
        %964 = vmatpush1.bf16.msra.mxu0 0
        %965 = vmatprep.subr.bf16.mxu0 0
        %966 = vmatpush1.bf16.msra.mxu0 0
        %967 = vmatprep.subr.bf16.mxu0 0
        %968 = vmatpush1.bf16.msra.mxu0 0
        %969 = vmatprep.subr.bf16.mxu0 0
        %970 = vmatpush1.bf16.msra.mxu0 0
        %971 = vmatprep.subr.bf16.mxu0 0
        %972 = vmatpush1.bf16.msra.mxu0 0
        %973 = vmatprep.subr.bf16.mxu0 0
        %974 = vmatpush1.bf16.msra.mxu0 0
        %975 = vmatprep.subr.bf16.mxu0 0
        %976 = vmatpush1.bf16.msra.mxu0 0
        %977 = vmatprep.subr.bf16.mxu0 0
        %978 = vmatpush1.bf16.msra.mxu0 0
        %979 = vmatprep.mubr.bf16.mxu0 0
        %980 = vmatmul.mubr.bf16.gmra.mrb[0].mxu0 %v753
        %v981 = vpop.f32.mrb[0].mxu0
        %v982 = vadd.f32 %v897, %v981
        %v983 = vpop.f32.mrb[0].mxu0
        %v984 = vpop.f32.mrb[0].mxu0
        %v985 = vadd.f32 %v897, %v984
        %v986 = vpop.f32.mrb[0].mxu0
        %987 = vmatprep.mubr.bf16.mxu0 0
        %988 = vmatmul.mubr.bf16.gmra.mrb[0].mxu0 %v754
        %v989 = vpop.f32.mrb[0].mxu0
        %v990 = vadd.f32 %v897, %v989
        %v991 = vpop.f32.mrb[0].mxu0
        %v992 = vpop.f32.mrb[0].mxu0
        %v993 = vadd.f32 %v897, %v992
        %v994 = vpop.f32.mrb[0].mxu0
        %995 = vmatprep.mubr.bf16.mxu0 0
        %996 = vmatmul.mubr.bf16.gmra.mrb[0].mxu0 %v755
        %v997 = vpop.f32.mrb[0].mxu0
        %v998 = vadd.f32 %v897, %v997
        %v999 = vpop.f32.mrb[0].mxu0
        %v1000 = vpop.f32.mrb[0].mxu0
        %v1001 = vadd.f32 %v897, %v1000
        %v1002 = vpop.f32.mrb[0].mxu0
        %1003 = vmatprep.mubr.bf16.mxu0 0
        %1004 = vmatmul.mubr.bf16.gmra.mrb[0].mxu0 %v756
        %v1005 = vpop.f32.mrb[0].mxu0
        %v1006 = vadd.f32 %v897, %v1005
        %v1007 = vpop.f32.mrb[0].mxu0
        %v1008 = vpop.f32.mrb[0].mxu0
        %v1009 = vadd.f32 %v897, %v1008
        %v1010 = vpop.f32.mrb[0].mxu0
        %1011 = vdwg.mxu0
        %v1012 = vpack.c.bf16 %v685, %v682
        %v1013 = vpack.c.bf16 %v693, %v690
        %v1014 = vpack.c.bf16 %v701, %v698
        %v1015 = vpack.c.bf16 %v709, %v706
        %v1016 = vpack.c.bf16 %v847, %v844
        %v1017 = vpack.c.bf16 %v855, %v852
        %v1018 = vpack.c.bf16 %v863, %v860
        %v1019 = vpack.c.bf16 %v871, %v868
        %vm1020 = vcmask 261120
        %v1022 = vsel %vm1020, %v1012, 0
        %v1025 = vsel %vm1020, %v1013, 0
        %v1028 = vsel %vm1020, %v1014, 0
        %v1031 = vsel %vm1020, %v1015, 0
        %v1034 = vsel %vm1020, %v1016, 0
        %v1037 = vsel %vm1020, %v1017, 0
        %v1040 = vsel %vm1020, %v1018, 0
        %v1043 = vsel %vm1020, %v1019, 0
        %1045 = vmatprep.subr.bf16.mxu0 0
        %1046 = vmatpush1.bf16.xpose.msra.mxu0 %v1034
        %1047 = vmatprep.subr.bf16.mxu0 0
        %1048 = vmatpush1.bf16.xpose.msra.mxu0 %v1037
        %1049 = vmatprep.subr.bf16.mxu0 0
        %1050 = vmatpush1.bf16.xpose.msra.mxu0 %v1040
        %1051 = vmatprep.subr.bf16.mxu0 0
        %1052 = vmatpush1.bf16.xpose.msra.mxu0 %v1043
        %1053 = vmatprep.subr.bf16.mxu0 0
        %1054 = vmatpush1.bf16.xpose.msra.mxu0 0
        %1055 = vmatprep.subr.bf16.mxu0 0
        %1056 = vmatpush1.bf16.xpose.msra.mxu0 0
        %1057 = vmatprep.subr.bf16.mxu0 0
        %1058 = vmatpush1.bf16.xpose.msra.mxu0 0
        %1059 = vmatprep.subr.bf16.mxu0 0
        %1060 = vmatpush1.bf16.xpose.msra.mxu0 0
        %1061 = vmatprep.subr.bf16.mxu0 0
        %1062 = vmatpush1.bf16.xpose.msra.mxu0 0
        %1063 = vmatprep.subr.bf16.mxu0 0
        %1064 = vmatpush1.bf16.xpose.msra.mxu0 0
        %1065 = vmatprep.subr.bf16.mxu0 0
        %1066 = vmatpush1.bf16.xpose.msra.mxu0 0
        %1067 = vmatprep.subr.bf16.mxu0 0
        %1068 = vmatpush1.bf16.xpose.msra.mxu0 0
        %1069 = vmatprep.subr.bf16.mxu0 0
        %1070 = vmatpush1.bf16.xpose.msra.mxu0 0
        %1071 = vmatprep.subr.bf16.mxu0 0
        %1072 = vmatpush1.bf16.xpose.msra.mxu0 0
        %1073 = vmatprep.subr.bf16.mxu0 0
        %1074 = vmatpush1.bf16.xpose.msra.mxu0 0
        %1075 = vmatprep.subr.bf16.mxu0 0
        %1076 = vmatpush1.bf16.xpose.msra.mxu0 0
        %1077 = vmatprep.mubr.bf16.mxu0 0
        %1078 = vmatmul.mubr.bf16.gmra.mrb[0].mxu0 %v1022
        %v1079 = vpop.f32.mrb[0].mxu0
        %v1080 = vadd.f32 0.0, %v1079
        %v1081 = vpop.f32.mrb[0].mxu0
        %v1082 = vpop.f32.mrb[0].mxu0
        %v1083 = vadd.f32 0.0, %v1082
        %v1084 = vpop.f32.mrb[0].mxu0
        %1085 = vmatprep.mubr.bf16.mxu0 0
        %1086 = vmatmul.mubr.bf16.gmra.mrb[0].mxu0 %v1025
        %v1087 = vpop.f32.mrb[0].mxu0
        %v1088 = vadd.f32 0.0, %v1087
        %v1089 = vpop.f32.mrb[0].mxu0
        %v1090 = vpop.f32.mrb[0].mxu0
        %v1091 = vadd.f32 0.0, %v1090
        %v1092 = vpop.f32.mrb[0].mxu0
        %1093 = vmatprep.mubr.bf16.mxu0 0
        %1094 = vmatmul.mubr.bf16.gmra.mrb[0].mxu0 %v1028
        %v1095 = vpop.f32.mrb[0].mxu0
        %v1096 = vadd.f32 0.0, %v1095
        %v1097 = vpop.f32.mrb[0].mxu0
        %v1098 = vpop.f32.mrb[0].mxu0
        %v1099 = vadd.f32 0.0, %v1098
        %v1100 = vpop.f32.mrb[0].mxu0
        %1101 = vmatprep.mubr.bf16.mxu0 0
        %1102 = vmatmul.mubr.bf16.gmra.mrb[0].mxu0 %v1031
        %v1103 = vpop.f32.mrb[0].mxu0
        %v1104 = vadd.f32 0.0, %v1103
        %v1105 = vpop.f32.mrb[0].mxu0
        %v1106 = vpop.f32.mrb[0].mxu0
        %v1107 = vadd.f32 0.0, %v1106
        %v1108 = vpop.f32.mrb[0].mxu0
        %1109 = vdwg.mxu0
        %vm1110 = vcmask 523264
        %v1111 = vsel %vm1110, %v1080, -inf
        %1112 = vmax.xlane.f32.xlu0 %v1111
        %v1113 = vpop.xlane.xlu0 %1112
        %v1114 = vsel %vm1110, %v1083, -inf
        %1115 = vmax.xlane.f32.xlu0 %v1114
        %v1116 = vpop.xlane.xlu0 %1115
        %v1117 = vsel %vm1110, %v1088, -inf
        %1118 = vmax.xlane.f32.xlu0 %v1117
        %v1119 = vpop.xlane.xlu0 %1118
        %v1120 = vsel %vm1110, %v1091, -inf
        %1121 = vmax.xlane.f32.xlu0 %v1120
        %v1122 = vpop.xlane.xlu0 %1121
        %v1123 = vsel %vm1110, %v1096, -inf
        %1124 = vmax.xlane.f32.xlu0 %v1123
        %v1125 = vpop.xlane.xlu0 %1124
        %v1126 = vsel %vm1110, %v1099, -inf
        %1127 = vmax.xlane.f32.xlu0 %v1126
        %v1128 = vpop.xlane.xlu0 %1127
        %v1129 = vsel %vm1110, %v1104, -inf
        %1130 = vmax.xlane.f32.xlu0 %v1129
        %v1131 = vpop.xlane.xlu0 %1130
        %v1132 = vsel %vm1110, %v1107, -inf
        %1133 = vmax.xlane.f32.xlu0 %v1132
        %v1134 = vpop.xlane.xlu0 %1133
        %v1135 = vsub.f32 %v1080, %v1113
        %v1136 = vsub.f32 %v1083, %v1116
        %v1137 = vsub.f32 %v1088, %v1119
        %v1138 = vsub.f32 %v1091, %v1122
        %v1139 = vsub.f32 %v1096, %v1125
        %v1140 = vsub.f32 %v1099, %v1128
        %v1141 = vsub.f32 %v1104, %v1131
        %v1142 = vsub.f32 %v1107, %v1134
        %v1143 = vmul.f32 %v1135, 1.442695
        %v1144 = vpow.pop %v1143
        %v1145 = vmul.f32 %v1136, 1.442695
        %v1146 = vpow.pop %v1145
        %v1147 = vmul.f32 %v1137, 1.442695
        %v1148 = vpow.pop %v1147
        %v1149 = vmul.f32 %v1138, 1.442695
        %v1150 = vpow.pop %v1149
        %v1151 = vmul.f32 %v1139, 1.442695
        %v1152 = vpow.pop %v1151
        %v1153 = vmul.f32 %v1140, 1.442695
        %v1154 = vpow.pop %v1153
        %v1155 = vmul.f32 %v1141, 1.442695
        %v1156 = vpow.pop %v1155
        %v1157 = vmul.f32 %v1142, 1.442695
        %v1158 = vpow.pop %v1157
        %v1159 = vsel %vm1110, %v1144, 0.0
        %1160 = vadd.xlane.f32.xlu0 %v1159
        %v1161 = vpop.xlane.xlu0 %1160
        %v1162 = vsel %vm1110, %v1146, 0.0
        %1163 = vadd.xlane.f32.xlu0 %v1162
        %v1164 = vpop.xlane.xlu0 %1163
        %v1165 = vsel %vm1110, %v1148, 0.0
        %1166 = vadd.xlane.f32.xlu0 %v1165
        %v1167 = vpop.xlane.xlu0 %1166
        %v1168 = vsel %vm1110, %v1150, 0.0
        %1169 = vadd.xlane.f32.xlu0 %v1168
        %v1170 = vpop.xlane.xlu0 %1169
        %v1171 = vsel %vm1110, %v1152, 0.0
        %1172 = vadd.xlane.f32.xlu0 %v1171
        %v1173 = vpop.xlane.xlu0 %1172
        %v1174 = vsel %vm1110, %v1154, 0.0
        %1175 = vadd.xlane.f32.xlu0 %v1174
        %v1176 = vpop.xlane.xlu0 %1175
        %v1177 = vsel %vm1110, %v1156, 0.0
        %1178 = vadd.xlane.f32.xlu0 %v1177
        %v1179 = vpop.xlane.xlu0 %1178
        %v1180 = vsel %vm1110, %v1158, 0.0
        %1181 = vadd.xlane.f32.xlu0 %v1180
        %v1182 = vpop.xlane.xlu0 %1181
        %v1183 = vrcp.pop %v1161
        %v1184 = vrcp.pop %v1164
        %v1185 = vrcp.pop %v1167
        %v1186 = vrcp.pop %v1170
        %v1187 = vrcp.pop %v1173
        %v1188 = vrcp.pop %v1176
        %v1189 = vrcp.pop %v1179
        %v1190 = vrcp.pop %v1182
        %v1191 = vpack.c.bf16 %v1146, %v1144
        %v1192 = vpack.c.bf16 %v1150, %v1148
        %v1193 = vpack.c.bf16 %v1154, %v1152
        %v1194 = vpack.c.bf16 %v1158, %v1156
        %v1195 = vpack.c.bf16 %v985, %v982
        %v1196 = vpack.c.bf16 %v993, %v990
        %v1197 = vpack.c.bf16 %v1001, %v998
        %v1198 = vpack.c.bf16 %v1009, %v1006
        %v1200 = vsel %vm1110, %v1191, 0
        %v1203 = vsel %vm1110, %v1192, 0
        %v1206 = vsel %vm1110, %v1193, 0
        %v1209 = vsel %vm1110, %v1194, 0
        %1211 = vmatprep.subr.bf16.mxu0 0
        %1212 = vmatpush1.bf16.msra.mxu0 %v1195
        %1213 = vmatprep.subr.bf16.mxu0 0
        %1214 = vmatpush1.bf16.msra.mxu0 %v1196
        %1215 = vmatprep.subr.bf16.mxu0 0
        %1216 = vmatpush1.bf16.msra.mxu0 %v1197
        %1217 = vmatprep.subr.bf16.mxu0 0
        %1218 = vmatpush1.bf16.msra.mxu0 %v1198
        %1219 = vmatprep.subr.bf16.mxu0 0
        %1220 = vmatpush1.bf16.msra.mxu0 0
        %1221 = vmatprep.subr.bf16.mxu0 0
        %1222 = vmatpush1.bf16.msra.mxu0 0
        %1223 = vmatprep.subr.bf16.mxu0 0
        %1224 = vmatpush1.bf16.msra.mxu0 0
        %1225 = vmatprep.subr.bf16.mxu0 0
        %1226 = vmatpush1.bf16.msra.mxu0 0
        %1227 = vmatprep.subr.bf16.mxu0 0
        %1228 = vmatpush1.bf16.msra.mxu0 0
        %1229 = vmatprep.subr.bf16.mxu0 0
        %1230 = vmatpush1.bf16.msra.mxu0 0
        %1231 = vmatprep.subr.bf16.mxu0 0
        %1232 = vmatpush1.bf16.msra.mxu0 0
        %1233 = vmatprep.subr.bf16.mxu0 0
        %1234 = vmatpush1.bf16.msra.mxu0 0
        %1235 = vmatprep.subr.bf16.mxu0 0
        %1236 = vmatpush1.bf16.msra.mxu0 0
        %1237 = vmatprep.subr.bf16.mxu0 0
        %1238 = vmatpush1.bf16.msra.mxu0 0
        %1239 = vmatprep.subr.bf16.mxu0 0
        %1240 = vmatpush1.bf16.msra.mxu0 0
        %1241 = vmatprep.subr.bf16.mxu0 0
        %1242 = vmatpush1.bf16.msra.mxu0 0
        %1243 = vmatprep.mubr.bf16.mxu0 0
        %1244 = vmatmul.mubr.bf16.gmra.mrb[0].mxu0 %v1200
        %v1245 = vpop.f32.mrb[0].mxu0
        %v1246 = vadd.f32 0.0, %v1245
        %v1247 = vpop.f32.mrb[0].mxu0
        %v1248 = vpop.f32.mrb[0].mxu0
        %v1249 = vadd.f32 0.0, %v1248
        %v1250 = vpop.f32.mrb[0].mxu0
        %1251 = vmatprep.mubr.bf16.mxu0 0
        %1252 = vmatmul.mubr.bf16.gmra.mrb[0].mxu0 %v1203
        %v1253 = vpop.f32.mrb[0].mxu0
        %v1254 = vadd.f32 0.0, %v1253
        %v1255 = vpop.f32.mrb[0].mxu0
        %v1256 = vpop.f32.mrb[0].mxu0
        %v1257 = vadd.f32 0.0, %v1256
        %v1258 = vpop.f32.mrb[0].mxu0
        %1259 = vmatprep.mubr.bf16.mxu0 0
        %1260 = vmatmul.mubr.bf16.gmra.mrb[0].mxu0 %v1206
        %v1261 = vpop.f32.mrb[0].mxu0
        %v1262 = vadd.f32 0.0, %v1261
        %v1263 = vpop.f32.mrb[0].mxu0
        %v1264 = vpop.f32.mrb[0].mxu0
        %v1265 = vadd.f32 0.0, %v1264
        %v1266 = vpop.f32.mrb[0].mxu0
        %1267 = vmatprep.mubr.bf16.mxu0 0
        %1268 = vmatmul.mubr.bf16.gmra.mrb[0].mxu0 %v1209
        %v1269 = vpop.f32.mrb[0].mxu0
        %v1270 = vadd.f32 0.0, %v1269
        %v1271 = vpop.f32.mrb[0].mxu0
        %v1272 = vpop.f32.mrb[0].mxu0
        %v1273 = vadd.f32 0.0, %v1272
        %v1274 = vpop.f32.mrb[0].mxu0
        %1275 = vdwg.mxu0
        %v1276 = vmul.f32 %v1246, %v1183
        %v1277 = vmul.f32 %v1249, %v1184
        %v1278 = vmul.f32 %v1254, %v1185
        %v1279 = vmul.f32 %v1257, %v1186
        %v1280 = vmul.f32 %v1262, %v1187
        %v1281 = vmul.f32 %v1265, %v1188
        %v1282 = vmul.f32 %v1270, %v1189
        %v1283 = vmul.f32 %v1273, %v1190
        %v1284 = vld [vmem:[#allocation2] sm:$0xff]
        %v1285 = vld [vmem:[#allocation2 + $0x8] sm:$0xff]
        %v1286 = vld [vmem:[#allocation2 + $0x10] sm:$0xff]
        %v1287 = vld [vmem:[#allocation2 + $0x18] sm:$0xff]
        %v1288 = vld [vmem:[#allocation2 + $0x20] sm:$0xff]
        %v1289 = vld [vmem:[#allocation2 + $0x28] sm:$0xff]
        %v1290 = vld [vmem:[#allocation2 + $0x30] sm:$0xff]
        %v1291 = vld [vmem:[#allocation2 + $0x38] sm:$0xff]
        %v1292 = vpack.c.bf16 %v1277, %v1276
        %v1293 = vpack.c.bf16 %v1279, %v1278
        %v1294 = vpack.c.bf16 %v1281, %v1280
        %v1295 = vpack.c.bf16 %v1283, %v1282
        %v1296 = vld [vmem:[%s476] sm:$0xf]
        %v1297 = vld [vmem:[%s476 + $0x4] sm:$0xf]
        %v1298 = vld [vmem:[%s476 + $0x8] sm:$0xf]
        %v1299 = vld [vmem:[%s476 + $0xc] sm:$0xf]
        %v1304 = vunpack.c.l.b16 %v1296
        %v1305 = vunpack.c.l.b16 %v1297
        %v1306 = vunpack.c.l.b16 %v1298
        %v1307 = vunpack.c.l.b16 %v1299
        %v1308 = vpack.c.b16 %v1305, %v1304
        %v1309 = vpack.c.b16 %v1307, %v1306
        %v1313 = vsel %vm1020, %v1292, 0
        %v1316 = vsel %vm1020, %v1293, 0
        %v1319 = vsel %vm1020, %v1294, 0
        %v1322 = vsel %vm1020, %v1295, 0
        %1324 = vmatprep.subr.bf16.mxu0 0
        %1325 = vmatpush1.bf16.msra.mxu0 %v1308
        %1326 = vmatprep.subr.bf16.mxu0 0
        %1327 = vmatpush1.bf16.msra.mxu0 %v1309
        %1328 = vmatprep.subr.bf16.mxu0 0
        %1329 = vmatpush1.bf16.msra.mxu0 0
        %1330 = vmatprep.subr.bf16.mxu0 0
        %1331 = vmatpush1.bf16.msra.mxu0 0
        %1332 = vmatprep.subr.bf16.mxu0 0
        %1333 = vmatpush1.bf16.msra.mxu0 0
        %1334 = vmatprep.subr.bf16.mxu0 0
        %1335 = vmatpush1.bf16.msra.mxu0 0
        %1336 = vmatprep.subr.bf16.mxu0 0
        %1337 = vmatpush1.bf16.msra.mxu0 0
        %1338 = vmatprep.subr.bf16.mxu0 0
        %1339 = vmatpush1.bf16.msra.mxu0 0
        %1340 = vmatprep.subr.bf16.mxu0 0
        %1341 = vmatpush1.bf16.msra.mxu0 0
        %1342 = vmatprep.subr.bf16.mxu0 0
        %1343 = vmatpush1.bf16.msra.mxu0 0
        %1344 = vmatprep.subr.bf16.mxu0 0
        %1345 = vmatpush1.bf16.msra.mxu0 0
        %1346 = vmatprep.subr.bf16.mxu0 0
        %1347 = vmatpush1.bf16.msra.mxu0 0
        %1348 = vmatprep.subr.bf16.mxu0 0
        %1349 = vmatpush1.bf16.msra.mxu0 0
        %1350 = vmatprep.subr.bf16.mxu0 0
        %1351 = vmatpush1.bf16.msra.mxu0 0
        %1352 = vmatprep.subr.bf16.mxu0 0
        %1353 = vmatpush1.bf16.msra.mxu0 0
        %1354 = vmatprep.subr.bf16.mxu0 0
        %1355 = vmatpush1.bf16.msra.mxu0 0
        %1356 = vmatprep.mubr.bf16.mxu0 0
        %1357 = vmatmul.mubr.bf16.gmra.mrb[0].mxu0 %v1313
        %v1358 = vpop.f32.mrb[0].mxu0
        %v1359 = vadd.f32 0.0, %v1358
        %v1360 = vpop.f32.mrb[0].mxu0
        %v1361 = vpop.f32.mrb[0].mxu0
        %v1362 = vadd.f32 0.0, %v1361
        %v1363 = vpop.f32.mrb[0].mxu0
        %1364 = vmatprep.mubr.bf16.mxu0 0
        %1365 = vmatmul.mubr.bf16.gmra.mrb[0].mxu0 %v1316
        %v1366 = vpop.f32.mrb[0].mxu0
        %v1367 = vadd.f32 0.0, %v1366
        %v1368 = vpop.f32.mrb[0].mxu0
        %v1369 = vpop.f32.mrb[0].mxu0
        %v1370 = vadd.f32 0.0, %v1369
        %v1371 = vpop.f32.mrb[0].mxu0
        %1372 = vmatprep.mubr.bf16.mxu0 0
        %1373 = vmatmul.mubr.bf16.gmra.mrb[0].mxu0 %v1319
        %v1374 = vpop.f32.mrb[0].mxu0
        %v1375 = vadd.f32 0.0, %v1374
        %v1376 = vpop.f32.mrb[0].mxu0
        %v1377 = vpop.f32.mrb[0].mxu0
        %v1378 = vadd.f32 0.0, %v1377
        %v1379 = vpop.f32.mrb[0].mxu0
        %1380 = vmatprep.mubr.bf16.mxu0 0
        %1381 = vmatmul.mubr.bf16.gmra.mrb[0].mxu0 %v1322
        %v1382 = vpop.f32.mrb[0].mxu0
        %v1383 = vadd.f32 0.0, %v1382
        %v1384 = vpop.f32.mrb[0].mxu0
        %v1385 = vpop.f32.mrb[0].mxu0
        %v1386 = vadd.f32 0.0, %v1385
        %v1387 = vpop.f32.mrb[0].mxu0
        %1388 = vdwg.mxu0
        %v1389 = vadd.f32 %v1284, %v1359
        %v1390 = vadd.f32 %v1285, %v1362
        %v1391 = vadd.f32 %v1286, %v1367
        %v1392 = vadd.f32 %v1287, %v1370
        %v1393 = vadd.f32 %v1288, %v1375
        %v1394 = vadd.f32 %v1289, %v1378
        %v1395 = vadd.f32 %v1290, %v1383
        %v1396 = vadd.f32 %v1291, %v1386
        %1397 = vst [vmem:[#allocation2] sm:$0xff] %v1389
        %1398 = vst [vmem:[#allocation2 + $0x8] sm:$0xff] %v1390
        %1399 = vst [vmem:[#allocation2 + $0x10] sm:$0xff] %v1391
        %1400 = vst [vmem:[#allocation2 + $0x18] sm:$0xff] %v1392
        %1401 = vst [vmem:[#allocation2 + $0x20] sm:$0xff] %v1393
        %1402 = vst [vmem:[#allocation2 + $0x28] sm:$0xff] %v1394
        %1403 = vst [vmem:[#allocation2 + $0x30] sm:$0xff] %v1395
        %1404 = vst [vmem:[#allocation2 + $0x38] sm:$0xff] %v1396
        %p1405 = scmp.eq.s32.totalorder %s40, 3
        // Predicated region
        $region89: #{transformer_encoder_layer_2d.2} parent=51 // pred_check
          %p1406 = pneg %p1405
        $region90: #{transformer_encoder_layer_2d.2} parent=51 // pred_check_branch
          %1408 = sbr.rel (%p1406) target = $region92
        $region91: #{transformer_encoder_layer_2d.2} parent=51 // pred_region
          %v1409 = vld [vmem:[#allocation2] sm:$0xff]
          %v1410 = vld [vmem:[#allocation2 + $0x8] sm:$0xff]
          %v1411 = vld [vmem:[#allocation2 + $0x10] sm:$0xff]
          %v1412 = vld [vmem:[#allocation2 + $0x18] sm:$0xff]
          %v1413 = vld [vmem:[#allocation2 + $0x20] sm:$0xff]
          %v1414 = vld [vmem:[#allocation2 + $0x28] sm:$0xff]
          %v1415 = vld [vmem:[#allocation2 + $0x30] sm:$0xff]
          %v1416 = vld [vmem:[#allocation2 + $0x38] sm:$0xff]
          %v1417 = vld [vmem:[#allocation12] sm:$0x1]
          %v1419 = vlaneseq
          %v1420 = vshrl.u32 %v1419, 7
          %v1421 = vsub.s32 0, %v1420
          %v1422 = vrot.slane %v1417, %v1421
          %v1424 = vadd.f32 %v1409, %v1422
          %v1425 = vadd.f32 %v1410, %v1422
          %v1426 = vadd.f32 %v1411, %v1422
          %v1427 = vadd.f32 %v1412, %v1422
          %v1428 = vadd.f32 %v1413, %v1422
          %v1429 = vadd.f32 %v1414, %v1422
          %v1430 = vadd.f32 %v1415, %v1422
          %v1431 = vadd.f32 %v1416, %v1422
          %v1432 = vld [vmem:[#allocation14] sm:$0x1]
          %v1433 = vld [vmem:[#allocation15] sm:$0x1]
          %v1434 = vadd.f32 %v556, %v1424
          %v1435 = vadd.f32 %v557, %v1425
          %v1436 = vadd.f32 %v558, %v1426
          %v1437 = vadd.f32 %v559, %v1427
          %v1438 = vadd.f32 %v560, %v1428
          %v1439 = vadd.f32 %v561, %v1429
          %v1440 = vadd.f32 %v562, %v1430
          %v1441 = vadd.f32 %v563, %v1431
          %1442 = vadd.xlane.f32.xlu0 %v1434
          %v1443 = vpop.xlane.xlu0 %1442
          %1444 = vadd.xlane.f32.xlu0 %v1435
          %v1445 = vpop.xlane.xlu0 %1444
          %1446 = vadd.xlane.f32.xlu0 %v1436
          %v1447 = vpop.xlane.xlu0 %1446
          %1448 = vadd.xlane.f32.xlu0 %v1437
          %v1449 = vpop.xlane.xlu0 %1448
          %1450 = vadd.xlane.f32.xlu0 %v1438
          %v1451 = vpop.xlane.xlu0 %1450
          %1452 = vadd.xlane.f32.xlu0 %v1439
          %v1453 = vpop.xlane.xlu0 %1452
          %1454 = vadd.xlane.f32.xlu0 %v1440
          %v1455 = vpop.xlane.xlu0 %1454
          %1456 = vadd.xlane.f32.xlu0 %v1441
          %v1457 = vpop.xlane.xlu0 %1456
          %v1458 = vrcp.pop 128.0
          %v1459 = vmul.f32 %v1443, %v1458
          %v1460 = vmul.f32 %v1445, %v1458
          %v1461 = vmul.f32 %v1447, %v1458
          %v1462 = vmul.f32 %v1449, %v1458
          %v1463 = vmul.f32 %v1451, %v1458
          %v1464 = vmul.f32 %v1453, %v1458
          %v1465 = vmul.f32 %v1455, %v1458
          %v1466 = vmul.f32 %v1457, %v1458
          %v1467 = vsub.f32 %v1434, %v1459
          %v1468 = vsub.f32 %v1435, %v1460
          %v1469 = vsub.f32 %v1436, %v1461
          %v1470 = vsub.f32 %v1437, %v1462
          %v1471 = vsub.f32 %v1438, %v1463
          %v1472 = vsub.f32 %v1439, %v1464
          %v1473 = vsub.f32 %v1440, %v1465
          %v1474 = vsub.f32 %v1441, %v1466
          %v1475 = vmul.f32 %v1467, %v1467
          %v1476 = vmul.f32 %v1468, %v1468
          %v1477 = vmul.f32 %v1469, %v1469
          %v1478 = vmul.f32 %v1470, %v1470
          %v1479 = vmul.f32 %v1471, %v1471
          %v1480 = vmul.f32 %v1472, %v1472
          %v1481 = vmul.f32 %v1473, %v1473
          %v1482 = vmul.f32 %v1474, %v1474
          %1483 = vadd.xlane.f32.xlu0 %v1475
          %v1484 = vpop.xlane.xlu0 %1483
          %1485 = vadd.xlane.f32.xlu0 %v1476
          %v1486 = vpop.xlane.xlu0 %1485
          %1487 = vadd.xlane.f32.xlu0 %v1477
          %v1488 = vpop.xlane.xlu0 %1487
          %1489 = vadd.xlane.f32.xlu0 %v1478
          %v1490 = vpop.xlane.xlu0 %1489
          %1491 = vadd.xlane.f32.xlu0 %v1479
          %v1492 = vpop.xlane.xlu0 %1491
          %1493 = vadd.xlane.f32.xlu0 %v1480
          %v1494 = vpop.xlane.xlu0 %1493
          %1495 = vadd.xlane.f32.xlu0 %v1481
          %v1496 = vpop.xlane.xlu0 %1495
          %1497 = vadd.xlane.f32.xlu0 %v1482
          %v1498 = vpop.xlane.xlu0 %1497
          %v1499 = vmul.f32 %v1484, %v1458
          %v1500 = vmul.f32 %v1486, %v1458
          %v1501 = vmul.f32 %v1488, %v1458
          %v1502 = vmul.f32 %v1490, %v1458
          %v1503 = vmul.f32 %v1492, %v1458
          %v1504 = vmul.f32 %v1494, %v1458
          %v1505 = vmul.f32 %v1496, %v1458
          %v1506 = vmul.f32 %v1498, %v1458
          %v1507 = vadd.f32 %v1499, 1e-05
          %v1508 = vadd.f32 %v1500, 1e-05
          %v1509 = vadd.f32 %v1501, 1e-05
          %v1510 = vadd.f32 %v1502, 1e-05
          %v1511 = vadd.f32 %v1503, 1e-05
          %v1512 = vadd.f32 %v1504, 1e-05
          %v1513 = vadd.f32 %v1505, 1e-05
          %v1514 = vadd.f32 %v1506, 1e-05
          %v1515 = vrsqrt.pop %v1507
          %v1516 = vrsqrt.pop %v1508
          %v1517 = vrsqrt.pop %v1509
          %v1518 = vrsqrt.pop %v1510
          %v1519 = vrsqrt.pop %v1511
          %v1520 = vrsqrt.pop %v1512
          %v1521 = vrsqrt.pop %v1513
          %v1522 = vrsqrt.pop %v1514
          %v1523 = vmul.f32 %v1467, %v1515
          %v1524 = vmul.f32 %v1468, %v1516
          %v1525 = vmul.f32 %v1469, %v1517
          %v1526 = vmul.f32 %v1470, %v1518
          %v1527 = vmul.f32 %v1471, %v1519
          %v1528 = vmul.f32 %v1472, %v1520
          %v1529 = vmul.f32 %v1473, %v1521
          %v1530 = vmul.f32 %v1474, %v1522
          %v1532 = vlaneseq
          %v1533 = vshrl.u32 %v1532, 7
          %v1534 = vsub.s32 0, %v1533
          %v1535 = vrot.slane %v1432, %v1534
          %v1537 = vmul.f32 %v1523, %v1535
          %v1538 = vmul.f32 %v1524, %v1535
          %v1539 = vmul.f32 %v1525, %v1535
          %v1540 = vmul.f32 %v1526, %v1535
          %v1541 = vmul.f32 %v1527, %v1535
          %v1542 = vmul.f32 %v1528, %v1535
          %v1543 = vmul.f32 %v1529, %v1535
          %v1544 = vmul.f32 %v1530, %v1535
          %v1546 = vlaneseq
          %v1547 = vshrl.u32 %v1546, 7
          %v1548 = vsub.s32 0, %v1547
          %v1549 = vrot.slane %v1433, %v1548
          %v1551 = vadd.f32 %v1537, %v1549
          %v1552 = vadd.f32 %v1538, %v1549
          %v1553 = vadd.f32 %v1539, %v1549
          %v1554 = vadd.f32 %v1540, %v1549
          %v1555 = vadd.f32 %v1541, %v1549
          %v1556 = vadd.f32 %v1542, %v1549
          %v1557 = vadd.f32 %v1543, %v1549
          %v1558 = vadd.f32 %v1544, %v1549
          %1559 = vst [vmem:[%s540] sm:$0xff] %v1551
          %1560 = vst [vmem:[%s540 + $0x8] sm:$0xff] %v1552
          %1561 = vst [vmem:[%s540 + $0x10] sm:$0xff] %v1553
          %1562 = vst [vmem:[%s540 + $0x18] sm:$0xff] %v1554
          %1563 = vst [vmem:[%s540 + $0x20] sm:$0xff] %v1555
          %1564 = vst [vmem:[%s540 + $0x28] sm:$0xff] %v1556
          %1565 = vst [vmem:[%s540 + $0x30] sm:$0xff] %v1557
          %1566 = vst [vmem:[%s540 + $0x38] sm:$0xff] %v1558
        $region92: #{transformer_encoder_layer_2d.2} parent=51 // pred_fallthru
          _
        %s1567 = sand.u32 %s257, 1
        %s1568 = scalar_lea.sflag [#allocation5], %s1567
        %s1569 = sand.u32 %s257, 1
        %s1570 = smul.addr %s1569, 64
        %s1571 = scalar_lea.vmem [#allocation17], %s1570
        // Predicated region
        $region93: #{transformer_encoder_layer_2d.2} parent=51 // pred_check
          %p1572 = pneg %p267
        $region94: #{transformer_encoder_layer_2d.2} parent=51 // pred_check_branch
          %1574 = sbr.rel (%p1572) target = $region96
        $region95: #{transformer_encoder_layer_2d.2} parent=51 // pred_region
          %s1575 = smul.u32 8, %s39
          %s1577 = ssub.s32 1024, 1024
          %1578 = vsyncadd %s1568, %s1577
          %s1579 = smul.addr %s38, 8
          %s1580 = sadd.s32 %s1575, %s1579
          %s1581 = smul.addr %s1580, 128
          %s1582 = scalar_lea.hbm %s8, %s1581
          %s1583 = sshll.u32 %s1571, 4
          %s1584 = int_to_ptr.vmem [resolvable:$true] %s1583
          %1589 = dma.vmem_to_hbm [thread:$0]  %s1584, 1024, %s1582, %s1568, 128, 128, 8
        $region96: #{transformer_encoder_layer_2d.2} parent=51 // pred_fallthru
          _
      $region52: #{transformer_encoder_layer_2d.2} parent=5 // pred_fallthru
        _
      %p1590 = scmp.le.s32.totalorder 2, %s28
      // Predicated region
      $region97: #{transformer_encoder_layer_2d.2} parent=5 // pred_check
        %p1591 = pneg %p1590
      $region98: #{transformer_encoder_layer_2d.2} parent=5 // pred_check_branch
        %1593 = sbr.rel (%p1591) target = $region100
      $region99: #{transformer_encoder_layer_2d.2} parent=5 // pred_region
        %s1594 = ssub.s32 %s28, 2
        // Predicated region
        $region101: #{transformer_encoder_layer_2d.2} parent=99 // pred_check
          %p1595 = pneg %p273
        $region102: #{transformer_encoder_layer_2d.2} parent=99 // pred_check_branch
          %1597 = sbr.rel (%p1595) target = $region104
        $region103: #{transformer_encoder_layer_2d.2} parent=99 // pred_region
          %s1598 = sand.u32 %s258, 1
          %s1599 = scalar_lea.sflag [#allocation5], %s1598
          %s1600 = sand.u32 %s258, 1
          %s1601 = smul.addr %s1600, 64
          %s1602 = scalar_lea.vmem [#allocation17], %s1601
          %1603 = dma.done %s1599, 1024
        $region104: #{transformer_encoder_layer_2d.2} parent=99 // pred_fallthru
          _
      $region100: #{transformer_encoder_layer_2d.2} parent=5 // pred_fallthru
        _
    $region6: #{transformer_encoder_layer_2d.2} parent=1 // loop_footer
      %s32 = sadd.s32 1, %s28
    $region7: #{transformer_encoder_layer_2d.2} parent=1 // loop_footer_branch
      %27 = sbr.rel target = $region3
    $region8: #{transformer_encoder_layer_2d.2} parent=1 // loop_exit
      _
    %1604 = vsyncpa [#allocation4], 1
    %s1605 = scalar_lea.sflag [#allocation4], 1
    %1606 = vsyncpa %s1605, 1
    %1607 = vsyncpa [#allocation7], 1
    %s1608 = scalar_lea.sflag [#allocation7], 1
    %1609 = vsyncpa %s1608, 1
    %1610 = vsyncpa [#allocation10], 1
    %s1611 = scalar_lea.sflag [#allocation10], 1
    %1612 = vsyncpa %s1611, 1
    %1613 = vsyncpa [#allocation13], 1
    %1614 = vsyncpa [#allocation16], 1
    %1615 = vsyncpa [#allocation5], 1
    %s1616 = scalar_lea.sflag [#allocation5], 1
    %1617 = vsyncpa %s1616, 1

// kernel: transformer_encoder_layer_2d.3
$region0: #{transformer_encoder_layer_2d.3}
  #allocation0 [shape = 'u32[]', space=smem, size = 0x4, offset = 0x4, fixed_abs, tag = 'smem constant byte address 0x4 - core index']
  #allocation1 [shape = 'u32[144,128]{1,0:T(1,128)}', space=vmem, size = 0x12000, scoped, tag = 'internal scratch']
  #allocation2 [shape = 'f32[80,256]{1,0:T(8,128)}', space=vmem, size = 0x14000, scoped, tag = 'scratch operand']
  %s0 = inlined_call_operand.hbm [shape: f32[2,64,128], index: 0, kind: input, shape index: {}]
  %s1 = inlined_call_operand.hbm [shape: bf16[128,256], index: 1, kind: input, shape index: {}]
  %s2 = inlined_call_operand.hbm [shape: f32[1,256], index: 2, kind: input, shape index: {}]
  %s3 = inlined_call_operand.hbm [shape: f32[9,256], index: 3, kind: input, shape index: {}]
  %s4 = inlined_call_operand.hbm [shape: f32[1,256], index: 4, kind: input, shape index: {}]
  %s5 = inlined_call_operand.hbm [shape: bf16[256,128], index: 5, kind: input, shape index: {}]
  %s6 = inlined_call_operand.hbm [shape: f32[1,128], index: 6, kind: input, shape index: {}]
  %s7 = inlined_call_operand.hbm [shape: f32[1,128], index: 7, kind: input, shape index: {}]
  %s8 = inlined_call_operand.hbm [shape: f32[1,128], index: 8, kind: input, shape index: {}]
  %s9 = inlined_call_operand.hbm [shape: f32[2,64,128], index: 9, kind: output, shape index: {}]
  %s10 = sld [smem:[#allocation0]]
  $region105: #{transformer_encoder_layer_2d.3} parent=0
    _
  %s12 = ssub.s32 1, %s10
  %s13 = scalar_select 0, %s12, %s10
  $region1: #{transformer_encoder_layer_2d.3} parent=0
    #allocation3 [shape = 'u8[65536]{0}', space=vmem, size = 0x10000, scoped, tag = 'input window, operand 0']
    #allocation4 [shape = 's32[2]{0}', space=sflag, size = 0x8, scoped, tag = 'scoped memory for transformer_encoder_layer_2d.3']
    #allocation5 [shape = 's32[2]{0}', space=sflag, size = 0x8, scoped, tag = 'scoped memory for transformer_encoder_layer_2d.3']
    #allocation6 [shape = 'u8[65536]{0}', space=vmem, size = 0x10000, scoped, tag = 'input window, operand 1, single buffered']
    #allocation7 [shape = 's32[1]{0}', space=sflag, size = 0x4, scoped, tag = 'scoped memory for transformer_encoder_layer_2d.3']
    #allocation8 [shape = 'u8[1024]{0}', space=vmem, size = 0x400, scoped, tag = 'input window, operand 2, single buffered']
    #allocation9 [shape = 'u8[16384]{0}', space=vmem, size = 0x4000, scoped, tag = 'input window, operand 3, single buffered']
    #allocation10 [shape = 's32[1]{0}', space=sflag, size = 0x4, scoped, tag = 'scoped memory for transformer_encoder_layer_2d.3']
    #allocation11 [shape = 'u8[1024]{0}', space=vmem, size = 0x400, scoped, tag = 'input window, operand 4, single buffered']
    #allocation12 [shape = 'u8[65536]{0}', space=vmem, size = 0x10000, scoped, tag = 'input window, operand 5, single buffered']
    #allocation13 [shape = 's32[1]{0}', space=sflag, size = 0x4, scoped, tag = 'scoped memory for transformer_encoder_layer_2d.3']
    #allocation14 [shape = 'u8[512]{0}', space=vmem, size = 0x400, scoped, tag = 'input window, operand 6, single buffered']
    #allocation15 [shape = 'u8[512]{0}', space=vmem, size = 0x400, scoped, tag = 'input window, operand 7, single buffered']
    #allocation16 [shape = 's32[1]{0}', space=sflag, size = 0x4, scoped, tag = 'scoped memory for transformer_encoder_layer_2d.3']
    #allocation17 [shape = 'u8[512]{0}', space=vmem, size = 0x400, scoped, tag = 'input window, operand 8, single buffered']
    #allocation18 [shape = 'u8[65536]{0}', space=vmem, size = 0x10000, scoped, tag = 'output window, operand 0']
    %14 = vsyncpa [#allocation4], 0
    %s15 = scalar_lea.sflag [#allocation4], 1
    %16 = vsyncpa %s15, 0
    %17 = vsyncpa [#allocation7], 0
    %18 = vsyncpa [#allocation10], 0
    %19 = vsyncpa [#allocation13], 0
    %20 = vsyncpa [#allocation16], 0
    %21 = vsyncpa [#allocation5], 0
    %s22 = scalar_lea.sflag [#allocation5], 1
    %23 = vsyncpa %s22, 0
    loop: start=0, step=1, limit=4
    $region2: #{transformer_encoder_layer_2d.3} parent=1 // loop_pre_header
      _
    $region3: #{transformer_encoder_layer_2d.3} parent=1 // loop_header
      %s25 = sphi 0, %s29
      %p26 = scmp.ge.s32.totalorder %s25, 4
      %s35 = sphi 0, %s37
      %s38 = sphi 0, %s35
      %s39 = sphi 0, %s38
      %s55 = sphi 0, %s39
      %s59 = sphi 0, %s59
      %s61 = sphi 0, %s59
      %s62 = sphi 0, %s61
      %s76 = sphi 0, %s62
      %s80 = sphi 0, %s80
      %s82 = sphi 0, %s80
      %s83 = sphi 0, %s82
      %s97 = sphi 0, %s83
      %s101 = sphi 0, %s101
      %s103 = sphi 0, %s101
      %s104 = sphi 0, %s103
      %s118 = sphi 0, %s104
      %s122 = sphi 0, %s122
      %s124 = sphi 0, %s122
      %s125 = sphi 0, %s124
      %s139 = sphi 0, %s125
      %s143 = sphi 0, %s143
      %s145 = sphi 0, %s143
      %s146 = sphi 0, %s145
      %s160 = sphi 0, %s146
      %s164 = sphi 0, %s164
      %s166 = sphi 0, %s164
      %s167 = sphi 0, %s166
      %s181 = sphi 0, %s167
      %s185 = sphi 0, %s185
      %s187 = sphi 0, %s185
      %s188 = sphi 0, %s187
      %s202 = sphi 0, %s188
      %s206 = sphi 0, %s206
      %s208 = sphi 0, %s206
      %s209 = sphi 0, %s208
      %s223 = sphi 0, %s209
      %s229 = sphi 0, %s231
      %s232 = sphi 0, %s229
      %s233 = sphi 0, %s232
      %s249 = sphi 0, %s233
    $region4: #{transformer_encoder_layer_2d.3} parent=1 // loop_header_branch
      %28 = sbr.rel (%p26) target = $region8
    $region5: #{transformer_encoder_layer_2d.3} parent=1 // loop_body
      %s30 = ssub.s32 %s25, 1
      %s31 = ssub.s32 %s25, 2
      %s32 = sadd.s32 %s25, 1
      %s33 = ssub.s32 %s25, %s32
      %p34 = scmp.eq.s32.totalorder %s33, 0
      %s36 = sadd.s32 %s35, 1
      %s37 = scalar_select %p34, %s35, %s36
      %p40 = pneg %p34
      %p41 = scmp.eq.s32.totalorder %s25, 1
      %p42 = por %p40, %p41
      %p43 = scmp.ne.s32.totalorder %s35, %s38
      %p44 = scmp.eq.s32.totalorder %s25, 0
      %p45 = por %p43, %p44
      %p46 = scmp.ne.s32.totalorder %s35, %s38
      %p47 = scmp.eq.s32.totalorder %s30, 1
      %p48 = por %p46, %p47
      %p49 = scmp.ne.s32.totalorder %s38, %s39
      %p50 = scmp.eq.s32.totalorder %s30, 0
      %p51 = por %p49, %p50
      %p52 = scmp.ne.s32.totalorder %s38, %s39
      %p53 = scmp.eq.s32.totalorder %s31, 1
      %p54 = por %p52, %p53
      %p56 = scmp.ne.s32.totalorder %s39, %s55
      %p57 = scmp.eq.s32.totalorder %s31, 0
      %p58 = por %p56, %p57
      %s60 = sadd.s32 %s59, 1
      %p63 = scmp.eq.s32.totalorder %s25, 1
      %p64 = scmp.ne.s32.totalorder %s59, %s61
      %p65 = scmp.eq.s32.totalorder %s25, 0
      %p66 = por %p64, %p65
      %p67 = scmp.ne.s32.totalorder %s59, %s61
      %p68 = scmp.eq.s32.totalorder %s30, 1
      %p69 = por %p67, %p68
      %p70 = scmp.ne.s32.totalorder %s61, %s62
      %p71 = scmp.eq.s32.totalorder %s30, 0
      %p72 = por %p70, %p71
      %p73 = scmp.ne.s32.totalorder %s61, %s62
      %p74 = scmp.eq.s32.totalorder %s31, 1
      %p75 = por %p73, %p74
      %p77 = scmp.ne.s32.totalorder %s62, %s76
      %p78 = scmp.eq.s32.totalorder %s31, 0
      %p79 = por %p77, %p78
      %s81 = sadd.s32 %s80, 1
      %p84 = scmp.eq.s32.totalorder %s25, 1
      %p85 = scmp.ne.s32.totalorder %s80, %s82
      %p86 = scmp.eq.s32.totalorder %s25, 0
      %p87 = por %p85, %p86
      %p88 = scmp.ne.s32.totalorder %s80, %s82
      %p89 = scmp.eq.s32.totalorder %s30, 1
      %p90 = por %p88, %p89
      %p91 = scmp.ne.s32.totalorder %s82, %s83
      %p92 = scmp.eq.s32.totalorder %s30, 0
      %p93 = por %p91, %p92
      %p94 = scmp.ne.s32.totalorder %s82, %s83
      %p95 = scmp.eq.s32.totalorder %s31, 1
      %p96 = por %p94, %p95
      %p98 = scmp.ne.s32.totalorder %s83, %s97
      %p99 = scmp.eq.s32.totalorder %s31, 0
      %p100 = por %p98, %p99
      %s102 = sadd.s32 %s101, 1
      %p105 = scmp.eq.s32.totalorder %s25, 1
      %p106 = scmp.ne.s32.totalorder %s101, %s103
      %p107 = scmp.eq.s32.totalorder %s25, 0
      %p108 = por %p106, %p107
      %p109 = scmp.ne.s32.totalorder %s101, %s103
      %p110 = scmp.eq.s32.totalorder %s30, 1
      %p111 = por %p109, %p110
      %p112 = scmp.ne.s32.totalorder %s103, %s104
      %p113 = scmp.eq.s32.totalorder %s30, 0
      %p114 = por %p112, %p113
      %p115 = scmp.ne.s32.totalorder %s103, %s104
      %p116 = scmp.eq.s32.totalorder %s31, 1
      %p117 = por %p115, %p116
      %p119 = scmp.ne.s32.totalorder %s104, %s118
      %p120 = scmp.eq.s32.totalorder %s31, 0
      %p121 = por %p119, %p120
      %s123 = sadd.s32 %s122, 1
      %p126 = scmp.eq.s32.totalorder %s25, 1
      %p127 = scmp.ne.s32.totalorder %s122, %s124
      %p128 = scmp.eq.s32.totalorder %s25, 0
      %p129 = por %p127, %p128
      %p130 = scmp.ne.s32.totalorder %s122, %s124
      %p131 = scmp.eq.s32.totalorder %s30, 1
      %p132 = por %p130, %p131
      %p133 = scmp.ne.s32.totalorder %s124, %s125
      %p134 = scmp.eq.s32.totalorder %s30, 0
      %p135 = por %p133, %p134
      %p136 = scmp.ne.s32.totalorder %s124, %s125
      %p137 = scmp.eq.s32.totalorder %s31, 1
      %p138 = por %p136, %p137
      %p140 = scmp.ne.s32.totalorder %s125, %s139
      %p141 = scmp.eq.s32.totalorder %s31, 0
      %p142 = por %p140, %p141
      %s144 = sadd.s32 %s143, 1
      %p147 = scmp.eq.s32.totalorder %s25, 1
      %p148 = scmp.ne.s32.totalorder %s143, %s145
      %p149 = scmp.eq.s32.totalorder %s25, 0
      %p150 = por %p148, %p149
      %p151 = scmp.ne.s32.totalorder %s143, %s145
      %p152 = scmp.eq.s32.totalorder %s30, 1
      %p153 = por %p151, %p152
      %p154 = scmp.ne.s32.totalorder %s145, %s146
      %p155 = scmp.eq.s32.totalorder %s30, 0
      %p156 = por %p154, %p155
      %p157 = scmp.ne.s32.totalorder %s145, %s146
      %p158 = scmp.eq.s32.totalorder %s31, 1
      %p159 = por %p157, %p158
      %p161 = scmp.ne.s32.totalorder %s146, %s160
      %p162 = scmp.eq.s32.totalorder %s31, 0
      %p163 = por %p161, %p162
      %s165 = sadd.s32 %s164, 1
      %p168 = scmp.eq.s32.totalorder %s25, 1
      %p169 = scmp.ne.s32.totalorder %s164, %s166
      %p170 = scmp.eq.s32.totalorder %s25, 0
      %p171 = por %p169, %p170
      %p172 = scmp.ne.s32.totalorder %s164, %s166
      %p173 = scmp.eq.s32.totalorder %s30, 1
      %p174 = por %p172, %p173
      %p175 = scmp.ne.s32.totalorder %s166, %s167
      %p176 = scmp.eq.s32.totalorder %s30, 0
      %p177 = por %p175, %p176
      %p178 = scmp.ne.s32.totalorder %s166, %s167
      %p179 = scmp.eq.s32.totalorder %s31, 1
      %p180 = por %p178, %p179
      %p182 = scmp.ne.s32.totalorder %s167, %s181
      %p183 = scmp.eq.s32.totalorder %s31, 0
      %p184 = por %p182, %p183
      %s186 = sadd.s32 %s185, 1
      %p189 = scmp.eq.s32.totalorder %s25, 1
      %p190 = scmp.ne.s32.totalorder %s185, %s187
      %p191 = scmp.eq.s32.totalorder %s25, 0
      %p192 = por %p190, %p191
      %p193 = scmp.ne.s32.totalorder %s185, %s187
      %p194 = scmp.eq.s32.totalorder %s30, 1
      %p195 = por %p193, %p194
      %p196 = scmp.ne.s32.totalorder %s187, %s188
      %p197 = scmp.eq.s32.totalorder %s30, 0
      %p198 = por %p196, %p197
      %p199 = scmp.ne.s32.totalorder %s187, %s188
      %p200 = scmp.eq.s32.totalorder %s31, 1
      %p201 = por %p199, %p200
      %p203 = scmp.ne.s32.totalorder %s188, %s202
      %p204 = scmp.eq.s32.totalorder %s31, 0
      %p205 = por %p203, %p204
      %s207 = sadd.s32 %s206, 1
      %p210 = scmp.eq.s32.totalorder %s25, 1
      %p211 = scmp.ne.s32.totalorder %s206, %s208
      %p212 = scmp.eq.s32.totalorder %s25, 0
      %p213 = por %p211, %p212
      %p214 = scmp.ne.s32.totalorder %s206, %s208
      %p215 = scmp.eq.s32.totalorder %s30, 1
      %p216 = por %p214, %p215
      %p217 = scmp.ne.s32.totalorder %s208, %s209
      %p218 = scmp.eq.s32.totalorder %s30, 0
      %p219 = por %p217, %p218
      %p220 = scmp.ne.s32.totalorder %s208, %s209
      %p221 = scmp.eq.s32.totalorder %s31, 1
      %p222 = por %p220, %p221
      %p224 = scmp.ne.s32.totalorder %s209, %s223
      %p225 = scmp.eq.s32.totalorder %s31, 0
      %p226 = por %p224, %p225
      %s227 = ssub.s32 %s25, %s32
      %p228 = scmp.eq.s32.totalorder %s227, 0
      %s230 = sadd.s32 %s229, 1
      %s231 = scalar_select %p228, %s229, %s230
      %p234 = pneg %p228
      %p235 = scmp.eq.s32.totalorder %s25, 1
      %p236 = por %p234, %p235
      %p237 = scmp.ne.s32.totalorder %s229, %s232
      %p238 = scmp.eq.s32.totalorder %s25, 0
      %p239 = por %p237, %p238
      %p240 = scmp.ne.s32.totalorder %s229, %s232
      %p241 = scmp.eq.s32.totalorder %s30, 1
      %p242 = por %p240, %p241
      %p243 = scmp.ne.s32.totalorder %s232, %s233
      %p244 = scmp.eq.s32.totalorder %s30, 0
      %p245 = por %p243, %p244
      %p246 = scmp.ne.s32.totalorder %s232, %s233
      %p247 = scmp.eq.s32.totalorder %s31, 1
      %p248 = por %p246, %p247
      %p250 = scmp.ne.s32.totalorder %s233, %s249
      %p251 = scmp.eq.s32.totalorder %s31, 0
      %p252 = por %p250, %p251
      %p253 = scmp.le.s32.totalorder 1, %s25
      %p254 = scmp.lt.s32.totalorder %s25, 3
      %p255 = pnand %p253, %p254
      %p256 = pneg %p255
      // Predicated region
      $region9: #{transformer_encoder_layer_2d.3} parent=5 // pred_check
        _
      $region10: #{transformer_encoder_layer_2d.3} parent=5 // pred_check_branch
        %258 = sbr.rel (%p255) target = $region12
      $region11: #{transformer_encoder_layer_2d.3} parent=5 // pred_region
        %s259 = ssub.s32 %s25, 1
        // Predicated region
        $region13: #{transformer_encoder_layer_2d.3} parent=11 // pred_check
          %p260 = pneg %p72
        $region14: #{transformer_encoder_layer_2d.3} parent=11 // pred_check_branch
          %262 = sbr.rel (%p260) target = $region16
        $region15: #{transformer_encoder_layer_2d.3} parent=11 // pred_region
          %s264 = ssub.s32 2048, 2048
          %265 = vsyncadd [#allocation7], %s264
          %s266 = sshll.u32 [#allocation6], 4
          %s267 = int_to_ptr.vmem [resolvable:$true] %s266
          %272 = dma.hbm_to_vmem [thread:$0]  %s1, 2048, %s267, [#allocation7], 128, 128, 8
        $region16: #{transformer_encoder_layer_2d.3} parent=11 // pred_fallthru
          _
        // Predicated region
        $region17: #{transformer_encoder_layer_2d.3} parent=11 // pred_check
          %p273 = pneg %p93
        $region18: #{transformer_encoder_layer_2d.3} parent=11 // pred_check_branch
          %275 = sbr.rel (%p273) target = $region20
        $region19: #{transformer_encoder_layer_2d.3} parent=11 // pred_region
          %s277 = ssub.s32 32, 32
          %278 = vsyncadd [#allocation7], %s277
          %s280 = sshll.u32 [#allocation8], 4
          %s281 = int_to_ptr.vmem [resolvable:$true] %s280
          %283 = dma.hbm_to_vmem [thread:$0]  %s2, 32, %s281, [#allocation7]
        $region20: #{transformer_encoder_layer_2d.3} parent=11 // pred_fallthru
          _
        // Predicated region
        $region21: #{transformer_encoder_layer_2d.3} parent=11 // pred_check
          %p284 = pneg %p114
        $region22: #{transformer_encoder_layer_2d.3} parent=11 // pred_check_branch
          %286 = sbr.rel (%p284) target = $region24
        $region23: #{transformer_encoder_layer_2d.3} parent=11 // pred_region
          %s288 = ssub.s32 512, 512
          %289 = vsyncadd [#allocation10], %s288
          %s290 = sshll.u32 [#allocation9], 4
          %s291 = int_to_ptr.vmem [resolvable:$true] %s290
          %296 = dma.hbm_to_vmem [thread:$0]  %s3, 512, %s291, [#allocation10], 256, 256, 16
        $region24: #{transformer_encoder_layer_2d.3} parent=11 // pred_fallthru
          _
        // Predicated region
        $region25: #{transformer_encoder_layer_2d.3} parent=11 // pred_check
          %p297 = pneg %p135
        $region26: #{transformer_encoder_layer_2d.3} parent=11 // pred_check_branch
          %299 = sbr.rel (%p297) target = $region28
        $region27: #{transformer_encoder_layer_2d.3} parent=11 // pred_region
          %s301 = ssub.s32 32, 32
          %302 = vsyncadd [#allocation10], %s301
          %s304 = sshll.u32 [#allocation11], 4
          %s305 = int_to_ptr.vmem [resolvable:$true] %s304
          %307 = dma.hbm_to_vmem [thread:$0]  %s4, 32, %s305, [#allocation10]
        $region28: #{transformer_encoder_layer_2d.3} parent=11 // pred_fallthru
          _
        // Predicated region
        $region29: #{transformer_encoder_layer_2d.3} parent=11 // pred_check
          %p308 = pneg %p156
        $region30: #{transformer_encoder_layer_2d.3} parent=11 // pred_check_branch
          %310 = sbr.rel (%p308) target = $region32
        $region31: #{transformer_encoder_layer_2d.3} parent=11 // pred_region
          %s312 = ssub.s32 2048, 2048
          %313 = vsyncadd [#allocation13], %s312
          %s314 = sshll.u32 [#allocation12], 4
          %s315 = int_to_ptr.vmem [resolvable:$true] %s314
          %320 = dma.hbm_to_vmem [thread:$0]  %s5, 2048, %s315, [#allocation13], 64, 64, 4
        $region32: #{transformer_encoder_layer_2d.3} parent=11 // pred_fallthru
          _
        // Predicated region
        $region33: #{transformer_encoder_layer_2d.3} parent=11 // pred_check
          %p321 = pneg %p177
        $region34: #{transformer_encoder_layer_2d.3} parent=11 // pred_check_branch
          %323 = sbr.rel (%p321) target = $region36
        $region35: #{transformer_encoder_layer_2d.3} parent=11 // pred_region
          %s325 = ssub.s32 16, 16
          %326 = vsyncadd [#allocation13], %s325
          %s328 = sshll.u32 [#allocation14], 4
          %s329 = int_to_ptr.vmem [resolvable:$true] %s328
          %331 = dma.hbm_to_vmem [thread:$0]  %s6, 16, %s329, [#allocation13]
        $region36: #{transformer_encoder_layer_2d.3} parent=11 // pred_fallthru
          _
        // Predicated region
        $region37: #{transformer_encoder_layer_2d.3} parent=11 // pred_check
          %p332 = pneg %p198
        $region38: #{transformer_encoder_layer_2d.3} parent=11 // pred_check_branch
          %334 = sbr.rel (%p332) target = $region40
        $region39: #{transformer_encoder_layer_2d.3} parent=11 // pred_region
          %s336 = ssub.s32 16, 16
          %337 = vsyncadd [#allocation16], %s336
          %s339 = sshll.u32 [#allocation15], 4
          %s340 = int_to_ptr.vmem [resolvable:$true] %s339
          %342 = dma.hbm_to_vmem [thread:$0]  %s7, 16, %s340, [#allocation16]
        $region40: #{transformer_encoder_layer_2d.3} parent=11 // pred_fallthru
          _
        // Predicated region
        $region41: #{transformer_encoder_layer_2d.3} parent=11 // pred_check
          %p343 = pneg %p219
        $region42: #{transformer_encoder_layer_2d.3} parent=11 // pred_check_branch
          %345 = sbr.rel (%p343) target = $region44
        $region43: #{transformer_encoder_layer_2d.3} parent=11 // pred_region
          %s347 = ssub.s32 16, 16
          %348 = vsyncadd [#allocation16], %s347
          %s350 = sshll.u32 [#allocation17], 4
          %s351 = int_to_ptr.vmem [resolvable:$true] %s350
          %353 = dma.hbm_to_vmem [thread:$0]  %s8, 16, %s351, [#allocation16]
        $region44: #{transformer_encoder_layer_2d.3} parent=11 // pred_fallthru
          _
      $region12: #{transformer_encoder_layer_2d.3} parent=5 // pred_fallthru
        _
      %p354 = scmp.lt.s32.totalorder %s25, 2
      // Predicated region
      $region45: #{transformer_encoder_layer_2d.3} parent=5 // pred_check
        %p355 = pneg %p354
      $region46: #{transformer_encoder_layer_2d.3} parent=5 // pred_check_branch
        %357 = sbr.rel (%p355) target = $region48
      $region47: #{transformer_encoder_layer_2d.3} parent=5 // pred_region
        // Predicated region
        $region49: #{transformer_encoder_layer_2d.3} parent=47 // pred_check
          %p358 = pneg %p45
        $region50: #{transformer_encoder_layer_2d.3} parent=47 // pred_check_branch
          %360 = sbr.rel (%p358) target = $region52
        $region51: #{transformer_encoder_layer_2d.3} parent=47 // pred_region
          %s361 = sand.u32 %s35, 1
          %s362 = scalar_lea.sflag [#allocation4], %s361
          %s363 = sand.u32 %s35, 1
          %s364 = smul.addr %s363, 64
          %s365 = scalar_lea.vmem [#allocation3], %s364
          %s367 = ssub.s32 1024, 1024
          %368 = vsyncadd %s362, %s367
          %s369 = smul.addr %s25, 8
          %s370 = smul.addr %s369, 128
          %s371 = scalar_lea.hbm %s0, %s370
          %s372 = sshll.u32 %s365, 4
          %s373 = int_to_ptr.vmem [resolvable:$true] %s372
          %378 = dma.hbm_to_vmem [thread:$0]  %s371, 1024, %s373, %s362, 128, 128, 8
        $region52: #{transformer_encoder_layer_2d.3} parent=47 // pred_fallthru
          _
      $region48: #{transformer_encoder_layer_2d.3} parent=5 // pred_fallthru
        _
      %p379 = scmp.le.s32.totalorder 1, %s25
      %p380 = scmp.lt.s32.totalorder %s25, 3
      %p381 = pnand %p379, %p380
      %p382 = pneg %p381
      // Predicated region
      $region53: #{transformer_encoder_layer_2d.3} parent=5 // pred_check
        _
      $region54: #{transformer_encoder_layer_2d.3} parent=5 // pred_check_branch
        %384 = sbr.rel (%p381) target = $region56
      $region55: #{transformer_encoder_layer_2d.3} parent=5 // pred_region
        %s385 = ssub.s32 %s25, 1
        %s386 = sand.u32 %s38, 1
        %s387 = scalar_lea.sflag [#allocation4], %s386
        %s388 = sand.u32 %s38, 1
        %s389 = smul.addr %s388, 64
        %s390 = scalar_lea.vmem [#allocation3], %s389
        // Predicated region
        $region57: #{transformer_encoder_layer_2d.3} parent=55 // pred_check
          %p391 = pneg %p51
        $region58: #{transformer_encoder_layer_2d.3} parent=55 // pred_check_branch
          %393 = sbr.rel (%p391) target = $region60
        $region59: #{transformer_encoder_layer_2d.3} parent=55 // pred_region
          %394 = dma.done %s387, 1024
        $region60: #{transformer_encoder_layer_2d.3} parent=55 // pred_fallthru
          _
        // Predicated region
        $region61: #{transformer_encoder_layer_2d.3} parent=55 // pred_check
          %p395 = pneg %p72
        $region62: #{transformer_encoder_layer_2d.3} parent=55 // pred_check_branch
          %397 = sbr.rel (%p395) target = $region64
        $region63: #{transformer_encoder_layer_2d.3} parent=55 // pred_region
          %398 = dma.done [#allocation7], 2048
        $region64: #{transformer_encoder_layer_2d.3} parent=55 // pred_fallthru
          _
        // Predicated region
        $region65: #{transformer_encoder_layer_2d.3} parent=55 // pred_check
          %p399 = pneg %p93
        $region66: #{transformer_encoder_layer_2d.3} parent=55 // pred_check_branch
          %401 = sbr.rel (%p399) target = $region68
        $region67: #{transformer_encoder_layer_2d.3} parent=55 // pred_region
          %402 = dma.done [#allocation7], 32
        $region68: #{transformer_encoder_layer_2d.3} parent=55 // pred_fallthru
          _
        // Predicated region
        $region69: #{transformer_encoder_layer_2d.3} parent=55 // pred_check
          %p403 = pneg %p114
        $region70: #{transformer_encoder_layer_2d.3} parent=55 // pred_check_branch
          %405 = sbr.rel (%p403) target = $region72
        $region71: #{transformer_encoder_layer_2d.3} parent=55 // pred_region
          %406 = dma.done [#allocation10], 512
        $region72: #{transformer_encoder_layer_2d.3} parent=55 // pred_fallthru
          _
        // Predicated region
        $region73: #{transformer_encoder_layer_2d.3} parent=55 // pred_check
          %p407 = pneg %p135
        $region74: #{transformer_encoder_layer_2d.3} parent=55 // pred_check_branch
          %409 = sbr.rel (%p407) target = $region76
        $region75: #{transformer_encoder_layer_2d.3} parent=55 // pred_region
          %410 = dma.done [#allocation10], 32
        $region76: #{transformer_encoder_layer_2d.3} parent=55 // pred_fallthru
          _
        // Predicated region
        $region77: #{transformer_encoder_layer_2d.3} parent=55 // pred_check
          %p411 = pneg %p156
        $region78: #{transformer_encoder_layer_2d.3} parent=55 // pred_check_branch
          %413 = sbr.rel (%p411) target = $region80
        $region79: #{transformer_encoder_layer_2d.3} parent=55 // pred_region
          %414 = dma.done [#allocation13], 2048
        $region80: #{transformer_encoder_layer_2d.3} parent=55 // pred_fallthru
          _
        // Predicated region
        $region81: #{transformer_encoder_layer_2d.3} parent=55 // pred_check
          %p415 = pneg %p177
        $region82: #{transformer_encoder_layer_2d.3} parent=55 // pred_check_branch
          %417 = sbr.rel (%p415) target = $region84
        $region83: #{transformer_encoder_layer_2d.3} parent=55 // pred_region
          %418 = dma.done [#allocation13], 16
        $region84: #{transformer_encoder_layer_2d.3} parent=55 // pred_fallthru
          _
        // Predicated region
        $region85: #{transformer_encoder_layer_2d.3} parent=55 // pred_check
          %p419 = pneg %p198
        $region86: #{transformer_encoder_layer_2d.3} parent=55 // pred_check_branch
          %421 = sbr.rel (%p419) target = $region88
        $region87: #{transformer_encoder_layer_2d.3} parent=55 // pred_region
          %422 = dma.done [#allocation16], 16
        $region88: #{transformer_encoder_layer_2d.3} parent=55 // pred_fallthru
          _
        // Predicated region
        $region89: #{transformer_encoder_layer_2d.3} parent=55 // pred_check
          %p423 = pneg %p219
        $region90: #{transformer_encoder_layer_2d.3} parent=55 // pred_check_branch
          %425 = sbr.rel (%p423) target = $region92
        $region91: #{transformer_encoder_layer_2d.3} parent=55 // pred_region
          %426 = dma.done [#allocation16], 16
        $region92: #{transformer_encoder_layer_2d.3} parent=55 // pred_fallthru
          _
        %s427 = sand.u32 %s38, 1
        %s428 = scalar_lea.sflag [#allocation4], %s427
        %s429 = sand.u32 %s38, 1
        %s430 = smul.addr %s429, 64
        %s431 = scalar_lea.vmem [#allocation3], %s430
        %p432 = pneg %p51
        %p433 = pneg %p48
        %p434 = pneg %p72
        %p435 = pneg %p69
        %p436 = pneg %p93
        %p437 = pneg %p90
        %p438 = pneg %p114
        %p439 = pneg %p111
        %p440 = pneg %p135
        %p441 = pneg %p132
        %p442 = pneg %p156
        %p443 = pneg %p153
        %p444 = pneg %p177
        %p445 = pneg %p174
        %p446 = pneg %p198
        %p447 = pneg %p195
        %p448 = pneg %p219
        %p449 = pneg %p216
        %p450 = pneg %p245
        %p451 = pneg %p242
        %s452 = sand.u32 %s232, 1
        %s453 = scalar_lea.sflag [#allocation5], %s452
        %s454 = sand.u32 %s232, 1
        %s455 = smul.addr %s454, 64
        %s456 = scalar_lea.vmem [#allocation18], %s455
        %v458 = vld [vmem:[%s390] sm:$0xff]
        %v459 = vld [vmem:[%s390 + $0x8] sm:$0xff]
        %v460 = vld [vmem:[%s390 + $0x10] sm:$0xff]
        %v461 = vld [vmem:[%s390 + $0x18] sm:$0xff]
        %v462 = vld [vmem:[%s390 + $0x20] sm:$0xff]
        %v463 = vld [vmem:[%s390 + $0x28] sm:$0xff]
        %v464 = vld [vmem:[%s390 + $0x30] sm:$0xff]
        %v465 = vld [vmem:[%s390 + $0x38] sm:$0xff]
        %v466 = vpack.c.bf16 %v459, %v458
        %v467 = vpack.c.bf16 %v461, %v460
        %v468 = vpack.c.bf16 %v463, %v462
        %v469 = vpack.c.bf16 %v465, %v464
        %v470 = vld [vmem:[#allocation6] sm:$0xff]
        %v471 = vld [vmem:[#allocation6 + $0x8] sm:$0xff]
        %v472 = vld [vmem:[#allocation6 + $0x10] sm:$0xff]
        %v473 = vld [vmem:[#allocation6 + $0x18] sm:$0xff]
        %v474 = vld [vmem:[#allocation6 + $0x20] sm:$0xff]
        %v475 = vld [vmem:[#allocation6 + $0x28] sm:$0xff]
        %v476 = vld [vmem:[#allocation6 + $0x30] sm:$0xff]
        %v477 = vld [vmem:[#allocation6 + $0x38] sm:$0xff]
        %v478 = vld [vmem:[#allocation6 + $0x40] sm:$0xff]
        %v479 = vld [vmem:[#allocation6 + $0x48] sm:$0xff]
        %v480 = vld [vmem:[#allocation6 + $0x50] sm:$0xff]
        %v481 = vld [vmem:[#allocation6 + $0x58] sm:$0xff]
        %v482 = vld [vmem:[#allocation6 + $0x60] sm:$0xff]
        %v483 = vld [vmem:[#allocation6 + $0x68] sm:$0xff]
        %v484 = vld [vmem:[#allocation6 + $0x70] sm:$0xff]
        %v485 = vld [vmem:[#allocation6 + $0x78] sm:$0xff]
        %v486 = vld [vmem:[#allocation8] sm:$0x3]
        %v488 = vlaneseq
        %v489 = vshrl.u32 %v488, 7
        %v490 = vsub.s32 0, %v489
        %v491 = vrot.slane %v486, %v490
        %v492 = vlaneseq
        %v493 = vshrl.u32 %v492, 7
        %v494 = vsub.s32 1, %v493
        %v495 = vrot.slane %v486, %v494
        %v514 = vunpack.c.l.b16 %v470
        %v515 = vunpack.c.h.b16 %v470
        %v516 = vunpack.c.l.b16 %v471
        %v517 = vunpack.c.h.b16 %v471
        %v518 = vunpack.c.l.b16 %v472
        %v519 = vunpack.c.h.b16 %v472
        %v520 = vunpack.c.l.b16 %v473
        %v521 = vunpack.c.h.b16 %v473
        %v522 = vunpack.c.l.b16 %v474
        %v523 = vunpack.c.h.b16 %v474
        %v524 = vunpack.c.l.b16 %v475
        %v525 = vunpack.c.h.b16 %v475
        %v526 = vunpack.c.l.b16 %v476
        %v527 = vunpack.c.h.b16 %v476
        %v528 = vunpack.c.l.b16 %v477
        %v529 = vunpack.c.h.b16 %v477
        %v530 = vunpack.c.l.b16 %v478
        %v531 = vunpack.c.h.b16 %v478
        %v532 = vunpack.c.l.b16 %v479
        %v533 = vunpack.c.h.b16 %v479
        %v534 = vunpack.c.l.b16 %v480
        %v535 = vunpack.c.h.b16 %v480
        %v536 = vunpack.c.l.b16 %v481
        %v537 = vunpack.c.h.b16 %v481
        %v538 = vunpack.c.l.b16 %v482
        %v539 = vunpack.c.h.b16 %v482
        %v540 = vunpack.c.l.b16 %v483
        %v541 = vunpack.c.h.b16 %v483
        %v542 = vunpack.c.l.b16 %v484
        %v543 = vunpack.c.h.b16 %v484
        %v544 = vunpack.c.l.b16 %v485
        %v545 = vunpack.c.h.b16 %v485
        %v546 = vpack.c.b16 %v516, %v514
        %v547 = vpack.c.b16 %v517, %v515
        %v548 = vpack.c.b16 %v520, %v518
        %v549 = vpack.c.b16 %v521, %v519
        %v550 = vpack.c.b16 %v524, %v522
        %v551 = vpack.c.b16 %v525, %v523
        %v552 = vpack.c.b16 %v528, %v526
        %v553 = vpack.c.b16 %v529, %v527
        %v554 = vpack.c.b16 %v532, %v530
        %v555 = vpack.c.b16 %v533, %v531
        %v556 = vpack.c.b16 %v536, %v534
        %v557 = vpack.c.b16 %v537, %v535
        %v558 = vpack.c.b16 %v540, %v538
        %v559 = vpack.c.b16 %v541, %v539
        %v560 = vpack.c.b16 %v544, %v542
        %v561 = vpack.c.b16 %v545, %v543
        %578 = vmatprep.subr.bf16.mxu0 %v547
        %579 = vmatpush1.bf16.msra.mxu0 %v546
        %580 = vmatprep.subr.bf16.mxu0 %v549
        %581 = vmatpush1.bf16.msra.mxu0 %v548
        %582 = vmatprep.subr.bf16.mxu0 %v551
        %583 = vmatpush1.bf16.msra.mxu0 %v550
        %584 = vmatprep.subr.bf16.mxu0 %v553
        %585 = vmatpush1.bf16.msra.mxu0 %v552
        %586 = vmatprep.subr.bf16.mxu0 %v555
        %587 = vmatpush1.bf16.msra.mxu0 %v554
        %588 = vmatprep.subr.bf16.mxu0 %v557
        %589 = vmatpush1.bf16.msra.mxu0 %v556
        %590 = vmatprep.subr.bf16.mxu0 %v559
        %591 = vmatpush1.bf16.msra.mxu0 %v558
        %592 = vmatprep.subr.bf16.mxu0 %v561
        %593 = vmatpush1.bf16.msra.mxu0 %v560
        %594 = vmatprep.subr.bf16.mxu0 0
        %595 = vmatpush1.bf16.msra.mxu0 0
        %596 = vmatprep.subr.bf16.mxu0 0
        %597 = vmatpush1.bf16.msra.mxu0 0
        %598 = vmatprep.subr.bf16.mxu0 0
        %599 = vmatpush1.bf16.msra.mxu0 0
        %600 = vmatprep.subr.bf16.mxu0 0
        %601 = vmatpush1.bf16.msra.mxu0 0
        %602 = vmatprep.subr.bf16.mxu0 0
        %603 = vmatpush1.bf16.msra.mxu0 0
        %604 = vmatprep.subr.bf16.mxu0 0
        %605 = vmatpush1.bf16.msra.mxu0 0
        %606 = vmatprep.subr.bf16.mxu0 0
        %607 = vmatpush1.bf16.msra.mxu0 0
        %608 = vmatprep.subr.bf16.mxu0 0
        %609 = vmatpush1.bf16.msra.mxu0 0
        %610 = vmatprep.mubr.bf16.mxu0 0
        %611 = vmatmul.mubr.bf16.gmra.mrb[0].mxu0 %v466
        %v612 = vpop.f32.mrb[0].mxu0
        %v613 = vadd.f32 %v491, %v612
        %v614 = vpop.f32.mrb[0].mxu0
        %v615 = vadd.f32 %v495, %v614
        %v616 = vpop.f32.mrb[0].mxu0
        %v617 = vadd.f32 %v491, %v616
        %v618 = vpop.f32.mrb[0].mxu0
        %v619 = vadd.f32 %v495, %v618
        %620 = vmatprep.mubr.bf16.mxu0 0
        %621 = vmatmul.mubr.bf16.gmra.mrb[0].mxu0 %v467
        %v622 = vpop.f32.mrb[0].mxu0
        %v623 = vadd.f32 %v491, %v622
        %v624 = vpop.f32.mrb[0].mxu0
        %v625 = vadd.f32 %v495, %v624
        %v626 = vpop.f32.mrb[0].mxu0
        %v627 = vadd.f32 %v491, %v626
        %v628 = vpop.f32.mrb[0].mxu0
        %v629 = vadd.f32 %v495, %v628
        %630 = vmatprep.mubr.bf16.mxu0 0
        %631 = vmatmul.mubr.bf16.gmra.mrb[0].mxu0 %v468
        %v632 = vpop.f32.mrb[0].mxu0
        %v633 = vadd.f32 %v491, %v632
        %v634 = vpop.f32.mrb[0].mxu0
        %v635 = vadd.f32 %v495, %v634
        %v636 = vpop.f32.mrb[0].mxu0
        %v637 = vadd.f32 %v491, %v636
        %v638 = vpop.f32.mrb[0].mxu0
        %v639 = vadd.f32 %v495, %v638
        %640 = vmatprep.mubr.bf16.mxu0 0
        %641 = vmatmul.mubr.bf16.gmra.mrb[0].mxu0 %v469
        %v642 = vpop.f32.mrb[0].mxu0
        %v643 = vadd.f32 %v491, %v642
        %v644 = vpop.f32.mrb[0].mxu0
        %v645 = vadd.f32 %v495, %v644
        %v646 = vpop.f32.mrb[0].mxu0
        %v647 = vadd.f32 %v491, %v646
        %v648 = vpop.f32.mrb[0].mxu0
        %v649 = vadd.f32 %v495, %v648
        %650 = vdwg.mxu0
        %v651 = vmax.f32 %v613, 0.0
        %v652 = vmax.f32 %v615, 0.0
        %v653 = vmax.f32 %v617, 0.0
        %v654 = vmax.f32 %v619, 0.0
        %v655 = vmax.f32 %v623, 0.0
        %v656 = vmax.f32 %v625, 0.0
        %v657 = vmax.f32 %v627, 0.0
        %v658 = vmax.f32 %v629, 0.0
        %v659 = vmax.f32 %v633, 0.0
        %v660 = vmax.f32 %v635, 0.0
        %v661 = vmax.f32 %v637, 0.0
        %v662 = vmax.f32 %v639, 0.0
        %v663 = vmax.f32 %v643, 0.0
        %v664 = vmax.f32 %v645, 0.0
        %v665 = vmax.f32 %v647, 0.0
        %v666 = vmax.f32 %v649, 0.0
        %667 = vst [vmem:[#allocation2] sm:$0xff] 0.0
        %668 = vst [vmem:[#allocation2 + $0x8] sm:$0xff] 0.0
        %669 = vst [vmem:[#allocation2 + $0x10] sm:$0xff] %v651
        %670 = vst [vmem:[#allocation2 + $0x18] sm:$0xff] %v652
        %671 = vst [vmem:[#allocation2 + $0x20] sm:$0xff] %v653
        %672 = vst [vmem:[#allocation2 + $0x28] sm:$0xff] %v654
        %673 = vst [vmem:[#allocation2 + $0x30] sm:$0xff] %v655
        %674 = vst [vmem:[#allocation2 + $0x38] sm:$0xff] %v656
        %675 = vst [vmem:[#allocation2 + $0x40] sm:$0xff] %v657
        %676 = vst [vmem:[#allocation2 + $0x48] sm:$0xff] %v658
        %677 = vst [vmem:[#allocation2 + $0x50] sm:$0xff] %v659
        %678 = vst [vmem:[#allocation2 + $0x58] sm:$0xff] %v660
        %679 = vst [vmem:[#allocation2 + $0x60] sm:$0xff] %v661
        %680 = vst [vmem:[#allocation2 + $0x68] sm:$0xff] %v662
        %681 = vst [vmem:[#allocation2 + $0x70] sm:$0xff] %v663
        %682 = vst [vmem:[#allocation2 + $0x78] sm:$0xff] %v664
        %683 = vst [vmem:[#allocation2 + $0x80] sm:$0xff] %v665
        %684 = vst [vmem:[#allocation2 + $0x88] sm:$0xff] %v666
        %685 = vst [vmem:[#allocation2 + $0x90] sm:$0xff] 0.0
        %686 = vst [vmem:[#allocation2 + $0x98] sm:$0xff] 0.0
        %v687 = vld [vmem:[#allocation2] sm:$0xff]
        %v688 = vld [vmem:[#allocation2 + $0x8] sm:$0xff]
        %v689 = vld [vmem:[#allocation2 + $0x10] sm:$0xff]
        %v690 = vld [vmem:[#allocation2 + $0x18] sm:$0xff]
        %v691 = vld [vmem:[#allocation2 + $0x20] sm:$0xff]
        %v692 = vld [vmem:[#allocation2 + $0x28] sm:$0xff]
        %v693 = vld [vmem:[#allocation2 + $0x30] sm:$0xff]
        %v694 = vld [vmem:[#allocation2 + $0x38] sm:$0xff]
        %v695 = vld [vmem:[#allocation2 + $0x40] sm:$0xff]
        %v696 = vld [vmem:[#allocation2 + $0x48] sm:$0xff]
        %v697 = vld [vmem:[#allocation2 + $0x50] sm:$0xff]
        %v698 = vld [vmem:[#allocation2 + $0x58] sm:$0xff]
        %v699 = vld [vmem:[#allocation2 + $0x60] sm:$0xff]
        %v700 = vld [vmem:[#allocation2 + $0x68] sm:$0xff]
        %v701 = vld [vmem:[#allocation2 + $0x70] sm:$0xff]
        %v702 = vld [vmem:[#allocation2 + $0x78] sm:$0xff]
        %v703 = vld [vmem:[#allocation2 + $0x80] sm:$0xff]
        %v704 = vld [vmem:[#allocation2 + $0x88] sm:$0xff]
        %v705 = vld [vmem:[#allocation2 + $0x90] sm:$0xff]
        %v706 = vld [vmem:[#allocation2 + $0x98] sm:$0xff]
        %v707 = vlaneseq
        %v708 = vshrl.u32 %v707, 7
        %v709 = vadd.s32 %v708, 8
        %v710 = vadd.s32 %v708, 16
        %v711 = vadd.s32 %v708, 24
        %v712 = vadd.s32 %v708, 32
        %v713 = vadd.s32 %v708, 40
        %v714 = vadd.s32 %v708, 48
        %v715 = vadd.s32 %v708, 56
        %v716 = vadd.s32 %v708, 64
        %v717 = vadd.s32 %v708, 72
        %vm718 = vcmp.lt.s32.totalorder %v708, 0
        %v719 = vsub.s32 0, %v708
        %v720 = vsel %vm718, %v719, %v708
        %v721 = vshrl.u32 %v720, 3
        %v722 = vand.u32 %v720, 7
        %v723 = vsub.s32 0, %v722
        %v724 = vsel %vm718, %v723, %v722
        %vm725 = vcmp.lt.s32.totalorder %v709, 0
        %v726 = vsub.s32 0, %v709
        %v727 = vsel %vm725, %v726, %v709
        %v728 = vshrl.u32 %v727, 3
        %v729 = vand.u32 %v727, 7
        %v730 = vsub.s32 0, %v729
        %v731 = vsel %vm725, %v730, %v729
        %vm732 = vcmp.lt.s32.totalorder %v710, 0
        %v733 = vsub.s32 0, %v710
        %v734 = vsel %vm732, %v733, %v710
        %v735 = vshrl.u32 %v734, 3
        %v736 = vand.u32 %v734, 7
        %v737 = vsub.s32 0, %v736
        %v738 = vsel %vm732, %v737, %v736
        %vm739 = vcmp.lt.s32.totalorder %v711, 0
        %v740 = vsub.s32 0, %v711
        %v741 = vsel %vm739, %v740, %v711
        %v742 = vshrl.u32 %v741, 3
        %v743 = vand.u32 %v741, 7
        %v744 = vsub.s32 0, %v743
        %v745 = vsel %vm739, %v744, %v743
        %vm746 = vcmp.lt.s32.totalorder %v712, 0
        %v747 = vsub.s32 0, %v712
        %v748 = vsel %vm746, %v747, %v712
        %v749 = vshrl.u32 %v748, 3
        %v750 = vand.u32 %v748, 7
        %v751 = vsub.s32 0, %v750
        %v752 = vsel %vm746, %v751, %v750
        %vm753 = vcmp.lt.s32.totalorder %v713, 0
        %v754 = vsub.s32 0, %v713
        %v755 = vsel %vm753, %v754, %v713
        %v756 = vshrl.u32 %v755, 3
        %v757 = vand.u32 %v755, 7
        %v758 = vsub.s32 0, %v757
        %v759 = vsel %vm753, %v758, %v757
        %vm760 = vcmp.lt.s32.totalorder %v714, 0
        %v761 = vsub.s32 0, %v714
        %v762 = vsel %vm760, %v761, %v714
        %v763 = vshrl.u32 %v762, 3
        %v764 = vand.u32 %v762, 7
        %v765 = vsub.s32 0, %v764
        %v766 = vsel %vm760, %v765, %v764
        %vm767 = vcmp.lt.s32.totalorder %v715, 0
        %v768 = vsub.s32 0, %v715
        %v769 = vsel %vm767, %v768, %v715
        %v770 = vshrl.u32 %v769, 3
        %v771 = vand.u32 %v769, 7
        %v772 = vsub.s32 0, %v771
        %v773 = vsel %vm767, %v772, %v771
        %vm774 = vcmp.lt.s32.totalorder %v716, 0
        %v775 = vsub.s32 0, %v716
        %v776 = vsel %vm774, %v775, %v716
        %v777 = vshrl.u32 %v776, 3
        %v778 = vand.u32 %v776, 7
        %v779 = vsub.s32 0, %v778
        %v780 = vsel %vm774, %v779, %v778
        %vm781 = vcmp.lt.s32.totalorder %v717, 0
        %v782 = vsub.s32 0, %v717
        %v783 = vsel %vm781, %v782, %v717
        %v784 = vshrl.u32 %v783, 3
        %v785 = vand.u32 %v783, 7
        %v786 = vsub.s32 0, %v785
        %v787 = vsel %vm781, %v786, %v785
        %vm788 = vcmp.ne.s32.totalorder %v724, 0
        %vm789 = vcmp.ne.s32.totalorder %v731, 0
        %vm790 = vcmp.ne.s32.totalorder %v738, 0
        %vm791 = vcmp.ne.s32.totalorder %v745, 0
        %vm792 = vcmp.ne.s32.totalorder %v752, 0
        %vm793 = vcmp.ne.s32.totalorder %v759, 0
        %vm794 = vcmp.ne.s32.totalorder %v766, 0
        %vm795 = vcmp.ne.s32.totalorder %v773, 0
        %vm796 = vcmp.ne.s32.totalorder %v780, 0
        %vm797 = vcmp.ne.s32.totalorder %v787, 0
        %vm798 = vcmp.lt.s32.totalorder %v724, 0
        %vm799 = vcmp.lt.s32.totalorder %v731, 0
        %vm800 = vcmp.lt.s32.totalorder %v738, 0
        %vm801 = vcmp.lt.s32.totalorder %v745, 0
        %vm802 = vcmp.lt.s32.totalorder %v752, 0
        %vm803 = vcmp.lt.s32.totalorder %v759, 0
        %vm804 = vcmp.lt.s32.totalorder %v766, 0
        %vm805 = vcmp.lt.s32.totalorder %v773, 0
        %vm806 = vcmp.lt.s32.totalorder %v780, 0
        %vm807 = vcmp.lt.s32.totalorder %v787, 0
        %vm808 = vmand %vm798, %vm788
        %vm809 = vmand %vm799, %vm789
        %vm810 = vmand %vm800, %vm790
        %vm811 = vmand %vm801, %vm791
        %vm812 = vmand %vm802, %vm792
        %vm813 = vmand %vm803, %vm793
        %vm814 = vmand %vm804, %vm794
        %vm815 = vmand %vm805, %vm795
        %vm816 = vmand %vm806, %vm796
        %vm817 = vmand %vm807, %vm797
        %v818 = vadd.s32 %v724, 8
        %v819 = vadd.s32 %v731, 8
        %v820 = vadd.s32 %v738, 8
        %v821 = vadd.s32 %v745, 8
        %v822 = vadd.s32 %v752, 8
        %v823 = vadd.s32 %v759, 8
        %v824 = vadd.s32 %v766, 8
        %v825 = vadd.s32 %v773, 8
        %v826 = vadd.s32 %v780, 8
        %v827 = vadd.s32 %v787, 8
        %v828 = vsel %vm808, %v818, %v724
        %v829 = vsel %vm809, %v819, %v731
        %v830 = vsel %vm810, %v820, %v738
        %v831 = vsel %vm811, %v821, %v745
        %v832 = vsel %vm812, %v822, %v752
        %v833 = vsel %vm813, %v823, %v759
        %v834 = vsel %vm814, %v824, %v766
        %v835 = vsel %vm815, %v825, %v773
        %v836 = vsel %vm816, %v826, %v780
        %v837 = vsel %vm817, %v827, %v787
        %v838 = vld [vmem:[#allocation9] sm:$0xff]
        %v839 = vld [vmem:[#allocation9 + $0x8] sm:$0xff]
        %v840 = vld [vmem:[#allocation9 + $0x10] sm:$0x1]
        %v841 = vld [vmem:[#allocation9 + $0x18] sm:$0x1]
        %v842 = vld [vmem:[#allocation11] sm:$0x3]
        %v844 = vlaneseq
        %v845 = vshrl.u32 %v844, 7
        %v846 = vsub.s32 0, %v845
        %v847 = vrot.slane %v842, %v846
        %v848 = vlaneseq
        %v849 = vshrl.u32 %v848, 7
        %v850 = vsub.s32 1, %v849
        %v851 = vrot.slane %v842, %v850
        %v854 = vadd.f32 %v847, 0.0
        %v855 = vadd.f32 %v851, 0.0
        %v856 = vrot.slane %v687, 7
        %v857 = vrot.slane %v688, 7
        %v858 = vrot.slane %v689, 7
        %v859 = vrot.slane %v690, 7
        %v860 = vrot.slane %v691, 7
        %v861 = vrot.slane %v692, 7
        %v862 = vrot.slane %v693, 7
        %v863 = vrot.slane %v694, 7
        %v864 = vrot.slane %v695, 7
        %v865 = vrot.slane %v696, 7
        %v866 = vrot.slane %v697, 7
        %v867 = vrot.slane %v698, 7
        %v868 = vrot.slane %v699, 7
        %v869 = vrot.slane %v700, 7
        %v870 = vrot.slane %v701, 7
        %v871 = vrot.slane %v702, 7
        %v872 = vrot.slane %v703, 7
        %v873 = vrot.slane %v704, 7
        %v874 = vrot.slane %v705, 7
        %v875 = vrot.slane %v706, 7
        %vm876 = vcmp.lt.s32.totalorder %v708, 1
        %v877 = vsel %vm876, %v872, %v874
        %v878 = vsel %vm876, %v873, %v875
        %v879 = vsel %vm876, %v870, %v872
        %v880 = vsel %vm876, %v871, %v873
        %v881 = vsel %vm876, %v868, %v870
        %v882 = vsel %vm876, %v869, %v871
        %v883 = vsel %vm876, %v866, %v868
        %v884 = vsel %vm876, %v867, %v869
        %v885 = vsel %vm876, %v864, %v866
        %v886 = vsel %vm876, %v865, %v867
        %v887 = vsel %vm876, %v862, %v864
        %v888 = vsel %vm876, %v863, %v865
        %v889 = vsel %vm876, %v860, %v862
        %v890 = vsel %vm876, %v861, %v863
        %v891 = vsel %vm876, %v858, %v860
        %v892 = vsel %vm876, %v859, %v861
        %v893 = vsel %vm876, %v856, %v858
        %v894 = vsel %vm876, %v857, %v859
        %v895 = vsel %vm876, %v874, %v856
        %v896 = vsel %vm876, %v875, %v857
        %vm897 = vcmp.eq.s32.totalorder %v828, 0
        %vm898 = vcmp.eq.s32.totalorder %v829, 0
        %vm899 = vcmp.eq.s32.totalorder %v830, 0
        %vm900 = vcmp.eq.s32.totalorder %v831, 0
        %vm901 = vcmp.eq.s32.totalorder %v832, 0
        %vm902 = vcmp.eq.s32.totalorder %v833, 0
        %vm903 = vcmp.eq.s32.totalorder %v834, 0
        %vm904 = vcmp.eq.s32.totalorder %v835, 0
        %vm905 = vcmp.eq.s32.totalorder %v836, 0
        %vm906 = vcmp.eq.s32.totalorder %v837, 0
        %v907 = vsel %vm897, 1, 0
        %v908 = vsel %vm898, 1, 0
        %v909 = vsel %vm899, 1, 0
        %v910 = vsel %vm900, 1, 0
        %v911 = vsel %vm901, 1, 0
        %v912 = vsel %vm902, 1, 0
        %v913 = vsel %vm903, 1, 0
        %v914 = vsel %vm904, 1, 0
        %v915 = vsel %vm905, 1, 0
        %v916 = vsel %vm906, 1, 0
        %vm917 = vcmp.eq.s32.totalorder %v907, 1
        %vm918 = vcmp.eq.s32.totalorder %v908, 1
        %vm919 = vcmp.eq.s32.totalorder %v909, 1
        %vm920 = vcmp.eq.s32.totalorder %v910, 1
        %vm921 = vcmp.eq.s32.totalorder %v911, 1
        %vm922 = vcmp.eq.s32.totalorder %v912, 1
        %vm923 = vcmp.eq.s32.totalorder %v913, 1
        %vm924 = vcmp.eq.s32.totalorder %v914, 1
        %vm925 = vcmp.eq.s32.totalorder %v915, 1
        %vm926 = vcmp.eq.s32.totalorder %v916, 1
        %v927 = vsel %vm917, 0.0, %v895
        %v928 = vsel %vm917, 0.0, %v896
        %v929 = vsel %vm918, 0.0, %v893
        %v930 = vsel %vm918, 0.0, %v894
        %v931 = vsel %vm919, 0.0, %v891
        %v932 = vsel %vm919, 0.0, %v892
        %v933 = vsel %vm920, 0.0, %v889
        %v934 = vsel %vm920, 0.0, %v890
        %v935 = vsel %vm921, 0.0, %v887
        %v936 = vsel %vm921, 0.0, %v888
        %v937 = vsel %vm922, 0.0, %v885
        %v938 = vsel %vm922, 0.0, %v886
        %v939 = vsel %vm923, 0.0, %v883
        %v940 = vsel %vm923, 0.0, %v884
        %v941 = vsel %vm924, 0.0, %v881
        %v942 = vsel %vm924, 0.0, %v882
        %v943 = vsel %vm925, 0.0, %v879
        %v944 = vsel %vm925, 0.0, %v880
        %v945 = vsel %vm926, 0.0, %v877
        %v946 = vsel %vm926, 0.0, %v878
        %v947 = vlaneseq
        %v948 = vshrl.u32 %v947, 7
        %v949 = vsub.s32 0, %v948
        %v950 = vrot.slane %v838, %v949
        %v951 = vlaneseq
        %v952 = vshrl.u32 %v951, 7
        %v953 = vsub.s32 0, %v952
        %v954 = vrot.slane %v839, %v953
        %v955 = vmul.f32 %v927, %v950
        %v956 = vmul.f32 %v928, %v954
        %v957 = vmul.f32 %v929, %v950
        %v958 = vmul.f32 %v930, %v954
        %v959 = vmul.f32 %v931, %v950
        %v960 = vmul.f32 %v932, %v954
        %v961 = vmul.f32 %v933, %v950
        %v962 = vmul.f32 %v934, %v954
        %v963 = vmul.f32 %v935, %v950
        %v964 = vmul.f32 %v936, %v954
        %v965 = vmul.f32 %v937, %v950
        %v966 = vmul.f32 %v938, %v954
        %v967 = vmul.f32 %v939, %v950
        %v968 = vmul.f32 %v940, %v954
        %v969 = vmul.f32 %v941, %v950
        %v970 = vmul.f32 %v942, %v954
        %v971 = vadd.f32 %v854, %v955
        %v972 = vadd.f32 %v855, %v956
        %v973 = vadd.f32 %v854, %v957
        %v974 = vadd.f32 %v855, %v958
        %v975 = vadd.f32 %v854, %v959
        %v976 = vadd.f32 %v855, %v960
        %v977 = vadd.f32 %v854, %v961
        %v978 = vadd.f32 %v855, %v962
        %v979 = vadd.f32 %v854, %v963
        %v980 = vadd.f32 %v855, %v964
        %v981 = vadd.f32 %v854, %v965
        %v982 = vadd.f32 %v855, %v966
        %v983 = vadd.f32 %v854, %v967
        %v984 = vadd.f32 %v855, %v968
        %v985 = vadd.f32 %v854, %v969
        %v986 = vadd.f32 %v855, %v970
        %v987 = vlaneseq
        %v988 = vshrl.u32 %v987, 7
        %v989 = vsub.s32 3, %v988
        %v990 = vrot.slane %v838, %v989
        %v991 = vlaneseq
        %v992 = vshrl.u32 %v991, 7
        %v993 = vsub.s32 3, %v992
        %v994 = vrot.slane %v839, %v993
        %v995 = vmul.f32 %v929, %v990
        %v996 = vmul.f32 %v930, %v994
        %v997 = vmul.f32 %v931, %v990
        %v998 = vmul.f32 %v932, %v994
        %v999 = vmul.f32 %v933, %v990
        %v1000 = vmul.f32 %v934, %v994
        %v1001 = vmul.f32 %v935, %v990
        %v1002 = vmul.f32 %v936, %v994
        %v1003 = vmul.f32 %v937, %v990
        %v1004 = vmul.f32 %v938, %v994
        %v1005 = vmul.f32 %v939, %v990
        %v1006 = vmul.f32 %v940, %v994
        %v1007 = vmul.f32 %v941, %v990
        %v1008 = vmul.f32 %v942, %v994
        %v1009 = vmul.f32 %v943, %v990
        %v1010 = vmul.f32 %v944, %v994
        %v1011 = vadd.f32 %v971, %v995
        %v1012 = vadd.f32 %v972, %v996
        %v1013 = vadd.f32 %v973, %v997
        %v1014 = vadd.f32 %v974, %v998
        %v1015 = vadd.f32 %v975, %v999
        %v1016 = vadd.f32 %v976, %v1000
        %v1017 = vadd.f32 %v977, %v1001
        %v1018 = vadd.f32 %v978, %v1002
        %v1019 = vadd.f32 %v979, %v1003
        %v1020 = vadd.f32 %v980, %v1004
        %v1021 = vadd.f32 %v981, %v1005
        %v1022 = vadd.f32 %v982, %v1006
        %v1023 = vadd.f32 %v983, %v1007
        %v1024 = vadd.f32 %v984, %v1008
        %v1025 = vadd.f32 %v985, %v1009
        %v1026 = vadd.f32 %v986, %v1010
        %v1027 = vlaneseq
        %v1028 = vshrl.u32 %v1027, 7
        %v1029 = vsub.s32 6, %v1028
        %v1030 = vrot.slane %v838, %v1029
        %v1031 = vlaneseq
        %v1032 = vshrl.u32 %v1031, 7
        %v1033 = vsub.s32 6, %v1032
        %v1034 = vrot.slane %v839, %v1033
        %v1035 = vmul.f32 %v931, %v1030
        %v1036 = vmul.f32 %v932, %v1034
        %v1037 = vmul.f32 %v933, %v1030
        %v1038 = vmul.f32 %v934, %v1034
        %v1039 = vmul.f32 %v935, %v1030
        %v1040 = vmul.f32 %v936, %v1034
        %v1041 = vmul.f32 %v937, %v1030
        %v1042 = vmul.f32 %v938, %v1034
        %v1043 = vmul.f32 %v939, %v1030
        %v1044 = vmul.f32 %v940, %v1034
        %v1045 = vmul.f32 %v941, %v1030
        %v1046 = vmul.f32 %v942, %v1034
        %v1047 = vmul.f32 %v943, %v1030
        %v1048 = vmul.f32 %v944, %v1034
        %v1049 = vmul.f32 %v945, %v1030
        %v1050 = vmul.f32 %v946, %v1034
        %v1051 = vadd.f32 %v1011, %v1035
        %v1052 = vadd.f32 %v1012, %v1036
        %v1053 = vadd.f32 %v1013, %v1037
        %v1054 = vadd.f32 %v1014, %v1038
        %v1055 = vadd.f32 %v1015, %v1039
        %v1056 = vadd.f32 %v1016, %v1040
        %v1057 = vadd.f32 %v1017, %v1041
        %v1058 = vadd.f32 %v1018, %v1042
        %v1059 = vadd.f32 %v1019, %v1043
        %v1060 = vadd.f32 %v1020, %v1044
        %v1061 = vadd.f32 %v1021, %v1045
        %v1062 = vadd.f32 %v1022, %v1046
        %v1063 = vadd.f32 %v1023, %v1047
        %v1064 = vadd.f32 %v1024, %v1048
        %v1065 = vadd.f32 %v1025, %v1049
        %v1066 = vadd.f32 %v1026, %v1050
        %v1067 = vlaneseq
        %v1068 = vshrl.u32 %v1067, 7
        %v1069 = vsub.s32 1, %v1068
        %v1070 = vrot.slane %v838, %v1069
        %v1071 = vlaneseq
        %v1072 = vshrl.u32 %v1071, 7
        %v1073 = vsub.s32 1, %v1072
        %v1074 = vrot.slane %v839, %v1073
        %v1075 = vmul.f32 %v687, %v1070
        %v1076 = vmul.f32 %v688, %v1074
        %v1077 = vmul.f32 %v689, %v1070
        %v1078 = vmul.f32 %v690, %v1074
        %v1079 = vmul.f32 %v691, %v1070
        %v1080 = vmul.f32 %v692, %v1074
        %v1081 = vmul.f32 %v693, %v1070
        %v1082 = vmul.f32 %v694, %v1074
        %v1083 = vmul.f32 %v695, %v1070
        %v1084 = vmul.f32 %v696, %v1074
        %v1085 = vmul.f32 %v697, %v1070
        %v1086 = vmul.f32 %v698, %v1074
        %v1087 = vmul.f32 %v699, %v1070
        %v1088 = vmul.f32 %v700, %v1074
        %v1089 = vmul.f32 %v701, %v1070
        %v1090 = vmul.f32 %v702, %v1074
        %v1091 = vadd.f32 %v1051, %v1075
        %v1092 = vadd.f32 %v1052, %v1076
        %v1093 = vadd.f32 %v1053, %v1077
        %v1094 = vadd.f32 %v1054, %v1078
        %v1095 = vadd.f32 %v1055, %v1079
        %v1096 = vadd.f32 %v1056, %v1080
        %v1097 = vadd.f32 %v1057, %v1081
        %v1098 = vadd.f32 %v1058, %v1082
        %v1099 = vadd.f32 %v1059, %v1083
        %v1100 = vadd.f32 %v1060, %v1084
        %v1101 = vadd.f32 %v1061, %v1085
        %v1102 = vadd.f32 %v1062, %v1086
        %v1103 = vadd.f32 %v1063, %v1087
        %v1104 = vadd.f32 %v1064, %v1088
        %v1105 = vadd.f32 %v1065, %v1089
        %v1106 = vadd.f32 %v1066, %v1090
        %v1107 = vlaneseq
        %v1108 = vshrl.u32 %v1107, 7
        %v1109 = vsub.s32 4, %v1108
        %v1110 = vrot.slane %v838, %v1109
        %v1111 = vlaneseq
        %v1112 = vshrl.u32 %v1111, 7
        %v1113 = vsub.s32 4, %v1112
        %v1114 = vrot.slane %v839, %v1113
        %v1115 = vmul.f32 %v689, %v1110
        %v1116 = vmul.f32 %v690, %v1114
        %v1117 = vmul.f32 %v691, %v1110
        %v1118 = vmul.f32 %v692, %v1114
        %v1119 = vmul.f32 %v693, %v1110
        %v1120 = vmul.f32 %v694, %v1114
        %v1121 = vmul.f32 %v695, %v1110
        %v1122 = vmul.f32 %v696, %v1114
        %v1123 = vmul.f32 %v697, %v1110
        %v1124 = vmul.f32 %v698, %v1114
        %v1125 = vmul.f32 %v699, %v1110
        %v1126 = vmul.f32 %v700, %v1114
        %v1127 = vmul.f32 %v701, %v1110
        %v1128 = vmul.f32 %v702, %v1114
        %v1129 = vmul.f32 %v703, %v1110
        %v1130 = vmul.f32 %v704, %v1114
        %v1131 = vadd.f32 %v1091, %v1115
        %v1132 = vadd.f32 %v1092, %v1116
        %v1133 = vadd.f32 %v1093, %v1117
        %v1134 = vadd.f32 %v1094, %v1118
        %v1135 = vadd.f32 %v1095, %v1119
        %v1136 = vadd.f32 %v1096, %v1120
        %v1137 = vadd.f32 %v1097, %v1121
        %v1138 = vadd.f32 %v1098, %v1122
        %v1139 = vadd.f32 %v1099, %v1123
        %v1140 = vadd.f32 %v1100, %v1124
        %v1141 = vadd.f32 %v1101, %v1125
        %v1142 = vadd.f32 %v1102, %v1126
        %v1143 = vadd.f32 %v1103, %v1127
        %v1144 = vadd.f32 %v1104, %v1128
        %v1145 = vadd.f32 %v1105, %v1129
        %v1146 = vadd.f32 %v1106, %v1130
        %v1147 = vlaneseq
        %v1148 = vshrl.u32 %v1147, 7
        %v1149 = vsub.s32 7, %v1148
        %v1150 = vrot.slane %v838, %v1149
        %v1151 = vlaneseq
        %v1152 = vshrl.u32 %v1151, 7
        %v1153 = vsub.s32 7, %v1152
        %v1154 = vrot.slane %v839, %v1153
        %v1155 = vmul.f32 %v691, %v1150
        %v1156 = vmul.f32 %v692, %v1154
        %v1157 = vmul.f32 %v693, %v1150
        %v1158 = vmul.f32 %v694, %v1154
        %v1159 = vmul.f32 %v695, %v1150
        %v1160 = vmul.f32 %v696, %v1154
        %v1161 = vmul.f32 %v697, %v1150
        %v1162 = vmul.f32 %v698, %v1154
        %v1163 = vmul.f32 %v699, %v1150
        %v1164 = vmul.f32 %v700, %v1154
        %v1165 = vmul.f32 %v701, %v1150
        %v1166 = vmul.f32 %v702, %v1154
        %v1167 = vmul.f32 %v703, %v1150
        %v1168 = vmul.f32 %v704, %v1154
        %v1169 = vmul.f32 %v705, %v1150
        %v1170 = vmul.f32 %v706, %v1154
        %v1171 = vadd.f32 %v1131, %v1155
        %v1172 = vadd.f32 %v1132, %v1156
        %v1173 = vadd.f32 %v1133, %v1157
        %v1174 = vadd.f32 %v1134, %v1158
        %v1175 = vadd.f32 %v1135, %v1159
        %v1176 = vadd.f32 %v1136, %v1160
        %v1177 = vadd.f32 %v1137, %v1161
        %v1178 = vadd.f32 %v1138, %v1162
        %v1179 = vadd.f32 %v1139, %v1163
        %v1180 = vadd.f32 %v1140, %v1164
        %v1181 = vadd.f32 %v1141, %v1165
        %v1182 = vadd.f32 %v1142, %v1166
        %v1183 = vadd.f32 %v1143, %v1167
        %v1184 = vadd.f32 %v1144, %v1168
        %v1185 = vadd.f32 %v1145, %v1169
        %v1186 = vadd.f32 %v1146, %v1170
        %v1187 = vrot.slane %v687, 1
        %v1188 = vrot.slane %v688, 1
        %v1189 = vrot.slane %v689, 1
        %v1190 = vrot.slane %v690, 1
        %v1191 = vrot.slane %v691, 1
        %v1192 = vrot.slane %v692, 1
        %v1193 = vrot.slane %v693, 1
        %v1194 = vrot.slane %v694, 1
        %v1195 = vrot.slane %v695, 1
        %v1196 = vrot.slane %v696, 1
        %v1197 = vrot.slane %v697, 1
        %v1198 = vrot.slane %v698, 1
        %v1199 = vrot.slane %v699, 1
        %v1200 = vrot.slane %v700, 1
        %v1201 = vrot.slane %v701, 1
        %v1202 = vrot.slane %v702, 1
        %v1203 = vrot.slane %v703, 1
        %v1204 = vrot.slane %v704, 1
        %v1205 = vrot.slane %v705, 1
        %v1206 = vrot.slane %v706, 1
        %vm1207 = vcmp.lt.s32.totalorder %v708, 7
        %v1208 = vsel %vm1207, %v1203, %v1205
        %v1209 = vsel %vm1207, %v1204, %v1206
        %v1210 = vsel %vm1207, %v1201, %v1203
        %v1211 = vsel %vm1207, %v1202, %v1204
        %v1212 = vsel %vm1207, %v1199, %v1201
        %v1213 = vsel %vm1207, %v1200, %v1202
        %v1214 = vsel %vm1207, %v1197, %v1199
        %v1215 = vsel %vm1207, %v1198, %v1200
        %v1216 = vsel %vm1207, %v1195, %v1197
        %v1217 = vsel %vm1207, %v1196, %v1198
        %v1218 = vsel %vm1207, %v1193, %v1195
        %v1219 = vsel %vm1207, %v1194, %v1196
        %v1220 = vsel %vm1207, %v1191, %v1193
        %v1221 = vsel %vm1207, %v1192, %v1194
        %v1222 = vsel %vm1207, %v1189, %v1191
        %v1223 = vsel %vm1207, %v1190, %v1192
        %v1224 = vsel %vm1207, %v1187, %v1189
        %v1225 = vsel %vm1207, %v1188, %v1190
        %v1226 = vsel %vm1207, %v1205, %v1187
        %v1227 = vsel %vm1207, %v1206, %v1188
        %vm1228 = vcmp.eq.s32.totalorder %v828, 7
        %vm1229 = vcmp.eq.s32.totalorder %v829, 7
        %vm1230 = vcmp.eq.s32.totalorder %v830, 7
        %vm1231 = vcmp.eq.s32.totalorder %v831, 7
        %vm1232 = vcmp.eq.s32.totalorder %v832, 7
        %vm1233 = vcmp.eq.s32.totalorder %v833, 7
        %vm1234 = vcmp.eq.s32.totalorder %v834, 7
        %vm1235 = vcmp.eq.s32.totalorder %v835, 7
        %vm1236 = vcmp.eq.s32.totalorder %v836, 7
        %vm1237 = vcmp.eq.s32.totalorder %v837, 7
        %v1238 = vsel %vm1228, 1, 0
        %v1239 = vsel %vm1229, 1, 0
        %v1240 = vsel %vm1230, 1, 0
        %v1241 = vsel %vm1231, 1, 0
        %v1242 = vsel %vm1232, 1, 0
        %v1243 = vsel %vm1233, 1, 0
        %v1244 = vsel %vm1234, 1, 0
        %v1245 = vsel %vm1235, 1, 0
        %v1246 = vsel %vm1236, 1, 0
        %v1247 = vsel %vm1237, 1, 0
        %vm1248 = vcmp.eq.s32.totalorder %v1238, 1
        %vm1249 = vcmp.eq.s32.totalorder %v1239, 1
        %vm1250 = vcmp.eq.s32.totalorder %v1240, 1
        %vm1251 = vcmp.eq.s32.totalorder %v1241, 1
        %vm1252 = vcmp.eq.s32.totalorder %v1242, 1
        %vm1253 = vcmp.eq.s32.totalorder %v1243, 1
        %vm1254 = vcmp.eq.s32.totalorder %v1244, 1
        %vm1255 = vcmp.eq.s32.totalorder %v1245, 1
        %vm1256 = vcmp.eq.s32.totalorder %v1246, 1
        %vm1257 = vcmp.eq.s32.totalorder %v1247, 1
        %v1258 = vsel %vm1248, 0.0, %v1224
        %v1259 = vsel %vm1248, 0.0, %v1225
        %v1260 = vsel %vm1249, 0.0, %v1222
        %v1261 = vsel %vm1249, 0.0, %v1223
        %v1262 = vsel %vm1250, 0.0, %v1220
        %v1263 = vsel %vm1250, 0.0, %v1221
        %v1264 = vsel %vm1251, 0.0, %v1218
        %v1265 = vsel %vm1251, 0.0, %v1219
        %v1266 = vsel %vm1252, 0.0, %v1216
        %v1267 = vsel %vm1252, 0.0, %v1217
        %v1268 = vsel %vm1253, 0.0, %v1214
        %v1269 = vsel %vm1253, 0.0, %v1215
        %v1270 = vsel %vm1254, 0.0, %v1212
        %v1271 = vsel %vm1254, 0.0, %v1213
        %v1272 = vsel %vm1255, 0.0, %v1210
        %v1273 = vsel %vm1255, 0.0, %v1211
        %v1274 = vsel %vm1256, 0.0, %v1208
        %v1275 = vsel %vm1256, 0.0, %v1209
        %v1276 = vsel %vm1257, 0.0, %v1226
        %v1277 = vsel %vm1257, 0.0, %v1227
        %v1278 = vlaneseq
        %v1279 = vshrl.u32 %v1278, 7
        %v1280 = vsub.s32 2, %v1279
        %v1281 = vrot.slane %v838, %v1280
        %v1282 = vlaneseq
        %v1283 = vshrl.u32 %v1282, 7
        %v1284 = vsub.s32 2, %v1283
        %v1285 = vrot.slane %v839, %v1284
        %v1286 = vmul.f32 %v1258, %v1281
        %v1287 = vmul.f32 %v1259, %v1285
        %v1288 = vmul.f32 %v1260, %v1281
        %v1289 = vmul.f32 %v1261, %v1285
        %v1290 = vmul.f32 %v1262, %v1281
        %v1291 = vmul.f32 %v1263, %v1285
        %v1292 = vmul.f32 %v1264, %v1281
        %v1293 = vmul.f32 %v1265, %v1285
        %v1294 = vmul.f32 %v1266, %v1281
        %v1295 = vmul.f32 %v1267, %v1285
        %v1296 = vmul.f32 %v1268, %v1281
        %v1297 = vmul.f32 %v1269, %v1285
        %v1298 = vmul.f32 %v1270, %v1281
        %v1299 = vmul.f32 %v1271, %v1285
        %v1300 = vmul.f32 %v1272, %v1281
        %v1301 = vmul.f32 %v1273, %v1285
        %v1302 = vadd.f32 %v1171, %v1286
        %v1303 = vadd.f32 %v1172, %v1287
        %v1304 = vadd.f32 %v1173, %v1288
        %v1305 = vadd.f32 %v1174, %v1289
        %v1306 = vadd.f32 %v1175, %v1290
        %v1307 = vadd.f32 %v1176, %v1291
        %v1308 = vadd.f32 %v1177, %v1292
        %v1309 = vadd.f32 %v1178, %v1293
        %v1310 = vadd.f32 %v1179, %v1294
        %v1311 = vadd.f32 %v1180, %v1295
        %v1312 = vadd.f32 %v1181, %v1296
        %v1313 = vadd.f32 %v1182, %v1297
        %v1314 = vadd.f32 %v1183, %v1298
        %v1315 = vadd.f32 %v1184, %v1299
        %v1316 = vadd.f32 %v1185, %v1300
        %v1317 = vadd.f32 %v1186, %v1301
        %v1318 = vlaneseq
        %v1319 = vshrl.u32 %v1318, 7
        %v1320 = vsub.s32 5, %v1319
        %v1321 = vrot.slane %v838, %v1320
        %v1322 = vlaneseq
        %v1323 = vshrl.u32 %v1322, 7
        %v1324 = vsub.s32 5, %v1323
        %v1325 = vrot.slane %v839, %v1324
        %v1326 = vmul.f32 %v1260, %v1321
        %v1327 = vmul.f32 %v1261, %v1325
        %v1328 = vmul.f32 %v1262, %v1321
        %v1329 = vmul.f32 %v1263, %v1325
        %v1330 = vmul.f32 %v1264, %v1321
        %v1331 = vmul.f32 %v1265, %v1325
        %v1332 = vmul.f32 %v1266, %v1321
        %v1333 = vmul.f32 %v1267, %v1325
        %v1334 = vmul.f32 %v1268, %v1321
        %v1335 = vmul.f32 %v1269, %v1325
        %v1336 = vmul.f32 %v1270, %v1321
        %v1337 = vmul.f32 %v1271, %v1325
        %v1338 = vmul.f32 %v1272, %v1321
        %v1339 = vmul.f32 %v1273, %v1325
        %v1340 = vmul.f32 %v1274, %v1321
        %v1341 = vmul.f32 %v1275, %v1325
        %v1342 = vadd.f32 %v1302, %v1326
        %v1343 = vadd.f32 %v1303, %v1327
        %v1344 = vadd.f32 %v1304, %v1328
        %v1345 = vadd.f32 %v1305, %v1329
        %v1346 = vadd.f32 %v1306, %v1330
        %v1347 = vadd.f32 %v1307, %v1331
        %v1348 = vadd.f32 %v1308, %v1332
        %v1349 = vadd.f32 %v1309, %v1333
        %v1350 = vadd.f32 %v1310, %v1334
        %v1351 = vadd.f32 %v1311, %v1335
        %v1352 = vadd.f32 %v1312, %v1336
        %v1353 = vadd.f32 %v1313, %v1337
        %v1354 = vadd.f32 %v1314, %v1338
        %v1355 = vadd.f32 %v1315, %v1339
        %v1356 = vadd.f32 %v1316, %v1340
        %v1357 = vadd.f32 %v1317, %v1341
        %v1358 = vlaneseq
        %v1359 = vshrl.u32 %v1358, 7
        %v1360 = vsub.s32 0, %v1359
        %v1361 = vrot.slane %v840, %v1360
        %v1362 = vlaneseq
        %v1363 = vshrl.u32 %v1362, 7
        %v1364 = vsub.s32 0, %v1363
        %v1365 = vrot.slane %v841, %v1364
        %v1366 = vmul.f32 %v1262, %v1361
        %v1367 = vmul.f32 %v1263, %v1365
        %v1368 = vmul.f32 %v1264, %v1361
        %v1369 = vmul.f32 %v1265, %v1365
        %v1370 = vmul.f32 %v1266, %v1361
        %v1371 = vmul.f32 %v1267, %v1365
        %v1372 = vmul.f32 %v1268, %v1361
        %v1373 = vmul.f32 %v1269, %v1365
        %v1374 = vmul.f32 %v1270, %v1361
        %v1375 = vmul.f32 %v1271, %v1365
        %v1376 = vmul.f32 %v1272, %v1361
        %v1377 = vmul.f32 %v1273, %v1365
        %v1378 = vmul.f32 %v1274, %v1361
        %v1379 = vmul.f32 %v1275, %v1365
        %v1380 = vmul.f32 %v1276, %v1361
        %v1381 = vmul.f32 %v1277, %v1365
        %v1382 = vadd.f32 %v1342, %v1366
        %v1383 = vadd.f32 %v1343, %v1367
        %v1384 = vadd.f32 %v1344, %v1368
        %v1385 = vadd.f32 %v1345, %v1369
        %v1386 = vadd.f32 %v1346, %v1370
        %v1387 = vadd.f32 %v1347, %v1371
        %v1388 = vadd.f32 %v1348, %v1372
        %v1389 = vadd.f32 %v1349, %v1373
        %v1390 = vadd.f32 %v1350, %v1374
        %v1391 = vadd.f32 %v1351, %v1375
        %v1392 = vadd.f32 %v1352, %v1376
        %v1393 = vadd.f32 %v1353, %v1377
        %v1394 = vadd.f32 %v1354, %v1378
        %v1395 = vadd.f32 %v1355, %v1379
        %v1396 = vadd.f32 %v1356, %v1380
        %v1397 = vadd.f32 %v1357, %v1381
        %v1398 = vmax.f32 %v1382, 0.0
        %v1399 = vmax.f32 %v1383, 0.0
        %v1400 = vmax.f32 %v1384, 0.0
        %v1401 = vmax.f32 %v1385, 0.0
        %v1402 = vmax.f32 %v1386, 0.0
        %v1403 = vmax.f32 %v1387, 0.0
        %v1404 = vmax.f32 %v1388, 0.0
        %v1405 = vmax.f32 %v1389, 0.0
        %v1406 = vmax.f32 %v1390, 0.0
        %v1407 = vmax.f32 %v1391, 0.0
        %v1408 = vmax.f32 %v1392, 0.0
        %v1409 = vmax.f32 %v1393, 0.0
        %v1410 = vmax.f32 %v1394, 0.0
        %v1411 = vmax.f32 %v1395, 0.0
        %v1412 = vmax.f32 %v1396, 0.0
        %v1413 = vmax.f32 %v1397, 0.0
        %v1414 = vpack.c.bf16 %v1400, %v1398
        %v1415 = vpack.c.bf16 %v1401, %v1399
        %v1416 = vpack.c.bf16 %v1404, %v1402
        %v1417 = vpack.c.bf16 %v1405, %v1403
        %v1418 = vpack.c.bf16 %v1408, %v1406
        %v1419 = vpack.c.bf16 %v1409, %v1407
        %v1420 = vpack.c.bf16 %v1412, %v1410
        %v1421 = vpack.c.bf16 %v1413, %v1411
        %v1422 = vld [vmem:[#allocation12] sm:$0xf]
        %v1423 = vld [vmem:[#allocation12 + $0x4] sm:$0xf]
        %v1424 = vld [vmem:[#allocation12 + $0x8] sm:$0xf]
        %v1425 = vld [vmem:[#allocation12 + $0xc] sm:$0xf]
        %v1426 = vld [vmem:[#allocation12 + $0x10] sm:$0xf]
        %v1427 = vld [vmem:[#allocation12 + $0x14] sm:$0xf]
        %v1428 = vld [vmem:[#allocation12 + $0x18] sm:$0xf]
        %v1429 = vld [vmem:[#allocation12 + $0x1c] sm:$0xf]
        %v1430 = vld [vmem:[#allocation12 + $0x20] sm:$0xf]
        %v1431 = vld [vmem:[#allocation12 + $0x24] sm:$0xf]
        %v1432 = vld [vmem:[#allocation12 + $0x28] sm:$0xf]
        %v1433 = vld [vmem:[#allocation12 + $0x2c] sm:$0xf]
        %v1434 = vld [vmem:[#allocation12 + $0x30] sm:$0xf]
        %v1435 = vld [vmem:[#allocation12 + $0x34] sm:$0xf]
        %v1436 = vld [vmem:[#allocation12 + $0x38] sm:$0xf]
        %v1437 = vld [vmem:[#allocation12 + $0x3c] sm:$0xf]
        %v1438 = vld [vmem:[#allocation12 + $0x40] sm:$0xf]
        %v1439 = vld [vmem:[#allocation12 + $0x44] sm:$0xf]
        %v1440 = vld [vmem:[#allocation12 + $0x48] sm:$0xf]
        %v1441 = vld [vmem:[#allocation12 + $0x4c] sm:$0xf]
        %v1442 = vld [vmem:[#allocation12 + $0x50] sm:$0xf]
        %v1443 = vld [vmem:[#allocation12 + $0x54] sm:$0xf]
        %v1444 = vld [vmem:[#allocation12 + $0x58] sm:$0xf]
        %v1445 = vld [vmem:[#allocation12 + $0x5c] sm:$0xf]
        %v1446 = vld [vmem:[#allocation12 + $0x60] sm:$0xf]
        %v1447 = vld [vmem:[#allocation12 + $0x64] sm:$0xf]
        %v1448 = vld [vmem:[#allocation12 + $0x68] sm:$0xf]
        %v1449 = vld [vmem:[#allocation12 + $0x6c] sm:$0xf]
        %v1450 = vld [vmem:[#allocation12 + $0x70] sm:$0xf]
        %v1451 = vld [vmem:[#allocation12 + $0x74] sm:$0xf]
        %v1452 = vld [vmem:[#allocation12 + $0x78] sm:$0xf]
        %v1453 = vld [vmem:[#allocation12 + $0x7c] sm:$0xf]
        %v1454 = vld [vmem:[#allocation14] sm:$0x1]
        %v1456 = vlaneseq
        %v1457 = vshrl.u32 %v1456, 7
        %v1458 = vsub.s32 0, %v1457
        %v1459 = vrot.slane %v1454, %v1458
        %v1493 = vunpack.c.l.b16 %v1422
        %v1494 = vunpack.c.l.b16 %v1423
        %v1495 = vunpack.c.l.b16 %v1424
        %v1496 = vunpack.c.l.b16 %v1425
        %v1497 = vunpack.c.l.b16 %v1426
        %v1498 = vunpack.c.l.b16 %v1427
        %v1499 = vunpack.c.l.b16 %v1428
        %v1500 = vunpack.c.l.b16 %v1429
        %v1501 = vunpack.c.l.b16 %v1430
        %v1502 = vunpack.c.l.b16 %v1431
        %v1503 = vunpack.c.l.b16 %v1432
        %v1504 = vunpack.c.l.b16 %v1433
        %v1505 = vunpack.c.l.b16 %v1434
        %v1506 = vunpack.c.l.b16 %v1435
        %v1507 = vunpack.c.l.b16 %v1436
        %v1508 = vunpack.c.l.b16 %v1437
        %v1509 = vunpack.c.l.b16 %v1438
        %v1510 = vunpack.c.l.b16 %v1439
        %v1511 = vunpack.c.l.b16 %v1440
        %v1512 = vunpack.c.l.b16 %v1441
        %v1513 = vunpack.c.l.b16 %v1442
        %v1514 = vunpack.c.l.b16 %v1443
        %v1515 = vunpack.c.l.b16 %v1444
        %v1516 = vunpack.c.l.b16 %v1445
        %v1517 = vunpack.c.l.b16 %v1446
        %v1518 = vunpack.c.l.b16 %v1447
        %v1519 = vunpack.c.l.b16 %v1448
        %v1520 = vunpack.c.l.b16 %v1449
        %v1521 = vunpack.c.l.b16 %v1450
        %v1522 = vunpack.c.l.b16 %v1451
        %v1523 = vunpack.c.l.b16 %v1452
        %v1524 = vunpack.c.l.b16 %v1453
        %v1525 = vpack.c.b16 %v1494, %v1493
        %v1526 = vpack.c.b16 %v1496, %v1495
        %v1527 = vpack.c.b16 %v1498, %v1497
        %v1528 = vpack.c.b16 %v1500, %v1499
        %v1529 = vpack.c.b16 %v1502, %v1501
        %v1530 = vpack.c.b16 %v1504, %v1503
        %v1531 = vpack.c.b16 %v1506, %v1505
        %v1532 = vpack.c.b16 %v1508, %v1507
        %v1533 = vpack.c.b16 %v1510, %v1509
        %v1534 = vpack.c.b16 %v1512, %v1511
        %v1535 = vpack.c.b16 %v1514, %v1513
        %v1536 = vpack.c.b16 %v1516, %v1515
        %v1537 = vpack.c.b16 %v1518, %v1517
        %v1538 = vpack.c.b16 %v1520, %v1519
        %v1539 = vpack.c.b16 %v1522, %v1521
        %v1540 = vpack.c.b16 %v1524, %v1523
        %1557 = vmatprep.subr.bf16.mxu0 0
        %1558 = vmatpush1.bf16.msra.mxu0 %v1525
        %1559 = vmatprep.subr.bf16.mxu0 0
        %1560 = vmatpush1.bf16.msra.mxu0 %v1526
        %1561 = vmatprep.subr.bf16.mxu0 0
        %1562 = vmatpush1.bf16.msra.mxu0 %v1527
        %1563 = vmatprep.subr.bf16.mxu0 0
        %1564 = vmatpush1.bf16.msra.mxu0 %v1528
        %1565 = vmatprep.subr.bf16.mxu0 0
        %1566 = vmatpush1.bf16.msra.mxu0 %v1529
        %1567 = vmatprep.subr.bf16.mxu0 0
        %1568 = vmatpush1.bf16.msra.mxu0 %v1530
        %1569 = vmatprep.subr.bf16.mxu0 0
        %1570 = vmatpush1.bf16.msra.mxu0 %v1531
        %1571 = vmatprep.subr.bf16.mxu0 0
        %1572 = vmatpush1.bf16.msra.mxu0 %v1532
        %1573 = vmatprep.subr.bf16.mxu0 0
        %1574 = vmatpush1.bf16.msra.mxu0 %v1533
        %1575 = vmatprep.subr.bf16.mxu0 0
        %1576 = vmatpush1.bf16.msra.mxu0 %v1534
        %1577 = vmatprep.subr.bf16.mxu0 0
        %1578 = vmatpush1.bf16.msra.mxu0 %v1535
        %1579 = vmatprep.subr.bf16.mxu0 0
        %1580 = vmatpush1.bf16.msra.mxu0 %v1536
        %1581 = vmatprep.subr.bf16.mxu0 0
        %1582 = vmatpush1.bf16.msra.mxu0 %v1537
        %1583 = vmatprep.subr.bf16.mxu0 0
        %1584 = vmatpush1.bf16.msra.mxu0 %v1538
        %1585 = vmatprep.subr.bf16.mxu0 0
        %1586 = vmatpush1.bf16.msra.mxu0 %v1539
        %1587 = vmatprep.subr.bf16.mxu0 0
        %1588 = vmatpush1.bf16.msra.mxu0 %v1540
        %1589 = vmatprep.mubr.bf16.mxu0 %v1415
        %1590 = vmatmul.mubr.bf16.gmra.mrb[0].mxu0 %v1414
        %v1591 = vpop.f32.mrb[0].mxu0
        %v1592 = vadd.f32 %v1459, %v1591
        %v1593 = vpop.f32.mrb[0].mxu0
        %v1594 = vpop.f32.mrb[0].mxu0
        %v1595 = vadd.f32 %v1459, %v1594
        %v1596 = vpop.f32.mrb[0].mxu0
        %1597 = vmatprep.mubr.bf16.mxu0 %v1417
        %1598 = vmatmul.mubr.bf16.gmra.mrb[0].mxu0 %v1416
        %v1599 = vpop.f32.mrb[0].mxu0
        %v1600 = vadd.f32 %v1459, %v1599
        %v1601 = vpop.f32.mrb[0].mxu0
        %v1602 = vpop.f32.mrb[0].mxu0
        %v1603 = vadd.f32 %v1459, %v1602
        %v1604 = vpop.f32.mrb[0].mxu0
        %1605 = vmatprep.mubr.bf16.mxu0 %v1419
        %1606 = vmatmul.mubr.bf16.gmra.mrb[0].mxu0 %v1418
        %v1607 = vpop.f32.mrb[0].mxu0
        %v1608 = vadd.f32 %v1459, %v1607
        %v1609 = vpop.f32.mrb[0].mxu0
        %v1610 = vpop.f32.mrb[0].mxu0
        %v1611 = vadd.f32 %v1459, %v1610
        %v1612 = vpop.f32.mrb[0].mxu0
        %1613 = vmatprep.mubr.bf16.mxu0 %v1421
        %1614 = vmatmul.mubr.bf16.gmra.mrb[0].mxu0 %v1420
        %v1615 = vpop.f32.mrb[0].mxu0
        %v1616 = vadd.f32 %v1459, %v1615
        %v1617 = vpop.f32.mrb[0].mxu0
        %v1618 = vpop.f32.mrb[0].mxu0
        %v1619 = vadd.f32 %v1459, %v1618
        %v1620 = vpop.f32.mrb[0].mxu0
        %1621 = vdwg.mxu0
        %v1622 = vmax.f32 %v1592, 0.0
        %v1623 = vmax.f32 %v1595, 0.0
        %v1624 = vmax.f32 %v1600, 0.0
        %v1625 = vmax.f32 %v1603, 0.0
        %v1626 = vmax.f32 %v1608, 0.0
        %v1627 = vmax.f32 %v1611, 0.0
        %v1628 = vmax.f32 %v1616, 0.0
        %v1629 = vmax.f32 %v1619, 0.0
        %v1630 = vld [vmem:[#allocation15] sm:$0x1]
        %v1631 = vld [vmem:[#allocation17] sm:$0x1]
        %v1632 = vadd.f32 %v458, %v1622
        %v1633 = vadd.f32 %v459, %v1623
        %v1634 = vadd.f32 %v460, %v1624
        %v1635 = vadd.f32 %v461, %v1625
        %v1636 = vadd.f32 %v462, %v1626
        %v1637 = vadd.f32 %v463, %v1627
        %v1638 = vadd.f32 %v464, %v1628
        %v1639 = vadd.f32 %v465, %v1629
        %1640 = vadd.xlane.f32.xlu0 %v1632
        %v1641 = vpop.xlane.xlu0 %1640
        %1642 = vadd.xlane.f32.xlu0 %v1633
        %v1643 = vpop.xlane.xlu0 %1642
        %1644 = vadd.xlane.f32.xlu0 %v1634
        %v1645 = vpop.xlane.xlu0 %1644
        %1646 = vadd.xlane.f32.xlu0 %v1635
        %v1647 = vpop.xlane.xlu0 %1646
        %1648 = vadd.xlane.f32.xlu0 %v1636
        %v1649 = vpop.xlane.xlu0 %1648
        %1650 = vadd.xlane.f32.xlu0 %v1637
        %v1651 = vpop.xlane.xlu0 %1650
        %1652 = vadd.xlane.f32.xlu0 %v1638
        %v1653 = vpop.xlane.xlu0 %1652
        %1654 = vadd.xlane.f32.xlu0 %v1639
        %v1655 = vpop.xlane.xlu0 %1654
        %v1656 = vrcp.pop 128.0
        %v1657 = vmul.f32 %v1641, %v1656
        %v1658 = vmul.f32 %v1643, %v1656
        %v1659 = vmul.f32 %v1645, %v1656
        %v1660 = vmul.f32 %v1647, %v1656
        %v1661 = vmul.f32 %v1649, %v1656
        %v1662 = vmul.f32 %v1651, %v1656
        %v1663 = vmul.f32 %v1653, %v1656
        %v1664 = vmul.f32 %v1655, %v1656
        %v1665 = vsub.f32 %v1632, %v1657
        %v1666 = vsub.f32 %v1633, %v1658
        %v1667 = vsub.f32 %v1634, %v1659
        %v1668 = vsub.f32 %v1635, %v1660
        %v1669 = vsub.f32 %v1636, %v1661
        %v1670 = vsub.f32 %v1637, %v1662
        %v1671 = vsub.f32 %v1638, %v1663
        %v1672 = vsub.f32 %v1639, %v1664
        %v1673 = vmul.f32 %v1665, %v1665
        %v1674 = vmul.f32 %v1666, %v1666
        %v1675 = vmul.f32 %v1667, %v1667
        %v1676 = vmul.f32 %v1668, %v1668
        %v1677 = vmul.f32 %v1669, %v1669
        %v1678 = vmul.f32 %v1670, %v1670
        %v1679 = vmul.f32 %v1671, %v1671
        %v1680 = vmul.f32 %v1672, %v1672
        %1681 = vadd.xlane.f32.xlu0 %v1673
        %v1682 = vpop.xlane.xlu0 %1681
        %1683 = vadd.xlane.f32.xlu0 %v1674
        %v1684 = vpop.xlane.xlu0 %1683
        %1685 = vadd.xlane.f32.xlu0 %v1675
        %v1686 = vpop.xlane.xlu0 %1685
        %1687 = vadd.xlane.f32.xlu0 %v1676
        %v1688 = vpop.xlane.xlu0 %1687
        %1689 = vadd.xlane.f32.xlu0 %v1677
        %v1690 = vpop.xlane.xlu0 %1689
        %1691 = vadd.xlane.f32.xlu0 %v1678
        %v1692 = vpop.xlane.xlu0 %1691
        %1693 = vadd.xlane.f32.xlu0 %v1679
        %v1694 = vpop.xlane.xlu0 %1693
        %1695 = vadd.xlane.f32.xlu0 %v1680
        %v1696 = vpop.xlane.xlu0 %1695
        %v1697 = vmul.f32 %v1682, %v1656
        %v1698 = vmul.f32 %v1684, %v1656
        %v1699 = vmul.f32 %v1686, %v1656
        %v1700 = vmul.f32 %v1688, %v1656
        %v1701 = vmul.f32 %v1690, %v1656
        %v1702 = vmul.f32 %v1692, %v1656
        %v1703 = vmul.f32 %v1694, %v1656
        %v1704 = vmul.f32 %v1696, %v1656
        %v1705 = vadd.f32 %v1697, 1e-05
        %v1706 = vadd.f32 %v1698, 1e-05
        %v1707 = vadd.f32 %v1699, 1e-05
        %v1708 = vadd.f32 %v1700, 1e-05
        %v1709 = vadd.f32 %v1701, 1e-05
        %v1710 = vadd.f32 %v1702, 1e-05
        %v1711 = vadd.f32 %v1703, 1e-05
        %v1712 = vadd.f32 %v1704, 1e-05
        %v1713 = vrsqrt.pop %v1705
        %v1714 = vrsqrt.pop %v1706
        %v1715 = vrsqrt.pop %v1707
        %v1716 = vrsqrt.pop %v1708
        %v1717 = vrsqrt.pop %v1709
        %v1718 = vrsqrt.pop %v1710
        %v1719 = vrsqrt.pop %v1711
        %v1720 = vrsqrt.pop %v1712
        %v1721 = vmul.f32 %v1665, %v1713
        %v1722 = vmul.f32 %v1666, %v1714
        %v1723 = vmul.f32 %v1667, %v1715
        %v1724 = vmul.f32 %v1668, %v1716
        %v1725 = vmul.f32 %v1669, %v1717
        %v1726 = vmul.f32 %v1670, %v1718
        %v1727 = vmul.f32 %v1671, %v1719
        %v1728 = vmul.f32 %v1672, %v1720
        %v1730 = vlaneseq
        %v1731 = vshrl.u32 %v1730, 7
        %v1732 = vsub.s32 0, %v1731
        %v1733 = vrot.slane %v1630, %v1732
        %v1735 = vmul.f32 %v1721, %v1733
        %v1736 = vmul.f32 %v1722, %v1733
        %v1737 = vmul.f32 %v1723, %v1733
        %v1738 = vmul.f32 %v1724, %v1733
        %v1739 = vmul.f32 %v1725, %v1733
        %v1740 = vmul.f32 %v1726, %v1733
        %v1741 = vmul.f32 %v1727, %v1733
        %v1742 = vmul.f32 %v1728, %v1733
        %v1744 = vlaneseq
        %v1745 = vshrl.u32 %v1744, 7
        %v1746 = vsub.s32 0, %v1745
        %v1747 = vrot.slane %v1631, %v1746
        %v1749 = vadd.f32 %v1735, %v1747
        %v1750 = vadd.f32 %v1736, %v1747
        %v1751 = vadd.f32 %v1737, %v1747
        %v1752 = vadd.f32 %v1738, %v1747
        %v1753 = vadd.f32 %v1739, %v1747
        %v1754 = vadd.f32 %v1740, %v1747
        %v1755 = vadd.f32 %v1741, %v1747
        %v1756 = vadd.f32 %v1742, %v1747
        %1757 = vst [vmem:[%s456] sm:$0xff] %v1749
        %1758 = vst [vmem:[%s456 + $0x8] sm:$0xff] %v1750
        %1759 = vst [vmem:[%s456 + $0x10] sm:$0xff] %v1751
        %1760 = vst [vmem:[%s456 + $0x18] sm:$0xff] %v1752
        %1761 = vst [vmem:[%s456 + $0x20] sm:$0xff] %v1753
        %1762 = vst [vmem:[%s456 + $0x28] sm:$0xff] %v1754
        %1763 = vst [vmem:[%s456 + $0x30] sm:$0xff] %v1755
        %1764 = vst [vmem:[%s456 + $0x38] sm:$0xff] %v1756
        %s1765 = sand.u32 %s232, 1
        %s1766 = scalar_lea.sflag [#allocation5], %s1765
        %s1767 = sand.u32 %s232, 1
        %s1768 = smul.addr %s1767, 64
        %s1769 = scalar_lea.vmem [#allocation18], %s1768
        // Predicated region
        $region93: #{transformer_encoder_layer_2d.3} parent=55 // pred_check
          %p1770 = pneg %p242
        $region94: #{transformer_encoder_layer_2d.3} parent=55 // pred_check_branch
          %1772 = sbr.rel (%p1770) target = $region96
        $region95: #{transformer_encoder_layer_2d.3} parent=55 // pred_region
          %s1774 = ssub.s32 1024, 1024
          %1775 = vsyncadd %s1766, %s1774
          %s1776 = smul.addr %s30, 8
          %s1777 = smul.addr %s1776, 128
          %s1778 = scalar_lea.hbm %s9, %s1777
          %s1779 = sshll.u32 %s1769, 4
          %s1780 = int_to_ptr.vmem [resolvable:$true] %s1779
          %1785 = dma.vmem_to_hbm [thread:$0]  %s1780, 1024, %s1778, %s1766, 128, 128, 8
        $region96: #{transformer_encoder_layer_2d.3} parent=55 // pred_fallthru
          _
      $region56: #{transformer_encoder_layer_2d.3} parent=5 // pred_fallthru
        _
      %p1786 = scmp.le.s32.totalorder 2, %s25
      // Predicated region
      $region97: #{transformer_encoder_layer_2d.3} parent=5 // pred_check
        %p1787 = pneg %p1786
      $region98: #{transformer_encoder_layer_2d.3} parent=5 // pred_check_branch
        %1789 = sbr.rel (%p1787) target = $region100
      $region99: #{transformer_encoder_layer_2d.3} parent=5 // pred_region
        %s1790 = ssub.s32 %s25, 2
        // Predicated region
        $region101: #{transformer_encoder_layer_2d.3} parent=99 // pred_check
          %p1791 = pneg %p248
        $region102: #{transformer_encoder_layer_2d.3} parent=99 // pred_check_branch
          %1793 = sbr.rel (%p1791) target = $region104
        $region103: #{transformer_encoder_layer_2d.3} parent=99 // pred_region
          %s1794 = sand.u32 %s233, 1
          %s1795 = scalar_lea.sflag [#allocation5], %s1794
          %s1796 = sand.u32 %s233, 1
          %s1797 = smul.addr %s1796, 64
          %s1798 = scalar_lea.vmem [#allocation18], %s1797
          %1799 = dma.done %s1795, 1024
        $region104: #{transformer_encoder_layer_2d.3} parent=99 // pred_fallthru
          _
      $region100: #{transformer_encoder_layer_2d.3} parent=5 // pred_fallthru
        _
    $region6: #{transformer_encoder_layer_2d.3} parent=1 // loop_footer
      %s29 = sadd.s32 1, %s25
    $region7: #{transformer_encoder_layer_2d.3} parent=1 // loop_footer_branch
      %24 = sbr.rel target = $region3
    $region8: #{transformer_encoder_layer_2d.3} parent=1 // loop_exit
      _
    %1800 = vsyncpa [#allocation4], 1
    %s1801 = scalar_lea.sflag [#allocation4], 1
    %1802 = vsyncpa %s1801, 1
    %1803 = vsyncpa [#allocation7], 1
    %1804 = vsyncpa [#allocation10], 1
    %1805 = vsyncpa [#allocation13], 1
    %1806 = vsyncpa [#allocation16], 1
    %1807 = vsyncpa [#allocation5], 1
    %s1808 = scalar_lea.sflag [#allocation5], 1
    %1809 = vsyncpa %s1808, 1

</llo_original>
